<compile_context>
chip_gen: v6e
topology: v6e:2x2x1
jax: 0.10.0
libtpu: 0.0.40
codegen_flags: <defaults>
</compile_context>

<pallas_src>
import functools

import jax
import jax.numpy as jnp
from jax.experimental import pallas as pl
from jax.experimental.pallas import tpu as pltpu

H_DIM = 400      # logical hidden width (PyTorch h_dim)
IN_DIM = 2
OUT_DIM = 2

H_PAD = 512      # hidden width padded to MXU full width
OUT_PAD = 128    # lane-dense output slab; sliced back to 2 in the wrapper


def _round_up(x, m):
    return ((x + m - 1) // m) * m


def _generator_kernel(z_ref,
                      w1_ref, b1_ref,
                      w2_ref, b2_ref,
                      w3_ref, b3_ref,
                      w4_ref, b4_ref,
                      out_ref):
    cd = w2_ref.dtype  # MXU input dtype (bf16 default / f32 exact); acc is always f32

    # Layer 1 on the VPU: K=2 is far too small for the MXU.
    #   (tb,1)*(1,H_PAD) broadcast-FMAs, all in f32.
    z = z_ref[...]                       # (tb, 2) f32
    w1 = w1_ref[...]                     # (2, H_PAD) f32
    h = z[:, 0:1] * w1[0:1, :] + z[:, 1:2] * w1[1:2, :] + b1_ref[...]
    h = jnp.maximum(h, 0.0)

    # Layer 2: (tb, H_PAD) @ (H_PAD, H_PAD), f32 accumulate, f32 bias/ReLU.
    h = jnp.dot(h.astype(cd), w2_ref[...], preferred_element_type=jnp.float32)
    h = jnp.maximum(h + b2_ref[...], 0.0)

    # Layer 3.
    h = jnp.dot(h.astype(cd), w3_ref[...], preferred_element_type=jnp.float32)
    h = jnp.maximum(h + b3_ref[...], 0.0)

    # Layer 4 (no activation): (tb, H_PAD) @ (H_PAD, OUT_PAD) -> lane-dense store.
    o = jnp.dot(h.astype(cd), w4_ref[...], preferred_element_type=jnp.float32)
    out_ref[...] = (o + b4_ref[...]).astype(out_ref.dtype)


@functools.partial(jax.jit, static_argnames=("block_b",))
def generator_forward(z, padded_params, *, block_b=512):
    """Pallas forward pass of the Generator MLP.

    z: (B, 2) float32, any B (ragged batches are zero-padded internally).
    padded_params: output of `prepare_generator_params` (pre-padded, pre-cast).
    """
    B, in_dim = z.shape
    assert in_dim == IN_DIM
    assert block_b % 8 == 0

    # Clamp the tile to the (8-aligned) batch so tiny batches run in one step.
    block_b = min(block_b, _round_up(B, 8))
    # v7x has two TensorCores: keep the parallel batch axis at >= 2 tiles when
    # the batch is big enough so both cores get work; on single-TC v5e/v6e this
    # only adds one ~0.35us grid step.
    if B >= 512 and (B + block_b - 1) // block_b < 2:
        block_b = _round_up((B + 1) // 2, 8)
    B_pad = _round_up(B, block_b)
    z_p = jnp.pad(z, ((0, B_pad - B), (0, 0))) if B_pad != B else z

    w1, b1 = padded_params["w1"], padded_params["b1"]
    w2, b2 = padded_params["w2"], padded_params["b2"]
    w3, b3 = padded_params["w3"], padded_params["b3"]
    w4, b4 = padded_params["w4"], padded_params["b4"]

    grid = (B_pad // block_b,)

    def const_spec(shape):
        # Full-array resident block; constant index_map -> fetched once.
        return pl.BlockSpec(shape, lambda i: (0, 0))

    in_specs = [
        pl.BlockSpec((block_b, IN_DIM), lambda i: (i, 0)),        # z
        const_spec((IN_DIM, H_PAD)), const_spec((1, H_PAD)),       # w1, b1
        const_spec((H_PAD, H_PAD)), const_spec((1, H_PAD)),        # w2, b2
        const_spec((H_PAD, H_PAD)), const_spec((1, H_PAD)),        # w3, b3
        const_spec((H_PAD, OUT_PAD)), const_spec((1, OUT_PAD)),    # w4, b4
    ]
    out_spec = pl.BlockSpec((block_b, OUT_PAD), lambda i: (i, 0))

    # Advisory cost estimate so XLA schedules neighbouring ops around the call.
    w_item = jnp.dtype(w2.dtype).itemsize
    flops = 2 * B_pad * (IN_DIM * H_PAD + 2 * H_PAD * H_PAD + H_PAD * OUT_PAD)
    bytes_accessed = (
        B_pad * IN_DIM * 4 + B_pad * OUT_PAD * 4                       # z in, out slab
        + IN_DIM * H_PAD * 4                                           # w1 (f32)
        + (2 * H_PAD * H_PAD + H_PAD * OUT_PAD) * w_item               # w2..w4
        + (3 * H_PAD + OUT_PAD) * 4                                    # biases (f32)
    )
    cost = pl.CostEstimate(flops=flops, transcendentals=0,
                           bytes_accessed=bytes_accessed)

    out = pl.pallas_call(
        _generator_kernel,
        out_shape=jax.ShapeDtypeStruct((B_pad, OUT_PAD), jnp.float32),
        grid_spec=pltpu.PrefetchScalarGridSpec(
            num_scalar_prefetch=0,
            grid=grid,
            in_specs=in_specs,
            out_specs=out_spec,
        ),
        compiler_params=pltpu.CompilerParams(
            dimension_semantics=("parallel",)),   # batch tiles independent
        cost_estimate=cost,
    )(z_p, w1, b1, w2, b2, w3, b3, w4, b4)

    return out[:B, :OUT_DIM]


def init_generator_params(key):
    """Deterministic init matching the PyTorch module:
    kaiming_normal_ on weights (std = sqrt(2 / fan_in)), biases = 0.
    Weights are returned already transposed to (in, out)."""
    dims = [(IN_DIM, H_DIM), (H_DIM, H_DIM), (H_DIM, H_DIM), (H_DIM, OUT_DIM)]
    params = {}
    keys = jax.random.split(key, len(dims))
    for idx, ((fan_in, fan_out), k) in enumerate(zip(dims, keys), start=1):
        std = (2.0 / fan_in) ** 0.5
        # PyTorch weight is (out, in); sample in that shape then transpose.
        w = std * jax.random.normal(k, (fan_out, fan_in), dtype=jnp.float32)
        params[f"w{idx}"] = w.T                                    # (in, out)
        params[f"b{idx}"] = jnp.zeros((1, fan_out), dtype=jnp.float32)
    return params


def prepare_generator_params(params, compute_dtype=jnp.bfloat16):
    """One-time padding/cast of the kernel operands (do this at init, not per call).

    Zero-pads hidden 400->512 and output 2->128 (numerically exact: zero weight
    rows/cols, zero bias pad, ReLU(0)=0) and casts the three MXU weight matrices
    to `compute_dtype` (bf16 default on all chips; accumulation stays f32).
    Layer-1 weights and all biases stay f32 (VPU path)."""
    hp, op = H_PAD - H_DIM, OUT_PAD - OUT_DIM
    return {
        "w1": jnp.pad(params["w1"], ((0, 0), (0, hp))),                       # f32 (VPU)
        "b1": jnp.pad(params["b1"], ((0, 0), (0, hp))),
        "w2": jnp.pad(params["w2"], ((0, hp), (0, hp))).astype(compute_dtype),
        "b2": jnp.pad(params["b2"], ((0, 0), (0, hp))),
        "w3": jnp.pad(params["w3"], ((0, hp), (0, hp))).astype(compute_dtype),
        "b3": jnp.pad(params["b3"], ((0, 0), (0, hp))),
        "w4": jnp.pad(params["w4"], ((0, hp), (0, op))).astype(compute_dtype),
        "b4": jnp.pad(params["b4"], ((0, 0), (0, op))),
    }


def generator_reference(z, params):
    """Pure-JAX reference for correctness checking (uses the raw f32 params)."""
    h = jnp.maximum(z @ params["w1"] + params["b1"], 0.0)
    h = jnp.maximum(h @ params["w2"] + params["b2"], 0.0)
    h = jnp.maximum(h @ params["w3"] + params["b3"], 0.0)
    return h @ params["w4"] + params["b4"]


if __name__ == "__main__":
    key = jax.random.PRNGKey(0)
    pkey, zkey = jax.random.split(key)

    params = init_generator_params(pkey)
    batch = 512
    z = jax.random.normal(zkey, (batch, IN_DIM), dtype=jnp.float32)
    ref = generator_reference(z, params)

    # Exact f32 MXU path (grid of 2 batch tiles of 256).
    params_f32 = prepare_generator_params(params, compute_dtype=jnp.float32)
    out = jax.block_until_ready(generator_forward(z, params_f32))
    assert out.shape == (batch, OUT_DIM), out.shape
    assert jnp.allclose(out, ref, atol=1e-4, rtol=1e-4), (
        float(jnp.max(jnp.abs(out - ref))))

    # Default bf16-MXU fast path (all chips): f32 accumulate, looser tolerance.
    params_bf16 = prepare_generator_params(params)
    out_bf16 = jax.block_until_ready(generator_forward(z, params_bf16))
    assert jnp.allclose(out_bf16, ref, atol=2e-1, rtol=5e-2), (
        float(jnp.max(jnp.abs(out_bf16 - ref))))

    # Ragged batch (handled by internal batch padding, single grid step).
    out_small = jax.block_until_ready(generator_forward(z[:100], params_f32))
    assert out_small.shape == (100, OUT_DIM)
    assert jnp.allclose(out_small, ref[:100], atol=1e-4, rtol=1e-4)

    print("KERNEL_OK")
</pallas_src>

<mosaic_0001>
module attributes {stable_mosaic.version = 11 : i64} {
  func.func @_generator_kernel(%arg0: i32, %arg1: memref<256x2xf32, #tpu.memory_space<vmem>>, %arg2: memref<2x512xf32, #tpu.memory_space<vmem>>, %arg3: memref<1x512xf32, #tpu.memory_space<vmem>>, %arg4: memref<512x512xf32, #tpu.memory_space<vmem>>, %arg5: memref<1x512xf32, #tpu.memory_space<vmem>>, %arg6: memref<512x512xf32, #tpu.memory_space<vmem>>, %arg7: memref<1x512xf32, #tpu.memory_space<vmem>>, %arg8: memref<512x128xf32, #tpu.memory_space<vmem>>, %arg9: memref<1x128xf32, #tpu.memory_space<vmem>>, %arg10: memref<256x128xf32, #tpu.memory_space<vmem>>) attributes {dimension_semantics = [#tpu.dimension_semantics<parallel>], iteration_bounds = array<i64: 2>, scalar_prefetch = 0 : i64, scratch_operands = 0 : i64, tpu.core_type = #tpu.core_type<tc>, window_params = [{transform_indices = @transform_0, window_bounds = array<i64: 256, 2>}, {pipeline_mode = #tpu.pipeline_mode<synchronous>, transform_indices = @transform_1, window_bounds = array<i64: 2, 512>}, {pipeline_mode = #tpu.pipeline_mode<synchronous>, transform_indices = @transform_2, window_bounds = array<i64: 1, 512>}, {pipeline_mode = #tpu.pipeline_mode<synchronous>, transform_indices = @transform_3, window_bounds = array<i64: 512, 512>}, {pipeline_mode = #tpu.pipeline_mode<synchronous>, transform_indices = @transform_4, window_bounds = array<i64: 1, 512>}, {pipeline_mode = #tpu.pipeline_mode<synchronous>, transform_indices = @transform_5, window_bounds = array<i64: 512, 512>}, {pipeline_mode = #tpu.pipeline_mode<synchronous>, transform_indices = @transform_6, window_bounds = array<i64: 1, 512>}, {pipeline_mode = #tpu.pipeline_mode<synchronous>, transform_indices = @transform_7, window_bounds = array<i64: 512, 128>}, {pipeline_mode = #tpu.pipeline_mode<synchronous>, transform_indices = @transform_8, window_bounds = array<i64: 1, 128>}, {transform_indices = @transform_9, window_bounds = array<i64: 256, 128>}]} {
    %c0 = arith.constant 0 : index
    %c0_0 = arith.constant 0 : index
    %0 = vector.load %arg1[%c0, %c0_0] : memref<256x2xf32, #tpu.memory_space<vmem>>, vector<256x2xf32>
    %c0_1 = arith.constant 0 : index
    %c0_2 = arith.constant 0 : index
    %1 = vector.load %arg2[%c0_1, %c0_2] : memref<2x512xf32, #tpu.memory_space<vmem>>, vector<2x512xf32>
    %2 = vector.extract_strided_slice %0 {offsets = [0, 0], sizes = [256, 1], strides = [1, 1]} : vector<256x2xf32> to vector<256x1xf32>
    %3 = vector.extract_strided_slice %1 {offsets = [0, 0], sizes = [1, 512], strides = [1, 1]} : vector<2x512xf32> to vector<1x512xf32>
    %4 = vector.broadcast %2 : vector<256x1xf32> to vector<256x512xf32>
    %5 = vector.broadcast %3 : vector<1x512xf32> to vector<256x512xf32>
    %6 = arith.mulf %4, %5 : vector<256x512xf32>
    %7 = vector.extract_strided_slice %0 {offsets = [0, 1], sizes = [256, 1], strides = [1, 1]} : vector<256x2xf32> to vector<256x1xf32>
    %8 = vector.extract_strided_slice %1 {offsets = [1, 0], sizes = [1, 512], strides = [1, 1]} : vector<2x512xf32> to vector<1x512xf32>
    %9 = vector.broadcast %7 : vector<256x1xf32> to vector<256x512xf32>
    %10 = vector.broadcast %8 : vector<1x512xf32> to vector<256x512xf32>
    %11 = arith.mulf %9, %10 : vector<256x512xf32>
    %12 = arith.addf %6, %11 : vector<256x512xf32>
    %c0_3 = arith.constant 0 : index
    %c0_4 = arith.constant 0 : index
    %13 = vector.load %arg3[%c0_3, %c0_4] : memref<1x512xf32, #tpu.memory_space<vmem>>, vector<1x512xf32>
    %14 = vector.broadcast %13 : vector<1x512xf32> to vector<256x512xf32>
    %15 = arith.addf %12, %14 : vector<256x512xf32>
    %cst = arith.constant 0.000000e+00 : f32
    %16 = vector.broadcast %cst : f32 to vector<256x512xf32>
    %17 = arith.maximumf %15, %16 : vector<256x512xf32>
    %c0_5 = arith.constant 0 : index
    %c0_6 = arith.constant 0 : index
    %18 = vector.load %arg4[%c0_5, %c0_6] : memref<512x512xf32, #tpu.memory_space<vmem>>, vector<512x512xf32>
    %cst_7 = arith.constant dense<0.000000e+00> : vector<256x512xf32>
    %19 = tpu.matmul %17, %18, %cst_7 {dimension_numbers = #tpu.dot_dimension_numbers<[1], [0], [0], [1], [0, 0, 1, 1], [], []>} : vector<256x512xf32>, vector<512x512xf32>, vector<256x512xf32> -> vector<256x512xf32>
    %c0_8 = arith.constant 0 : index
    %c0_9 = arith.constant 0 : index
    %20 = vector.load %arg5[%c0_8, %c0_9] : memref<1x512xf32, #tpu.memory_space<vmem>>, vector<1x512xf32>
    %21 = vector.broadcast %20 : vector<1x512xf32> to vector<256x512xf32>
    %22 = arith.addf %19, %21 : vector<256x512xf32>
    %cst_10 = arith.constant 0.000000e+00 : f32
    %23 = vector.broadcast %cst_10 : f32 to vector<256x512xf32>
    %24 = arith.maximumf %22, %23 : vector<256x512xf32>
    %c0_11 = arith.constant 0 : index
    %c0_12 = arith.constant 0 : index
    %25 = vector.load %arg6[%c0_11, %c0_12] : memref<512x512xf32, #tpu.memory_space<vmem>>, vector<512x512xf32>
    %cst_13 = arith.constant dense<0.000000e+00> : vector<256x512xf32>
    %26 = tpu.matmul %24, %25, %cst_13 {dimension_numbers = #tpu.dot_dimension_numbers<[1], [0], [0], [1], [0, 0, 1, 1], [], []>} : vector<256x512xf32>, vector<512x512xf32>, vector<256x512xf32> -> vector<256x512xf32>
    %c0_14 = arith.constant 0 : index
    %c0_15 = arith.constant 0 : index
    %27 = vector.load %arg7[%c0_14, %c0_15] : memref<1x512xf32, #tpu.memory_space<vmem>>, vector<1x512xf32>
    %28 = vector.broadcast %27 : vector<1x512xf32> to vector<256x512xf32>
    %29 = arith.addf %26, %28 : vector<256x512xf32>
    %cst_16 = arith.constant 0.000000e+00 : f32
    %30 = vector.broadcast %cst_16 : f32 to vector<256x512xf32>
    %31 = arith.maximumf %29, %30 : vector<256x512xf32>
    %c0_17 = arith.constant 0 : index
    %c0_18 = arith.constant 0 : index
    %32 = vector.load %arg8[%c0_17, %c0_18] : memref<512x128xf32, #tpu.memory_space<vmem>>, vector<512x128xf32>
    %cst_19 = arith.constant dense<0.000000e+00> : vector<256x128xf32>
    %33 = tpu.matmul %31, %32, %cst_19 {dimension_numbers = #tpu.dot_dimension_numbers<[1], [0], [0], [1], [0, 0, 1, 1], [], []>} : vector<256x512xf32>, vector<512x128xf32>, vector<256x128xf32> -> vector<256x128xf32>
    %c0_20 = arith.constant 0 : index
    %c0_21 = arith.constant 0 : index
    %34 = vector.load %arg9[%c0_20, %c0_21] : memref<1x128xf32, #tpu.memory_space<vmem>>, vector<1x128xf32>
    %35 = vector.broadcast %34 : vector<1x128xf32> to vector<256x128xf32>
    %36 = arith.addf %33, %35 : vector<256x128xf32>
    %c0_22 = arith.constant 0 : index
    %c0_23 = arith.constant 0 : index
    %37 = vector.load %arg10[%c0_22, %c0_23] : memref<256x128xf32, #tpu.memory_space<vmem>>, vector<256x128xf32>
    tpu.vector_store %arg10[%c0_22, %c0_23], %36 {strides = array<i32>} : memref<256x128xf32, #tpu.memory_space<vmem>>, vector<256x128xf32>,
    return
  }
  func.func @transform_0(%arg0: i32) -> (i32, i32) {
    %c0_i32 = arith.constant 0 : i32
    %c0_i32_0 = arith.constant 0 : i32
    return %arg0, %c0_i32 : i32, i32
  }
  func.func @transform_1(%arg0: i32) -> (i32, i32) {
    %c0_i32 = arith.constant 0 : i32
    %c0_i32_0 = arith.constant 0 : i32
    %c0_i32_1 = arith.constant 0 : i32
    return %c0_i32, %c0_i32_0 : i32, i32
  }
  func.func @transform_2(%arg0: i32) -> (i32, i32) {
    %c0_i32 = arith.constant 0 : i32
    %c0_i32_0 = arith.constant 0 : i32
    %c0_i32_1 = arith.constant 0 : i32
    return %c0_i32, %c0_i32_0 : i32, i32
  }
  func.func @transform_3(%arg0: i32) -> (i32, i32) {
    %c0_i32 = arith.constant 0 : i32
    %c0_i32_0 = arith.constant 0 : i32
    %c0_i32_1 = arith.constant 0 : i32
    return %c0_i32, %c0_i32_0 : i32, i32
  }
  func.func @transform_4(%arg0: i32) -> (i32, i32) {
    %c0_i32 = arith.constant 0 : i32
    %c0_i32_0 = arith.constant 0 : i32
    %c0_i32_1 = arith.constant 0 : i32
    return %c0_i32, %c0_i32_0 : i32, i32
  }
  func.func @transform_5(%arg0: i32) -> (i32, i32) {
    %c0_i32 = arith.constant 0 : i32
    %c0_i32_0 = arith.constant 0 : i32
    %c0_i32_1 = arith.constant 0 : i32
    return %c0_i32, %c0_i32_0 : i32, i32
  }
  func.func @transform_6(%arg0: i32) -> (i32, i32) {
    %c0_i32 = arith.constant 0 : i32
    %c0_i32_0 = arith.constant 0 : i32
    %c0_i32_1 = arith.constant 0 : i32
    return %c0_i32, %c0_i32_0 : i32, i32
  }
  func.func @transform_7(%arg0: i32) -> (i32, i32) {
    %c0_i32 = arith.constant 0 : i32
    %c0_i32_0 = arith.constant 0 : i32
    %c0_i32_1 = arith.constant 0 : i32
    return %c0_i32, %c0_i32_0 : i32, i32
  }
  func.func @transform_8(%arg0: i32) -> (i32, i32) {
    %c0_i32 = arith.constant 0 : i32
    %c0_i32_0 = arith.constant 0 : i32
    %c0_i32_1 = arith.constant 0 : i32
    return %c0_i32, %c0_i32_0 : i32, i32
  }
  func.func @transform_9(%arg0: i32) -> (i32, i32) {
    %c0_i32 = arith.constant 0 : i32
    %c0_i32_0 = arith.constant 0 : i32
    return %arg0, %c0_i32 : i32, i32
  }
}

</mosaic_0001>

<llo_original>
// kernel: generator_forward.1
$region0: #{generator_forward.1}
  #allocation0 [shape = 'u32[]', space=smem, size = 0x4, offset = 0x4, fixed_abs, tag = 'smem constant byte address 0x4 - core index']
  #allocation1 [shape = 'u32[144,128]{1,0:T(1,128)}', space=vmem, size = 0x12000, scoped, tag = 'internal scratch']
  %s0 = inlined_call_operand.vmem [shape: f32[512,2], index: 0, kind: input, shape index: {}]
  %s1 = inlined_call_operand.vmem [shape: f32[2,512], index: 1, kind: input, shape index: {}]
  %s2 = inlined_call_operand.vmem [shape: f32[1,512], index: 2, kind: input, shape index: {}]
  %s3 = inlined_call_operand.hbm [shape: f32[512,512], index: 3, kind: input, shape index: {}]
  %s4 = inlined_call_operand.vmem [shape: f32[1,512], index: 4, kind: input, shape index: {}]
  %s5 = inlined_call_operand.hbm [shape: f32[512,512], index: 5, kind: input, shape index: {}]
  %s6 = inlined_call_operand.vmem [shape: f32[1,512], index: 6, kind: input, shape index: {}]
  %s7 = inlined_call_operand.vmem [shape: f32[512,128], index: 7, kind: input, shape index: {}]
  %s8 = inlined_call_operand.vmem [shape: f32[1,128], index: 8, kind: input, shape index: {}]
  %s9 = inlined_call_operand.vmem [shape: f32[512,128], index: 9, kind: output, shape index: {}]
  %s10 = sld [smem:[#allocation0]]
  $region77: #{generator_forward.1} parent=0
    _
  %s12 = ssub.s32 1, %s10
  %s13 = scalar_select 0, %s12, %s10
  $region1: #{generator_forward.1} parent=0
    #allocation2 [shape = 'u8[1048576]{0}', space=vmem, size = 0x100000, scoped, tag = 'input window, operand 3, single buffered']
    #allocation3 [shape = 's32[2]{0}', space=sflag, size = 0x8, scoped, tag = 'scoped memory for generator_forward.1']
    #allocation4 [shape = 'u8[1048576]{0}', space=vmem, size = 0x100000, scoped, tag = 'input window, operand 5, single buffered']
    #allocation5 [shape = 's32[1]{0}', space=sflag, size = 0x4, scoped, tag = 'scoped memory for generator_forward.1']
    %14 = vsyncpa [#allocation3], 0
    %15 = vsyncpa [#allocation5], 0
    loop: start=0, step=1, limit=4
    $region2: #{generator_forward.1} parent=1 // loop_pre_header
      _
    $region3: #{generator_forward.1} parent=1 // loop_header
      %s17 = sphi 0, %s21
      %p18 = scmp.ge.s32.totalorder %s17, 4
      %s27 = sphi 0, %s29
      %s30 = sphi 0, %s27
      %s31 = sphi 0, %s30
      %s47 = sphi 0, %s31
      %s51 = sphi 0, %s51
      %s53 = sphi 0, %s51
      %s54 = sphi 0, %s53
      %s68 = sphi 0, %s54
      %s72 = sphi 0, %s72
      %s74 = sphi 0, %s72
      %s75 = sphi 0, %s74
      %s89 = sphi 0, %s75
      %s93 = sphi 0, %s93
      %s95 = sphi 0, %s93
      %s96 = sphi 0, %s95
      %s110 = sphi 0, %s96
      %s114 = sphi 0, %s114
      %s116 = sphi 0, %s114
      %s117 = sphi 0, %s116
      %s131 = sphi 0, %s117
      %s135 = sphi 0, %s135
      %s137 = sphi 0, %s135
      %s138 = sphi 0, %s137
      %s152 = sphi 0, %s138
      %s156 = sphi 0, %s156
      %s158 = sphi 0, %s156
      %s159 = sphi 0, %s158
      %s173 = sphi 0, %s159
      %s177 = sphi 0, %s177
      %s179 = sphi 0, %s177
      %s180 = sphi 0, %s179
      %s194 = sphi 0, %s180
      %s198 = sphi 0, %s198
      %s200 = sphi 0, %s198
      %s201 = sphi 0, %s200
      %s215 = sphi 0, %s201
      %s221 = sphi 0, %s223
      %s224 = sphi 0, %s221
      %s225 = sphi 0, %s224
      %s241 = sphi 0, %s225
    $region4: #{generator_forward.1} parent=1 // loop_header_branch
      %20 = sbr.rel (%p18) target = $region8
    $region5: #{generator_forward.1} parent=1 // loop_body
      %s22 = ssub.s32 %s17, 1
      %s23 = ssub.s32 %s17, 2
      %s24 = sadd.s32 %s17, 1
      %s25 = ssub.s32 %s17, %s24
      %p26 = scmp.eq.s32.totalorder %s25, 0
      %s28 = sadd.s32 %s27, 1
      %s29 = scalar_select %p26, %s27, %s28
      %p32 = pneg %p26
      %p33 = scmp.eq.s32.totalorder %s17, 1
      %p34 = por %p32, %p33
      %p35 = scmp.ne.s32.totalorder %s27, %s30
      %p36 = scmp.eq.s32.totalorder %s17, 0
      %p37 = por %p35, %p36
      %p38 = scmp.ne.s32.totalorder %s27, %s30
      %p39 = scmp.eq.s32.totalorder %s22, 1
      %p40 = por %p38, %p39
      %p41 = scmp.ne.s32.totalorder %s30, %s31
      %p42 = scmp.eq.s32.totalorder %s22, 0
      %p43 = por %p41, %p42
      %p44 = scmp.ne.s32.totalorder %s30, %s31
      %p45 = scmp.eq.s32.totalorder %s23, 1
      %p46 = por %p44, %p45
      %p48 = scmp.ne.s32.totalorder %s31, %s47
      %p49 = scmp.eq.s32.totalorder %s23, 0
      %p50 = por %p48, %p49
      %s52 = sadd.s32 %s51, 1
      %p55 = scmp.eq.s32.totalorder %s17, 1
      %p56 = scmp.ne.s32.totalorder %s51, %s53
      %p57 = scmp.eq.s32.totalorder %s17, 0
      %p58 = por %p56, %p57
      %p59 = scmp.ne.s32.totalorder %s51, %s53
      %p60 = scmp.eq.s32.totalorder %s22, 1
      %p61 = por %p59, %p60
      %p62 = scmp.ne.s32.totalorder %s53, %s54
      %p63 = scmp.eq.s32.totalorder %s22, 0
      %p64 = por %p62, %p63
      %p65 = scmp.ne.s32.totalorder %s53, %s54
      %p66 = scmp.eq.s32.totalorder %s23, 1
      %p67 = por %p65, %p66
      %p69 = scmp.ne.s32.totalorder %s54, %s68
      %p70 = scmp.eq.s32.totalorder %s23, 0
      %p71 = por %p69, %p70
      %s73 = sadd.s32 %s72, 1
      %p76 = scmp.eq.s32.totalorder %s17, 1
      %p77 = scmp.ne.s32.totalorder %s72, %s74
      %p78 = scmp.eq.s32.totalorder %s17, 0
      %p79 = por %p77, %p78
      %p80 = scmp.ne.s32.totalorder %s72, %s74
      %p81 = scmp.eq.s32.totalorder %s22, 1
      %p82 = por %p80, %p81
      %p83 = scmp.ne.s32.totalorder %s74, %s75
      %p84 = scmp.eq.s32.totalorder %s22, 0
      %p85 = por %p83, %p84
      %p86 = scmp.ne.s32.totalorder %s74, %s75
      %p87 = scmp.eq.s32.totalorder %s23, 1
      %p88 = por %p86, %p87
      %p90 = scmp.ne.s32.totalorder %s75, %s89
      %p91 = scmp.eq.s32.totalorder %s23, 0
      %p92 = por %p90, %p91
      %s94 = sadd.s32 %s93, 1
      %p97 = scmp.eq.s32.totalorder %s17, 1
      %p98 = scmp.ne.s32.totalorder %s93, %s95
      %p99 = scmp.eq.s32.totalorder %s17, 0
      %p100 = por %p98, %p99
      %p101 = scmp.ne.s32.totalorder %s93, %s95
      %p102 = scmp.eq.s32.totalorder %s22, 1
      %p103 = por %p101, %p102
      %p104 = scmp.ne.s32.totalorder %s95, %s96
      %p105 = scmp.eq.s32.totalorder %s22, 0
      %p106 = por %p104, %p105
      %p107 = scmp.ne.s32.totalorder %s95, %s96
      %p108 = scmp.eq.s32.totalorder %s23, 1
      %p109 = por %p107, %p108
      %p111 = scmp.ne.s32.totalorder %s96, %s110
      %p112 = scmp.eq.s32.totalorder %s23, 0
      %p113 = por %p111, %p112
      %s115 = sadd.s32 %s114, 1
      %p118 = scmp.eq.s32.totalorder %s17, 1
      %p119 = scmp.ne.s32.totalorder %s114, %s116
      %p120 = scmp.eq.s32.totalorder %s17, 0
      %p121 = por %p119, %p120
      %p122 = scmp.ne.s32.totalorder %s114, %s116
      %p123 = scmp.eq.s32.totalorder %s22, 1
      %p124 = por %p122, %p123
      %p125 = scmp.ne.s32.totalorder %s116, %s117
      %p126 = scmp.eq.s32.totalorder %s22, 0
      %p127 = por %p125, %p126
      %p128 = scmp.ne.s32.totalorder %s116, %s117
      %p129 = scmp.eq.s32.totalorder %s23, 1
      %p130 = por %p128, %p129
      %p132 = scmp.ne.s32.totalorder %s117, %s131
      %p133 = scmp.eq.s32.totalorder %s23, 0
      %p134 = por %p132, %p133
      %s136 = sadd.s32 %s135, 1
      %p139 = scmp.eq.s32.totalorder %s17, 1
      %p140 = scmp.ne.s32.totalorder %s135, %s137
      %p141 = scmp.eq.s32.totalorder %s17, 0
      %p142 = por %p140, %p141
      %p143 = scmp.ne.s32.totalorder %s135, %s137
      %p144 = scmp.eq.s32.totalorder %s22, 1
      %p145 = por %p143, %p144
      %p146 = scmp.ne.s32.totalorder %s137, %s138
      %p147 = scmp.eq.s32.totalorder %s22, 0
      %p148 = por %p146, %p147
      %p149 = scmp.ne.s32.totalorder %s137, %s138
      %p150 = scmp.eq.s32.totalorder %s23, 1
      %p151 = por %p149, %p150
      %p153 = scmp.ne.s32.totalorder %s138, %s152
      %p154 = scmp.eq.s32.totalorder %s23, 0
      %p155 = por %p153, %p154
      %s157 = sadd.s32 %s156, 1
      %p160 = scmp.eq.s32.totalorder %s17, 1
      %p161 = scmp.ne.s32.totalorder %s156, %s158
      %p162 = scmp.eq.s32.totalorder %s17, 0
      %p163 = por %p161, %p162
      %p164 = scmp.ne.s32.totalorder %s156, %s158
      %p165 = scmp.eq.s32.totalorder %s22, 1
      %p166 = por %p164, %p165
      %p167 = scmp.ne.s32.totalorder %s158, %s159
      %p168 = scmp.eq.s32.totalorder %s22, 0
      %p169 = por %p167, %p168
      %p170 = scmp.ne.s32.totalorder %s158, %s159
      %p171 = scmp.eq.s32.totalorder %s23, 1
      %p172 = por %p170, %p171
      %p174 = scmp.ne.s32.totalorder %s159, %s173
      %p175 = scmp.eq.s32.totalorder %s23, 0
      %p176 = por %p174, %p175
      %s178 = sadd.s32 %s177, 1
      %p181 = scmp.eq.s32.totalorder %s17, 1
      %p182 = scmp.ne.s32.totalorder %s177, %s179
      %p183 = scmp.eq.s32.totalorder %s17, 0
      %p184 = por %p182, %p183
      %p185 = scmp.ne.s32.totalorder %s177, %s179
      %p186 = scmp.eq.s32.totalorder %s22, 1
      %p187 = por %p185, %p186
      %p188 = scmp.ne.s32.totalorder %s179, %s180
      %p189 = scmp.eq.s32.totalorder %s22, 0
      %p190 = por %p188, %p189
      %p191 = scmp.ne.s32.totalorder %s179, %s180
      %p192 = scmp.eq.s32.totalorder %s23, 1
      %p193 = por %p191, %p192
      %p195 = scmp.ne.s32.totalorder %s180, %s194
      %p196 = scmp.eq.s32.totalorder %s23, 0
      %p197 = por %p195, %p196
      %s199 = sadd.s32 %s198, 1
      %p202 = scmp.eq.s32.totalorder %s17, 1
      %p203 = scmp.ne.s32.totalorder %s198, %s200
      %p204 = scmp.eq.s32.totalorder %s17, 0
      %p205 = por %p203, %p204
      %p206 = scmp.ne.s32.totalorder %s198, %s200
      %p207 = scmp.eq.s32.totalorder %s22, 1
      %p208 = por %p206, %p207
      %p209 = scmp.ne.s32.totalorder %s200, %s201
      %p210 = scmp.eq.s32.totalorder %s22, 0
      %p211 = por %p209, %p210
      %p212 = scmp.ne.s32.totalorder %s200, %s201
      %p213 = scmp.eq.s32.totalorder %s23, 1
      %p214 = por %p212, %p213
      %p216 = scmp.ne.s32.totalorder %s201, %s215
      %p217 = scmp.eq.s32.totalorder %s23, 0
      %p218 = por %p216, %p217
      %s219 = ssub.s32 %s17, %s24
      %p220 = scmp.eq.s32.totalorder %s219, 0
      %s222 = sadd.s32 %s221, 1
      %s223 = scalar_select %p220, %s221, %s222
      %p226 = pneg %p220
      %p227 = scmp.eq.s32.totalorder %s17, 1
      %p228 = por %p226, %p227
      %p229 = scmp.ne.s32.totalorder %s221, %s224
      %p230 = scmp.eq.s32.totalorder %s17, 0
      %p231 = por %p229, %p230
      %p232 = scmp.ne.s32.totalorder %s221, %s224
      %p233 = scmp.eq.s32.totalorder %s22, 1
      %p234 = por %p232, %p233
      %p235 = scmp.ne.s32.totalorder %s224, %s225
      %p236 = scmp.eq.s32.totalorder %s22, 0
      %p237 = por %p235, %p236
      %p238 = scmp.ne.s32.totalorder %s224, %s225
      %p239 = scmp.eq.s32.totalorder %s23, 1
      %p240 = por %p238, %p239
      %p242 = scmp.ne.s32.totalorder %s225, %s241
      %p243 = scmp.eq.s32.totalorder %s23, 0
      %p244 = por %p242, %p243
      %p245 = scmp.le.s32.totalorder 1, %s17
      %p246 = scmp.lt.s32.totalorder %s17, 3
      %p247 = pnand %p245, %p246
      %p248 = pneg %p247
      // Predicated region
      $region9: #{generator_forward.1} parent=5 // pred_check
        _
      $region10: #{generator_forward.1} parent=5 // pred_check_branch
        %250 = sbr.rel (%p247) target = $region12
      $region11: #{generator_forward.1} parent=5 // pred_region
        %s251 = ssub.s32 %s17, 1
        // Predicated region
        $region13: #{generator_forward.1} parent=11 // pred_check
          %p252 = pneg %p64
        $region14: #{generator_forward.1} parent=11 // pred_check_branch
          %254 = sbr.rel (%p252) target = $region16
        $region15: #{generator_forward.1} parent=11 // pred_region
          _
        $region16: #{generator_forward.1} parent=11 // pred_fallthru
          _
        // Predicated region
        $region17: #{generator_forward.1} parent=11 // pred_check
          %p255 = pneg %p85
        $region18: #{generator_forward.1} parent=11 // pred_check_branch
          %257 = sbr.rel (%p255) target = $region20
        $region19: #{generator_forward.1} parent=11 // pred_region
          _
        $region20: #{generator_forward.1} parent=11 // pred_fallthru
          _
        // Predicated region
        $region21: #{generator_forward.1} parent=11 // pred_check
          %p258 = pneg %p106
        $region22: #{generator_forward.1} parent=11 // pred_check_branch
          %260 = sbr.rel (%p258) target = $region24
        $region23: #{generator_forward.1} parent=11 // pred_region
          %s262 = ssub.s32 32768, 32768
          %263 = vsyncadd [#allocation3], %s262
          %s264 = sshll.u32 [#allocation2], 4
          %s265 = int_to_ptr.vmem [resolvable:$true] %s264
          %270 = dma.hbm_to_vmem [thread:$0]  %s3, 32768, %s265, [#allocation3], 512, 512, 32
        $region24: #{generator_forward.1} parent=11 // pred_fallthru
          _
        // Predicated region
        $region25: #{generator_forward.1} parent=11 // pred_check
          %p271 = pneg %p127
        $region26: #{generator_forward.1} parent=11 // pred_check_branch
          %273 = sbr.rel (%p271) target = $region28
        $region27: #{generator_forward.1} parent=11 // pred_region
          _
        $region28: #{generator_forward.1} parent=11 // pred_fallthru
          _
        // Predicated region
        $region29: #{generator_forward.1} parent=11 // pred_check
          %p274 = pneg %p148
        $region30: #{generator_forward.1} parent=11 // pred_check_branch
          %276 = sbr.rel (%p274) target = $region32
        $region31: #{generator_forward.1} parent=11 // pred_region
          %s278 = ssub.s32 32768, 32768
          %279 = vsyncadd [#allocation5], %s278
          %s280 = sshll.u32 [#allocation4], 4
          %s281 = int_to_ptr.vmem [resolvable:$true] %s280
          %286 = dma.hbm_to_vmem [thread:$0]  %s5, 32768, %s281, [#allocation5], 512, 512, 32
        $region32: #{generator_forward.1} parent=11 // pred_fallthru
          _
        // Predicated region
        $region33: #{generator_forward.1} parent=11 // pred_check
          %p287 = pneg %p169
        $region34: #{generator_forward.1} parent=11 // pred_check_branch
          %289 = sbr.rel (%p287) target = $region36
        $region35: #{generator_forward.1} parent=11 // pred_region
          _
        $region36: #{generator_forward.1} parent=11 // pred_fallthru
          _
        // Predicated region
        $region37: #{generator_forward.1} parent=11 // pred_check
          %p290 = pneg %p190
        $region38: #{generator_forward.1} parent=11 // pred_check_branch
          %292 = sbr.rel (%p290) target = $region40
        $region39: #{generator_forward.1} parent=11 // pred_region
          _
        $region40: #{generator_forward.1} parent=11 // pred_fallthru
          _
        // Predicated region
        $region41: #{generator_forward.1} parent=11 // pred_check
          %p293 = pneg %p211
        $region42: #{generator_forward.1} parent=11 // pred_check_branch
          %295 = sbr.rel (%p293) target = $region44
        $region43: #{generator_forward.1} parent=11 // pred_region
          _
        $region44: #{generator_forward.1} parent=11 // pred_fallthru
          _
      $region12: #{generator_forward.1} parent=5 // pred_fallthru
        _
      %p296 = scmp.lt.s32.totalorder %s17, 2
      // Predicated region
      $region45: #{generator_forward.1} parent=5 // pred_check
        %p297 = pneg %p296
      $region46: #{generator_forward.1} parent=5 // pred_check_branch
        %299 = sbr.rel (%p297) target = $region48
      $region47: #{generator_forward.1} parent=5 // pred_region
        // Predicated region
        $region49: #{generator_forward.1} parent=47 // pred_check
          %p300 = pneg %p37
        $region50: #{generator_forward.1} parent=47 // pred_check_branch
          %302 = sbr.rel (%p300) target = $region52
        $region51: #{generator_forward.1} parent=47 // pred_region
          %s303 = smul.u32 32, %s17
          %p304 = scmp.lt.s32.totalorder %s303, 63
          %s305 = scalar_select %p304, %s303, 63
          %s306 = smul.addr %s305, 8
          %s307 = scalar_lea.vmem %s0, %s306
          %s308 = smul.u32 32, %s17
        $region52: #{generator_forward.1} parent=47 // pred_fallthru
          _
      $region48: #{generator_forward.1} parent=5 // pred_fallthru
        _
      %p309 = scmp.le.s32.totalorder 1, %s17
      %p310 = scmp.lt.s32.totalorder %s17, 3
      %p311 = pnand %p309, %p310
      %p312 = pneg %p311
      // Predicated region
      $region53: #{generator_forward.1} parent=5 // pred_check
        _
      $region54: #{generator_forward.1} parent=5 // pred_check_branch
        %314 = sbr.rel (%p311) target = $region56
      $region55: #{generator_forward.1} parent=5 // pred_region
        %s315 = ssub.s32 %s17, 1
        // Predicated region
        $region57: #{generator_forward.1} parent=55 // pred_check
          %p316 = pneg %p106
        $region58: #{generator_forward.1} parent=55 // pred_check_branch
          %318 = sbr.rel (%p316) target = $region60
        $region59: #{generator_forward.1} parent=55 // pred_region
          %319 = dma.done [#allocation3], 32768
        $region60: #{generator_forward.1} parent=55 // pred_fallthru
          _
        // Predicated region
        $region61: #{generator_forward.1} parent=55 // pred_check
          %p320 = pneg %p148
        $region62: #{generator_forward.1} parent=55 // pred_check_branch
          %322 = sbr.rel (%p320) target = $region64
        $region63: #{generator_forward.1} parent=55 // pred_region
          %323 = dma.done [#allocation5], 32768
        $region64: #{generator_forward.1} parent=55 // pred_fallthru
          _
        %s324 = smul.u32 32, %s22
        %p325 = scmp.lt.s32.totalorder %s324, 63
        %s326 = scalar_select %p325, %s324, 63
        %s327 = smul.addr %s326, 8
        %s328 = scalar_lea.vmem %s0, %s327
        %p329 = pneg %p43
        %p330 = pneg %p40
        %p331 = pneg %p64
        %p332 = pneg %p61
        %p333 = pneg %p85
        %p334 = pneg %p82
        %p335 = pneg %p106
        %p336 = pneg %p103
        %p337 = pneg %p127
        %p338 = pneg %p124
        %p339 = pneg %p148
        %p340 = pneg %p145
        %p341 = pneg %p169
        %p342 = pneg %p166
        %p343 = pneg %p190
        %p344 = pneg %p187
        %p345 = pneg %p211
        %p346 = pneg %p208
        %p347 = pneg %p237
        %p348 = pneg %p234
        %s349 = smul.u32 32, %s22
        %p350 = scmp.lt.s32.totalorder %s349, 63
        %s351 = scalar_select %p350, %s349, 63
        %s352 = smul.addr %s351, 8
        %s353 = scalar_lea.vmem %s9, %s352
        %s354 = smul.u32 32, %s22
        %p355 = scmp.lt.s32.totalorder %s354, 63
        %s356 = scalar_select %p355, %s354, 63
        %s357 = smul.addr %s356, 8
        %s358 = scalar_lea.vmem %s0, %s357
        %s359 = smul.u32 32, %s22
        %s360 = smul.u32 32, %s22
        %p361 = scmp.lt.s32.totalorder %s360, 63
        %s362 = scalar_select %p361, %s360, 63
        %s363 = smul.addr %s362, 8
        %s364 = scalar_lea.vmem %s9, %s363
        %s365 = smul.u32 32, %s22
        %v366 = vld [vmem:[%s358] sm:$0xff]
        %v367 = vld [vmem:[%s358 + $0x8] sm:$0xff]
        %v368 = vld [vmem:[%s358 + $0x10] sm:$0xff]
        %v369 = vld [vmem:[%s358 + $0x18] sm:$0xff]
        %v370 = vld [vmem:[%s358 + $0x20] sm:$0xff]
        %v371 = vld [vmem:[%s358 + $0x28] sm:$0xff]
        %v372 = vld [vmem:[%s358 + $0x30] sm:$0xff]
        %v373 = vld [vmem:[%s358 + $0x38] sm:$0xff]
        %v374 = vld [vmem:[%s358 + $0x40] sm:$0xff]
        %v375 = vld [vmem:[%s358 + $0x48] sm:$0xff]
        %v376 = vld [vmem:[%s358 + $0x50] sm:$0xff]
        %v377 = vld [vmem:[%s358 + $0x58] sm:$0xff]
        %v378 = vld [vmem:[%s358 + $0x60] sm:$0xff]
        %v379 = vld [vmem:[%s358 + $0x68] sm:$0xff]
        %v380 = vld [vmem:[%s358 + $0x70] sm:$0xff]
        %v381 = vld [vmem:[%s358 + $0x78] sm:$0xff]
        %v382 = vld [vmem:[%s358 + $0x80] sm:$0xff]
        %v383 = vld [vmem:[%s358 + $0x88] sm:$0xff]
        %v384 = vld [vmem:[%s358 + $0x90] sm:$0xff]
        %v385 = vld [vmem:[%s358 + $0x98] sm:$0xff]
        %v386 = vld [vmem:[%s358 + $0xa0] sm:$0xff]
        %v387 = vld [vmem:[%s358 + $0xa8] sm:$0xff]
        %v388 = vld [vmem:[%s358 + $0xb0] sm:$0xff]
        %v389 = vld [vmem:[%s358 + $0xb8] sm:$0xff]
        %v390 = vld [vmem:[%s358 + $0xc0] sm:$0xff]
        %v391 = vld [vmem:[%s358 + $0xc8] sm:$0xff]
        %v392 = vld [vmem:[%s358 + $0xd0] sm:$0xff]
        %v393 = vld [vmem:[%s358 + $0xd8] sm:$0xff]
        %v394 = vld [vmem:[%s358 + $0xe0] sm:$0xff]
        %v395 = vld [vmem:[%s358 + $0xe8] sm:$0xff]
        %v396 = vld [vmem:[%s358 + $0xf0] sm:$0xff]
        %v397 = vld [vmem:[%s358 + $0xf8] sm:$0xff]
        %v398 = vld [vmem:[%s1] sm:$0xff]
        %400 = vset.pattern.permute.xlu0 0
        %401 = vperm.xlu0 %400, %v366
        %v402 = vpop.permute.xlu0 %401
        %405 = vset.pattern.permute.xlu0 0
        %406 = vperm.xlu0 %405, %v367
        %v407 = vpop.permute.xlu0 %406
        %410 = vset.pattern.permute.xlu0 0
        %411 = vperm.xlu0 %410, %v368
        %v412 = vpop.permute.xlu0 %411
        %415 = vset.pattern.permute.xlu0 0
        %416 = vperm.xlu0 %415, %v369
        %v417 = vpop.permute.xlu0 %416
        %420 = vset.pattern.permute.xlu0 0
        %421 = vperm.xlu0 %420, %v370
        %v422 = vpop.permute.xlu0 %421
        %425 = vset.pattern.permute.xlu0 0
        %426 = vperm.xlu0 %425, %v371
        %v427 = vpop.permute.xlu0 %426
        %430 = vset.pattern.permute.xlu0 0
        %431 = vperm.xlu0 %430, %v372
        %v432 = vpop.permute.xlu0 %431
        %435 = vset.pattern.permute.xlu0 0
        %436 = vperm.xlu0 %435, %v373
        %v437 = vpop.permute.xlu0 %436
        %440 = vset.pattern.permute.xlu0 0
        %441 = vperm.xlu0 %440, %v374
        %v442 = vpop.permute.xlu0 %441
        %445 = vset.pattern.permute.xlu0 0
        %446 = vperm.xlu0 %445, %v375
        %v447 = vpop.permute.xlu0 %446
        %450 = vset.pattern.permute.xlu0 0
        %451 = vperm.xlu0 %450, %v376
        %v452 = vpop.permute.xlu0 %451
        %455 = vset.pattern.permute.xlu0 0
        %456 = vperm.xlu0 %455, %v377
        %v457 = vpop.permute.xlu0 %456
        %460 = vset.pattern.permute.xlu0 0
        %461 = vperm.xlu0 %460, %v378
        %v462 = vpop.permute.xlu0 %461
        %465 = vset.pattern.permute.xlu0 0
        %466 = vperm.xlu0 %465, %v379
        %v467 = vpop.permute.xlu0 %466
        %470 = vset.pattern.permute.xlu0 0
        %471 = vperm.xlu0 %470, %v380
        %v472 = vpop.permute.xlu0 %471
        %475 = vset.pattern.permute.xlu0 0
        %476 = vperm.xlu0 %475, %v381
        %v477 = vpop.permute.xlu0 %476
        %480 = vset.pattern.permute.xlu0 0
        %481 = vperm.xlu0 %480, %v382
        %v482 = vpop.permute.xlu0 %481
        %485 = vset.pattern.permute.xlu0 0
        %486 = vperm.xlu0 %485, %v383
        %v487 = vpop.permute.xlu0 %486
        %490 = vset.pattern.permute.xlu0 0
        %491 = vperm.xlu0 %490, %v384
        %v492 = vpop.permute.xlu0 %491
        %495 = vset.pattern.permute.xlu0 0
        %496 = vperm.xlu0 %495, %v385
        %v497 = vpop.permute.xlu0 %496
        %500 = vset.pattern.permute.xlu0 0
        %501 = vperm.xlu0 %500, %v386
        %v502 = vpop.permute.xlu0 %501
        %505 = vset.pattern.permute.xlu0 0
        %506 = vperm.xlu0 %505, %v387
        %v507 = vpop.permute.xlu0 %506
        %510 = vset.pattern.permute.xlu0 0
        %511 = vperm.xlu0 %510, %v388
        %v512 = vpop.permute.xlu0 %511
        %515 = vset.pattern.permute.xlu0 0
        %516 = vperm.xlu0 %515, %v389
        %v517 = vpop.permute.xlu0 %516
        %520 = vset.pattern.permute.xlu0 0
        %521 = vperm.xlu0 %520, %v390
        %v522 = vpop.permute.xlu0 %521
        %525 = vset.pattern.permute.xlu0 0
        %526 = vperm.xlu0 %525, %v391
        %v527 = vpop.permute.xlu0 %526
        %530 = vset.pattern.permute.xlu0 0
        %531 = vperm.xlu0 %530, %v392
        %v532 = vpop.permute.xlu0 %531
        %535 = vset.pattern.permute.xlu0 0
        %536 = vperm.xlu0 %535, %v393
        %v537 = vpop.permute.xlu0 %536
        %540 = vset.pattern.permute.xlu0 0
        %541 = vperm.xlu0 %540, %v394
        %v542 = vpop.permute.xlu0 %541
        %545 = vset.pattern.permute.xlu0 0
        %546 = vperm.xlu0 %545, %v395
        %v547 = vpop.permute.xlu0 %546
        %550 = vset.pattern.permute.xlu0 0
        %551 = vperm.xlu0 %550, %v396
        %v552 = vpop.permute.xlu0 %551
        %555 = vset.pattern.permute.xlu0 0
        %556 = vperm.xlu0 %555, %v397
        %v557 = vpop.permute.xlu0 %556
        %v560 = vlaneseq
        %v561 = vshrl.u32 %v560, 7
        %v562 = vsub.s32 0, %v561
        %v563 = vrot.slane %v398, %v562
        %v564 = vlaneseq
        %v565 = vshrl.u32 %v564, 7
        %v566 = vsub.s32 2, %v565
        %v567 = vrot.slane %v398, %v566
        %v568 = vlaneseq
        %v569 = vshrl.u32 %v568, 7
        %v570 = vsub.s32 4, %v569
        %v571 = vrot.slane %v398, %v570
        %v572 = vlaneseq
        %v573 = vshrl.u32 %v572, 7
        %v574 = vsub.s32 6, %v573
        %v575 = vrot.slane %v398, %v574
        %v580 = vlaneseq
        %v581 = vshrl.u32 %v580, 7
        %v582 = vsub.s32 0, %v581
        %v583 = vrot.slane %v563, %v582
        %v584 = vlaneseq
        %v585 = vshrl.u32 %v584, 7
        %v586 = vsub.s32 0, %v585
        %v587 = vrot.slane %v567, %v586
        %v588 = vlaneseq
        %v589 = vshrl.u32 %v588, 7
        %v590 = vsub.s32 0, %v589
        %v591 = vrot.slane %v571, %v590
        %v592 = vlaneseq
        %v593 = vshrl.u32 %v592, 7
        %v594 = vsub.s32 0, %v593
        %v595 = vrot.slane %v575, %v594
        %v596 = vmul.f32 %v402, %v583
        %v597 = vmul.f32 %v402, %v587
        %v598 = vmul.f32 %v402, %v591
        %v599 = vmul.f32 %v402, %v595
        %v600 = vmul.f32 %v407, %v583
        %v601 = vmul.f32 %v407, %v587
        %v602 = vmul.f32 %v407, %v591
        %v603 = vmul.f32 %v407, %v595
        %v604 = vmul.f32 %v412, %v583
        %v605 = vmul.f32 %v412, %v587
        %v606 = vmul.f32 %v412, %v591
        %v607 = vmul.f32 %v412, %v595
        %v608 = vmul.f32 %v417, %v583
        %v609 = vmul.f32 %v417, %v587
        %v610 = vmul.f32 %v417, %v591
        %v611 = vmul.f32 %v417, %v595
        %v612 = vmul.f32 %v422, %v583
        %v613 = vmul.f32 %v422, %v587
        %v614 = vmul.f32 %v422, %v591
        %v615 = vmul.f32 %v422, %v595
        %v616 = vmul.f32 %v427, %v583
        %v617 = vmul.f32 %v427, %v587
        %v618 = vmul.f32 %v427, %v591
        %v619 = vmul.f32 %v427, %v595
        %v620 = vmul.f32 %v432, %v583
        %v621 = vmul.f32 %v432, %v587
        %v622 = vmul.f32 %v432, %v591
        %v623 = vmul.f32 %v432, %v595
        %v624 = vmul.f32 %v437, %v583
        %v625 = vmul.f32 %v437, %v587
        %v626 = vmul.f32 %v437, %v591
        %v627 = vmul.f32 %v437, %v595
        %v628 = vmul.f32 %v442, %v583
        %v629 = vmul.f32 %v442, %v587
        %v630 = vmul.f32 %v442, %v591
        %v631 = vmul.f32 %v442, %v595
        %v632 = vmul.f32 %v447, %v583
        %v633 = vmul.f32 %v447, %v587
        %v634 = vmul.f32 %v447, %v591
        %v635 = vmul.f32 %v447, %v595
        %v636 = vmul.f32 %v452, %v583
        %v637 = vmul.f32 %v452, %v587
        %v638 = vmul.f32 %v452, %v591
        %v639 = vmul.f32 %v452, %v595
        %v640 = vmul.f32 %v457, %v583
        %v641 = vmul.f32 %v457, %v587
        %v642 = vmul.f32 %v457, %v591
        %v643 = vmul.f32 %v457, %v595
        %v644 = vmul.f32 %v462, %v583
        %v645 = vmul.f32 %v462, %v587
        %v646 = vmul.f32 %v462, %v591
        %v647 = vmul.f32 %v462, %v595
        %v648 = vmul.f32 %v467, %v583
        %v649 = vmul.f32 %v467, %v587
        %v650 = vmul.f32 %v467, %v591
        %v651 = vmul.f32 %v467, %v595
        %v652 = vmul.f32 %v472, %v583
        %v653 = vmul.f32 %v472, %v587
        %v654 = vmul.f32 %v472, %v591
        %v655 = vmul.f32 %v472, %v595
        %v656 = vmul.f32 %v477, %v583
        %v657 = vmul.f32 %v477, %v587
        %v658 = vmul.f32 %v477, %v591
        %v659 = vmul.f32 %v477, %v595
        %v660 = vmul.f32 %v482, %v583
        %v661 = vmul.f32 %v482, %v587
        %v662 = vmul.f32 %v482, %v591
        %v663 = vmul.f32 %v482, %v595
        %v664 = vmul.f32 %v487, %v583
        %v665 = vmul.f32 %v487, %v587
        %v666 = vmul.f32 %v487, %v591
        %v667 = vmul.f32 %v487, %v595
        %v668 = vmul.f32 %v492, %v583
        %v669 = vmul.f32 %v492, %v587
        %v670 = vmul.f32 %v492, %v591
        %v671 = vmul.f32 %v492, %v595
        %v672 = vmul.f32 %v497, %v583
        %v673 = vmul.f32 %v497, %v587
        %v674 = vmul.f32 %v497, %v591
        %v675 = vmul.f32 %v497, %v595
        %v676 = vmul.f32 %v502, %v583
        %v677 = vmul.f32 %v502, %v587
        %v678 = vmul.f32 %v502, %v591
        %v679 = vmul.f32 %v502, %v595
        %v680 = vmul.f32 %v507, %v583
        %v681 = vmul.f32 %v507, %v587
        %v682 = vmul.f32 %v507, %v591
        %v683 = vmul.f32 %v507, %v595
        %v684 = vmul.f32 %v512, %v583
        %v685 = vmul.f32 %v512, %v587
        %v686 = vmul.f32 %v512, %v591
        %v687 = vmul.f32 %v512, %v595
        %v688 = vmul.f32 %v517, %v583
        %v689 = vmul.f32 %v517, %v587
        %v690 = vmul.f32 %v517, %v591
        %v691 = vmul.f32 %v517, %v595
        %v692 = vmul.f32 %v522, %v583
        %v693 = vmul.f32 %v522, %v587
        %v694 = vmul.f32 %v522, %v591
        %v695 = vmul.f32 %v522, %v595
        %v696 = vmul.f32 %v527, %v583
        %v697 = vmul.f32 %v527, %v587
        %v698 = vmul.f32 %v527, %v591
        %v699 = vmul.f32 %v527, %v595
        %v700 = vmul.f32 %v532, %v583
        %v701 = vmul.f32 %v532, %v587
        %v702 = vmul.f32 %v532, %v591
        %v703 = vmul.f32 %v532, %v595
        %v704 = vmul.f32 %v537, %v583
        %v705 = vmul.f32 %v537, %v587
        %v706 = vmul.f32 %v537, %v591
        %v707 = vmul.f32 %v537, %v595
        %v708 = vmul.f32 %v542, %v583
        %v709 = vmul.f32 %v542, %v587
        %v710 = vmul.f32 %v542, %v591
        %v711 = vmul.f32 %v542, %v595
        %v712 = vmul.f32 %v547, %v583
        %v713 = vmul.f32 %v547, %v587
        %v714 = vmul.f32 %v547, %v591
        %v715 = vmul.f32 %v547, %v595
        %v716 = vmul.f32 %v552, %v583
        %v717 = vmul.f32 %v552, %v587
        %v718 = vmul.f32 %v552, %v591
        %v719 = vmul.f32 %v552, %v595
        %v720 = vmul.f32 %v557, %v583
        %v721 = vmul.f32 %v557, %v587
        %v722 = vmul.f32 %v557, %v591
        %v723 = vmul.f32 %v557, %v595
        %724 = vset.pattern.permute.xlu0 1
        %725 = vperm.xlu0 %724, %v366
        %v726 = vpop.permute.xlu0 %725
        %728 = vset.pattern.permute.xlu0 1
        %729 = vperm.xlu0 %728, %v367
        %v730 = vpop.permute.xlu0 %729
        %732 = vset.pattern.permute.xlu0 1
        %733 = vperm.xlu0 %732, %v368
        %v734 = vpop.permute.xlu0 %733
        %736 = vset.pattern.permute.xlu0 1
        %737 = vperm.xlu0 %736, %v369
        %v738 = vpop.permute.xlu0 %737
        %740 = vset.pattern.permute.xlu0 1
        %741 = vperm.xlu0 %740, %v370
        %v742 = vpop.permute.xlu0 %741
        %744 = vset.pattern.permute.xlu0 1
        %745 = vperm.xlu0 %744, %v371
        %v746 = vpop.permute.xlu0 %745
        %748 = vset.pattern.permute.xlu0 1
        %749 = vperm.xlu0 %748, %v372
        %v750 = vpop.permute.xlu0 %749
        %752 = vset.pattern.permute.xlu0 1
        %753 = vperm.xlu0 %752, %v373
        %v754 = vpop.permute.xlu0 %753
        %756 = vset.pattern.permute.xlu0 1
        %757 = vperm.xlu0 %756, %v374
        %v758 = vpop.permute.xlu0 %757
        %760 = vset.pattern.permute.xlu0 1
        %761 = vperm.xlu0 %760, %v375
        %v762 = vpop.permute.xlu0 %761
        %764 = vset.pattern.permute.xlu0 1
        %765 = vperm.xlu0 %764, %v376
        %v766 = vpop.permute.xlu0 %765
        %768 = vset.pattern.permute.xlu0 1
        %769 = vperm.xlu0 %768, %v377
        %v770 = vpop.permute.xlu0 %769
        %772 = vset.pattern.permute.xlu0 1
        %773 = vperm.xlu0 %772, %v378
        %v774 = vpop.permute.xlu0 %773
        %776 = vset.pattern.permute.xlu0 1
        %777 = vperm.xlu0 %776, %v379
        %v778 = vpop.permute.xlu0 %777
        %780 = vset.pattern.permute.xlu0 1
        %781 = vperm.xlu0 %780, %v380
        %v782 = vpop.permute.xlu0 %781
        %784 = vset.pattern.permute.xlu0 1
        %785 = vperm.xlu0 %784, %v381
        %v786 = vpop.permute.xlu0 %785
        %788 = vset.pattern.permute.xlu0 1
        %789 = vperm.xlu0 %788, %v382
        %v790 = vpop.permute.xlu0 %789
        %792 = vset.pattern.permute.xlu0 1
        %793 = vperm.xlu0 %792, %v383
        %v794 = vpop.permute.xlu0 %793
        %796 = vset.pattern.permute.xlu0 1
        %797 = vperm.xlu0 %796, %v384
        %v798 = vpop.permute.xlu0 %797
        %800 = vset.pattern.permute.xlu0 1
        %801 = vperm.xlu0 %800, %v385
        %v802 = vpop.permute.xlu0 %801
        %804 = vset.pattern.permute.xlu0 1
        %805 = vperm.xlu0 %804, %v386
        %v806 = vpop.permute.xlu0 %805
        %808 = vset.pattern.permute.xlu0 1
        %809 = vperm.xlu0 %808, %v387
        %v810 = vpop.permute.xlu0 %809
        %812 = vset.pattern.permute.xlu0 1
        %813 = vperm.xlu0 %812, %v388
        %v814 = vpop.permute.xlu0 %813
        %816 = vset.pattern.permute.xlu0 1
        %817 = vperm.xlu0 %816, %v389
        %v818 = vpop.permute.xlu0 %817
        %820 = vset.pattern.permute.xlu0 1
        %821 = vperm.xlu0 %820, %v390
        %v822 = vpop.permute.xlu0 %821
        %824 = vset.pattern.permute.xlu0 1
        %825 = vperm.xlu0 %824, %v391
        %v826 = vpop.permute.xlu0 %825
        %828 = vset.pattern.permute.xlu0 1
        %829 = vperm.xlu0 %828, %v392
        %v830 = vpop.permute.xlu0 %829
        %832 = vset.pattern.permute.xlu0 1
        %833 = vperm.xlu0 %832, %v393
        %v834 = vpop.permute.xlu0 %833
        %836 = vset.pattern.permute.xlu0 1
        %837 = vperm.xlu0 %836, %v394
        %v838 = vpop.permute.xlu0 %837
        %840 = vset.pattern.permute.xlu0 1
        %841 = vperm.xlu0 %840, %v395
        %v842 = vpop.permute.xlu0 %841
        %844 = vset.pattern.permute.xlu0 1
        %845 = vperm.xlu0 %844, %v396
        %v846 = vpop.permute.xlu0 %845
        %848 = vset.pattern.permute.xlu0 1
        %849 = vperm.xlu0 %848, %v397
        %v850 = vpop.permute.xlu0 %849
        %v852 = vlaneseq
        %v853 = vshrl.u32 %v852, 7
        %v854 = vsub.s32 1, %v853
        %v855 = vrot.slane %v398, %v854
        %v856 = vlaneseq
        %v857 = vshrl.u32 %v856, 7
        %v858 = vsub.s32 3, %v857
        %v859 = vrot.slane %v398, %v858
        %v860 = vlaneseq
        %v861 = vshrl.u32 %v860, 7
        %v862 = vsub.s32 5, %v861
        %v863 = vrot.slane %v398, %v862
        %v864 = vlaneseq
        %v865 = vshrl.u32 %v864, 7
        %v866 = vsub.s32 7, %v865
        %v867 = vrot.slane %v398, %v866
        %v872 = vlaneseq
        %v873 = vshrl.u32 %v872, 7
        %v874 = vsub.s32 1, %v873
        %v875 = vrot.slane %v855, %v874
        %v876 = vlaneseq
        %v877 = vshrl.u32 %v876, 7
        %v878 = vsub.s32 1, %v877
        %v879 = vrot.slane %v859, %v878
        %v880 = vlaneseq
        %v881 = vshrl.u32 %v880, 7
        %v882 = vsub.s32 1, %v881
        %v883 = vrot.slane %v863, %v882
        %v884 = vlaneseq
        %v885 = vshrl.u32 %v884, 7
        %v886 = vsub.s32 1, %v885
        %v887 = vrot.slane %v867, %v886
        %v888 = vmul.f32 %v726, %v875
        %v889 = vmul.f32 %v726, %v879
        %v890 = vmul.f32 %v726, %v883
        %v891 = vmul.f32 %v726, %v887
        %v892 = vmul.f32 %v730, %v875
        %v893 = vmul.f32 %v730, %v879
        %v894 = vmul.f32 %v730, %v883
        %v895 = vmul.f32 %v730, %v887
        %v896 = vmul.f32 %v734, %v875
        %v897 = vmul.f32 %v734, %v879
        %v898 = vmul.f32 %v734, %v883
        %v899 = vmul.f32 %v734, %v887
        %v900 = vmul.f32 %v738, %v875
        %v901 = vmul.f32 %v738, %v879
        %v902 = vmul.f32 %v738, %v883
        %v903 = vmul.f32 %v738, %v887
        %v904 = vmul.f32 %v742, %v875
        %v905 = vmul.f32 %v742, %v879
        %v906 = vmul.f32 %v742, %v883
        %v907 = vmul.f32 %v742, %v887
        %v908 = vmul.f32 %v746, %v875
        %v909 = vmul.f32 %v746, %v879
        %v910 = vmul.f32 %v746, %v883
        %v911 = vmul.f32 %v746, %v887
        %v912 = vmul.f32 %v750, %v875
        %v913 = vmul.f32 %v750, %v879
        %v914 = vmul.f32 %v750, %v883
        %v915 = vmul.f32 %v750, %v887
        %v916 = vmul.f32 %v754, %v875
        %v917 = vmul.f32 %v754, %v879
        %v918 = vmul.f32 %v754, %v883
        %v919 = vmul.f32 %v754, %v887
        %v920 = vmul.f32 %v758, %v875
        %v921 = vmul.f32 %v758, %v879
        %v922 = vmul.f32 %v758, %v883
        %v923 = vmul.f32 %v758, %v887
        %v924 = vmul.f32 %v762, %v875
        %v925 = vmul.f32 %v762, %v879
        %v926 = vmul.f32 %v762, %v883
        %v927 = vmul.f32 %v762, %v887
        %v928 = vmul.f32 %v766, %v875
        %v929 = vmul.f32 %v766, %v879
        %v930 = vmul.f32 %v766, %v883
        %v931 = vmul.f32 %v766, %v887
        %v932 = vmul.f32 %v770, %v875
        %v933 = vmul.f32 %v770, %v879
        %v934 = vmul.f32 %v770, %v883
        %v935 = vmul.f32 %v770, %v887
        %v936 = vmul.f32 %v774, %v875
        %v937 = vmul.f32 %v774, %v879
        %v938 = vmul.f32 %v774, %v883
        %v939 = vmul.f32 %v774, %v887
        %v940 = vmul.f32 %v778, %v875
        %v941 = vmul.f32 %v778, %v879
        %v942 = vmul.f32 %v778, %v883
        %v943 = vmul.f32 %v778, %v887
        %v944 = vmul.f32 %v782, %v875
        %v945 = vmul.f32 %v782, %v879
        %v946 = vmul.f32 %v782, %v883
        %v947 = vmul.f32 %v782, %v887
        %v948 = vmul.f32 %v786, %v875
        %v949 = vmul.f32 %v786, %v879
        %v950 = vmul.f32 %v786, %v883
        %v951 = vmul.f32 %v786, %v887
        %v952 = vmul.f32 %v790, %v875
        %v953 = vmul.f32 %v790, %v879
        %v954 = vmul.f32 %v790, %v883
        %v955 = vmul.f32 %v790, %v887
        %v956 = vmul.f32 %v794, %v875
        %v957 = vmul.f32 %v794, %v879
        %v958 = vmul.f32 %v794, %v883
        %v959 = vmul.f32 %v794, %v887
        %v960 = vmul.f32 %v798, %v875
        %v961 = vmul.f32 %v798, %v879
        %v962 = vmul.f32 %v798, %v883
        %v963 = vmul.f32 %v798, %v887
        %v964 = vmul.f32 %v802, %v875
        %v965 = vmul.f32 %v802, %v879
        %v966 = vmul.f32 %v802, %v883
        %v967 = vmul.f32 %v802, %v887
        %v968 = vmul.f32 %v806, %v875
        %v969 = vmul.f32 %v806, %v879
        %v970 = vmul.f32 %v806, %v883
        %v971 = vmul.f32 %v806, %v887
        %v972 = vmul.f32 %v810, %v875
        %v973 = vmul.f32 %v810, %v879
        %v974 = vmul.f32 %v810, %v883
        %v975 = vmul.f32 %v810, %v887
        %v976 = vmul.f32 %v814, %v875
        %v977 = vmul.f32 %v814, %v879
        %v978 = vmul.f32 %v814, %v883
        %v979 = vmul.f32 %v814, %v887
        %v980 = vmul.f32 %v818, %v875
        %v981 = vmul.f32 %v818, %v879
        %v982 = vmul.f32 %v818, %v883
        %v983 = vmul.f32 %v818, %v887
        %v984 = vmul.f32 %v822, %v875
        %v985 = vmul.f32 %v822, %v879
        %v986 = vmul.f32 %v822, %v883
        %v987 = vmul.f32 %v822, %v887
        %v988 = vmul.f32 %v826, %v875
        %v989 = vmul.f32 %v826, %v879
        %v990 = vmul.f32 %v826, %v883
        %v991 = vmul.f32 %v826, %v887
        %v992 = vmul.f32 %v830, %v875
        %v993 = vmul.f32 %v830, %v879
        %v994 = vmul.f32 %v830, %v883
        %v995 = vmul.f32 %v830, %v887
        %v996 = vmul.f32 %v834, %v875
        %v997 = vmul.f32 %v834, %v879
        %v998 = vmul.f32 %v834, %v883
        %v999 = vmul.f32 %v834, %v887
        %v1000 = vmul.f32 %v838, %v875
        %v1001 = vmul.f32 %v838, %v879
        %v1002 = vmul.f32 %v838, %v883
        %v1003 = vmul.f32 %v838, %v887
        %v1004 = vmul.f32 %v842, %v875
        %v1005 = vmul.f32 %v842, %v879
        %v1006 = vmul.f32 %v842, %v883
        %v1007 = vmul.f32 %v842, %v887
        %v1008 = vmul.f32 %v846, %v875
        %v1009 = vmul.f32 %v846, %v879
        %v1010 = vmul.f32 %v846, %v883
        %v1011 = vmul.f32 %v846, %v887
        %v1012 = vmul.f32 %v850, %v875
        %v1013 = vmul.f32 %v850, %v879
        %v1014 = vmul.f32 %v850, %v883
        %v1015 = vmul.f32 %v850, %v887
        %v1016 = vadd.f32 %v596, %v888
        %v1017 = vadd.f32 %v597, %v889
        %v1018 = vadd.f32 %v598, %v890
        %v1019 = vadd.f32 %v599, %v891
        %v1020 = vadd.f32 %v600, %v892
        %v1021 = vadd.f32 %v601, %v893
        %v1022 = vadd.f32 %v602, %v894
        %v1023 = vadd.f32 %v603, %v895
        %v1024 = vadd.f32 %v604, %v896
        %v1025 = vadd.f32 %v605, %v897
        %v1026 = vadd.f32 %v606, %v898
        %v1027 = vadd.f32 %v607, %v899
        %v1028 = vadd.f32 %v608, %v900
        %v1029 = vadd.f32 %v609, %v901
        %v1030 = vadd.f32 %v610, %v902
        %v1031 = vadd.f32 %v611, %v903
        %v1032 = vadd.f32 %v612, %v904
        %v1033 = vadd.f32 %v613, %v905
        %v1034 = vadd.f32 %v614, %v906
        %v1035 = vadd.f32 %v615, %v907
        %v1036 = vadd.f32 %v616, %v908
        %v1037 = vadd.f32 %v617, %v909
        %v1038 = vadd.f32 %v618, %v910
        %v1039 = vadd.f32 %v619, %v911
        %v1040 = vadd.f32 %v620, %v912
        %v1041 = vadd.f32 %v621, %v913
        %v1042 = vadd.f32 %v622, %v914
        %v1043 = vadd.f32 %v623, %v915
        %v1044 = vadd.f32 %v624, %v916
        %v1045 = vadd.f32 %v625, %v917
        %v1046 = vadd.f32 %v626, %v918
        %v1047 = vadd.f32 %v627, %v919
        %v1048 = vadd.f32 %v628, %v920
        %v1049 = vadd.f32 %v629, %v921
        %v1050 = vadd.f32 %v630, %v922
        %v1051 = vadd.f32 %v631, %v923
        %v1052 = vadd.f32 %v632, %v924
        %v1053 = vadd.f32 %v633, %v925
        %v1054 = vadd.f32 %v634, %v926
        %v1055 = vadd.f32 %v635, %v927
        %v1056 = vadd.f32 %v636, %v928
        %v1057 = vadd.f32 %v637, %v929
        %v1058 = vadd.f32 %v638, %v930
        %v1059 = vadd.f32 %v639, %v931
        %v1060 = vadd.f32 %v640, %v932
        %v1061 = vadd.f32 %v641, %v933
        %v1062 = vadd.f32 %v642, %v934
        %v1063 = vadd.f32 %v643, %v935
        %v1064 = vadd.f32 %v644, %v936
        %v1065 = vadd.f32 %v645, %v937
        %v1066 = vadd.f32 %v646, %v938
        %v1067 = vadd.f32 %v647, %v939
        %v1068 = vadd.f32 %v648, %v940
        %v1069 = vadd.f32 %v649, %v941
        %v1070 = vadd.f32 %v650, %v942
        %v1071 = vadd.f32 %v651, %v943
        %v1072 = vadd.f32 %v652, %v944
        %v1073 = vadd.f32 %v653, %v945
        %v1074 = vadd.f32 %v654, %v946
        %v1075 = vadd.f32 %v655, %v947
        %v1076 = vadd.f32 %v656, %v948
        %v1077 = vadd.f32 %v657, %v949
        %v1078 = vadd.f32 %v658, %v950
        %v1079 = vadd.f32 %v659, %v951
        %v1080 = vadd.f32 %v660, %v952
        %v1081 = vadd.f32 %v661, %v953
        %v1082 = vadd.f32 %v662, %v954
        %v1083 = vadd.f32 %v663, %v955
        %v1084 = vadd.f32 %v664, %v956
        %v1085 = vadd.f32 %v665, %v957
        %v1086 = vadd.f32 %v666, %v958
        %v1087 = vadd.f32 %v667, %v959
        %v1088 = vadd.f32 %v668, %v960
        %v1089 = vadd.f32 %v669, %v961
        %v1090 = vadd.f32 %v670, %v962
        %v1091 = vadd.f32 %v671, %v963
        %v1092 = vadd.f32 %v672, %v964
        %v1093 = vadd.f32 %v673, %v965
        %v1094 = vadd.f32 %v674, %v966
        %v1095 = vadd.f32 %v675, %v967
        %v1096 = vadd.f32 %v676, %v968
        %v1097 = vadd.f32 %v677, %v969
        %v1098 = vadd.f32 %v678, %v970
        %v1099 = vadd.f32 %v679, %v971
        %v1100 = vadd.f32 %v680, %v972
        %v1101 = vadd.f32 %v681, %v973
        %v1102 = vadd.f32 %v682, %v974
        %v1103 = vadd.f32 %v683, %v975
        %v1104 = vadd.f32 %v684, %v976
        %v1105 = vadd.f32 %v685, %v977
        %v1106 = vadd.f32 %v686, %v978
        %v1107 = vadd.f32 %v687, %v979
        %v1108 = vadd.f32 %v688, %v980
        %v1109 = vadd.f32 %v689, %v981
        %v1110 = vadd.f32 %v690, %v982
        %v1111 = vadd.f32 %v691, %v983
        %v1112 = vadd.f32 %v692, %v984
        %v1113 = vadd.f32 %v693, %v985
        %v1114 = vadd.f32 %v694, %v986
        %v1115 = vadd.f32 %v695, %v987
        %v1116 = vadd.f32 %v696, %v988
        %v1117 = vadd.f32 %v697, %v989
        %v1118 = vadd.f32 %v698, %v990
        %v1119 = vadd.f32 %v699, %v991
        %v1120 = vadd.f32 %v700, %v992
        %v1121 = vadd.f32 %v701, %v993
        %v1122 = vadd.f32 %v702, %v994
        %v1123 = vadd.f32 %v703, %v995
        %v1124 = vadd.f32 %v704, %v996
        %v1125 = vadd.f32 %v705, %v997
        %v1126 = vadd.f32 %v706, %v998
        %v1127 = vadd.f32 %v707, %v999
        %v1128 = vadd.f32 %v708, %v1000
        %v1129 = vadd.f32 %v709, %v1001
        %v1130 = vadd.f32 %v710, %v1002
        %v1131 = vadd.f32 %v711, %v1003
        %v1132 = vadd.f32 %v712, %v1004
        %v1133 = vadd.f32 %v713, %v1005
        %v1134 = vadd.f32 %v714, %v1006
        %v1135 = vadd.f32 %v715, %v1007
        %v1136 = vadd.f32 %v716, %v1008
        %v1137 = vadd.f32 %v717, %v1009
        %v1138 = vadd.f32 %v718, %v1010
        %v1139 = vadd.f32 %v719, %v1011
        %v1140 = vadd.f32 %v720, %v1012
        %v1141 = vadd.f32 %v721, %v1013
        %v1142 = vadd.f32 %v722, %v1014
        %v1143 = vadd.f32 %v723, %v1015
        %v1144 = vld [vmem:[%s2] sm:$0xf]
        %v1146 = vlaneseq
        %v1147 = vshrl.u32 %v1146, 7
        %v1148 = vsub.s32 0, %v1147
        %v1149 = vrot.slane %v1144, %v1148
        %v1150 = vlaneseq
        %v1151 = vshrl.u32 %v1150, 7
        %v1152 = vsub.s32 1, %v1151
        %v1153 = vrot.slane %v1144, %v1152
        %v1154 = vlaneseq
        %v1155 = vshrl.u32 %v1154, 7
        %v1156 = vsub.s32 2, %v1155
        %v1157 = vrot.slane %v1144, %v1156
        %v1158 = vlaneseq
        %v1159 = vshrl.u32 %v1158, 7
        %v1160 = vsub.s32 3, %v1159
        %v1161 = vrot.slane %v1144, %v1160
        %v1166 = vadd.f32 %v1016, %v1149
        %v1167 = vadd.f32 %v1017, %v1153
        %v1168 = vadd.f32 %v1018, %v1157
        %v1169 = vadd.f32 %v1019, %v1161
        %v1170 = vadd.f32 %v1020, %v1149
        %v1171 = vadd.f32 %v1021, %v1153
        %v1172 = vadd.f32 %v1022, %v1157
        %v1173 = vadd.f32 %v1023, %v1161
        %v1174 = vadd.f32 %v1024, %v1149
        %v1175 = vadd.f32 %v1025, %v1153
        %v1176 = vadd.f32 %v1026, %v1157
        %v1177 = vadd.f32 %v1027, %v1161
        %v1178 = vadd.f32 %v1028, %v1149
        %v1179 = vadd.f32 %v1029, %v1153
        %v1180 = vadd.f32 %v1030, %v1157
        %v1181 = vadd.f32 %v1031, %v1161
        %v1182 = vadd.f32 %v1032, %v1149
        %v1183 = vadd.f32 %v1033, %v1153
        %v1184 = vadd.f32 %v1034, %v1157
        %v1185 = vadd.f32 %v1035, %v1161
        %v1186 = vadd.f32 %v1036, %v1149
        %v1187 = vadd.f32 %v1037, %v1153
        %v1188 = vadd.f32 %v1038, %v1157
        %v1189 = vadd.f32 %v1039, %v1161
        %v1190 = vadd.f32 %v1040, %v1149
        %v1191 = vadd.f32 %v1041, %v1153
        %v1192 = vadd.f32 %v1042, %v1157
        %v1193 = vadd.f32 %v1043, %v1161
        %v1194 = vadd.f32 %v1044, %v1149
        %v1195 = vadd.f32 %v1045, %v1153
        %v1196 = vadd.f32 %v1046, %v1157
        %v1197 = vadd.f32 %v1047, %v1161
        %v1198 = vadd.f32 %v1048, %v1149
        %v1199 = vadd.f32 %v1049, %v1153
        %v1200 = vadd.f32 %v1050, %v1157
        %v1201 = vadd.f32 %v1051, %v1161
        %v1202 = vadd.f32 %v1052, %v1149
        %v1203 = vadd.f32 %v1053, %v1153
        %v1204 = vadd.f32 %v1054, %v1157
        %v1205 = vadd.f32 %v1055, %v1161
        %v1206 = vadd.f32 %v1056, %v1149
        %v1207 = vadd.f32 %v1057, %v1153
        %v1208 = vadd.f32 %v1058, %v1157
        %v1209 = vadd.f32 %v1059, %v1161
        %v1210 = vadd.f32 %v1060, %v1149
        %v1211 = vadd.f32 %v1061, %v1153
        %v1212 = vadd.f32 %v1062, %v1157
        %v1213 = vadd.f32 %v1063, %v1161
        %v1214 = vadd.f32 %v1064, %v1149
        %v1215 = vadd.f32 %v1065, %v1153
        %v1216 = vadd.f32 %v1066, %v1157
        %v1217 = vadd.f32 %v1067, %v1161
        %v1218 = vadd.f32 %v1068, %v1149
        %v1219 = vadd.f32 %v1069, %v1153
        %v1220 = vadd.f32 %v1070, %v1157
        %v1221 = vadd.f32 %v1071, %v1161
        %v1222 = vadd.f32 %v1072, %v1149
        %v1223 = vadd.f32 %v1073, %v1153
        %v1224 = vadd.f32 %v1074, %v1157
        %v1225 = vadd.f32 %v1075, %v1161
        %v1226 = vadd.f32 %v1076, %v1149
        %v1227 = vadd.f32 %v1077, %v1153
        %v1228 = vadd.f32 %v1078, %v1157
        %v1229 = vadd.f32 %v1079, %v1161
        %v1230 = vadd.f32 %v1080, %v1149
        %v1231 = vadd.f32 %v1081, %v1153
        %v1232 = vadd.f32 %v1082, %v1157
        %v1233 = vadd.f32 %v1083, %v1161
        %v1234 = vadd.f32 %v1084, %v1149
        %v1235 = vadd.f32 %v1085, %v1153
        %v1236 = vadd.f32 %v1086, %v1157
        %v1237 = vadd.f32 %v1087, %v1161
        %v1238 = vadd.f32 %v1088, %v1149
        %v1239 = vadd.f32 %v1089, %v1153
        %v1240 = vadd.f32 %v1090, %v1157
        %v1241 = vadd.f32 %v1091, %v1161
        %v1242 = vadd.f32 %v1092, %v1149
        %v1243 = vadd.f32 %v1093, %v1153
        %v1244 = vadd.f32 %v1094, %v1157
        %v1245 = vadd.f32 %v1095, %v1161
        %v1246 = vadd.f32 %v1096, %v1149
        %v1247 = vadd.f32 %v1097, %v1153
        %v1248 = vadd.f32 %v1098, %v1157
        %v1249 = vadd.f32 %v1099, %v1161
        %v1250 = vadd.f32 %v1100, %v1149
        %v1251 = vadd.f32 %v1101, %v1153
        %v1252 = vadd.f32 %v1102, %v1157
        %v1253 = vadd.f32 %v1103, %v1161
        %v1254 = vadd.f32 %v1104, %v1149
        %v1255 = vadd.f32 %v1105, %v1153
        %v1256 = vadd.f32 %v1106, %v1157
        %v1257 = vadd.f32 %v1107, %v1161
        %v1258 = vadd.f32 %v1108, %v1149
        %v1259 = vadd.f32 %v1109, %v1153
        %v1260 = vadd.f32 %v1110, %v1157
        %v1261 = vadd.f32 %v1111, %v1161
        %v1262 = vadd.f32 %v1112, %v1149
        %v1263 = vadd.f32 %v1113, %v1153
        %v1264 = vadd.f32 %v1114, %v1157
        %v1265 = vadd.f32 %v1115, %v1161
        %v1266 = vadd.f32 %v1116, %v1149
        %v1267 = vadd.f32 %v1117, %v1153
        %v1268 = vadd.f32 %v1118, %v1157
        %v1269 = vadd.f32 %v1119, %v1161
        %v1270 = vadd.f32 %v1120, %v1149
        %v1271 = vadd.f32 %v1121, %v1153
        %v1272 = vadd.f32 %v1122, %v1157
        %v1273 = vadd.f32 %v1123, %v1161
        %v1274 = vadd.f32 %v1124, %v1149
        %v1275 = vadd.f32 %v1125, %v1153
        %v1276 = vadd.f32 %v1126, %v1157
        %v1277 = vadd.f32 %v1127, %v1161
        %v1278 = vadd.f32 %v1128, %v1149
        %v1279 = vadd.f32 %v1129, %v1153
        %v1280 = vadd.f32 %v1130, %v1157
        %v1281 = vadd.f32 %v1131, %v1161
        %v1282 = vadd.f32 %v1132, %v1149
        %v1283 = vadd.f32 %v1133, %v1153
        %v1284 = vadd.f32 %v1134, %v1157
        %v1285 = vadd.f32 %v1135, %v1161
        %v1286 = vadd.f32 %v1136, %v1149
        %v1287 = vadd.f32 %v1137, %v1153
        %v1288 = vadd.f32 %v1138, %v1157
        %v1289 = vadd.f32 %v1139, %v1161
        %v1290 = vadd.f32 %v1140, %v1149
        %v1291 = vadd.f32 %v1141, %v1153
        %v1292 = vadd.f32 %v1142, %v1157
        %v1293 = vadd.f32 %v1143, %v1161
        %v1294 = vmax.f32 %v1166, 0.0
        %v1295 = vmax.f32 %v1167, 0.0
        %v1296 = vmax.f32 %v1168, 0.0
        %v1297 = vmax.f32 %v1169, 0.0
        %v1298 = vmax.f32 %v1170, 0.0
        %v1299 = vmax.f32 %v1171, 0.0
        %v1300 = vmax.f32 %v1172, 0.0
        %v1301 = vmax.f32 %v1173, 0.0
        %v1302 = vmax.f32 %v1174, 0.0
        %v1303 = vmax.f32 %v1175, 0.0
        %v1304 = vmax.f32 %v1176, 0.0
        %v1305 = vmax.f32 %v1177, 0.0
        %v1306 = vmax.f32 %v1178, 0.0
        %v1307 = vmax.f32 %v1179, 0.0
        %v1308 = vmax.f32 %v1180, 0.0
        %v1309 = vmax.f32 %v1181, 0.0
        %v1310 = vmax.f32 %v1182, 0.0
        %v1311 = vmax.f32 %v1183, 0.0
        %v1312 = vmax.f32 %v1184, 0.0
        %v1313 = vmax.f32 %v1185, 0.0
        %v1314 = vmax.f32 %v1186, 0.0
        %v1315 = vmax.f32 %v1187, 0.0
        %v1316 = vmax.f32 %v1188, 0.0
        %v1317 = vmax.f32 %v1189, 0.0
        %v1318 = vmax.f32 %v1190, 0.0
        %v1319 = vmax.f32 %v1191, 0.0
        %v1320 = vmax.f32 %v1192, 0.0
        %v1321 = vmax.f32 %v1193, 0.0
        %v1322 = vmax.f32 %v1194, 0.0
        %v1323 = vmax.f32 %v1195, 0.0
        %v1324 = vmax.f32 %v1196, 0.0
        %v1325 = vmax.f32 %v1197, 0.0
        %v1326 = vmax.f32 %v1198, 0.0
        %v1327 = vmax.f32 %v1199, 0.0
        %v1328 = vmax.f32 %v1200, 0.0
        %v1329 = vmax.f32 %v1201, 0.0
        %v1330 = vmax.f32 %v1202, 0.0
        %v1331 = vmax.f32 %v1203, 0.0
        %v1332 = vmax.f32 %v1204, 0.0
        %v1333 = vmax.f32 %v1205, 0.0
        %v1334 = vmax.f32 %v1206, 0.0
        %v1335 = vmax.f32 %v1207, 0.0
        %v1336 = vmax.f32 %v1208, 0.0
        %v1337 = vmax.f32 %v1209, 0.0
        %v1338 = vmax.f32 %v1210, 0.0
        %v1339 = vmax.f32 %v1211, 0.0
        %v1340 = vmax.f32 %v1212, 0.0
        %v1341 = vmax.f32 %v1213, 0.0
        %v1342 = vmax.f32 %v1214, 0.0
        %v1343 = vmax.f32 %v1215, 0.0
        %v1344 = vmax.f32 %v1216, 0.0
        %v1345 = vmax.f32 %v1217, 0.0
        %v1346 = vmax.f32 %v1218, 0.0
        %v1347 = vmax.f32 %v1219, 0.0
        %v1348 = vmax.f32 %v1220, 0.0
        %v1349 = vmax.f32 %v1221, 0.0
        %v1350 = vmax.f32 %v1222, 0.0
        %v1351 = vmax.f32 %v1223, 0.0
        %v1352 = vmax.f32 %v1224, 0.0
        %v1353 = vmax.f32 %v1225, 0.0
        %v1354 = vmax.f32 %v1226, 0.0
        %v1355 = vmax.f32 %v1227, 0.0
        %v1356 = vmax.f32 %v1228, 0.0
        %v1357 = vmax.f32 %v1229, 0.0
        %v1358 = vmax.f32 %v1230, 0.0
        %v1359 = vmax.f32 %v1231, 0.0
        %v1360 = vmax.f32 %v1232, 0.0
        %v1361 = vmax.f32 %v1233, 0.0
        %v1362 = vmax.f32 %v1234, 0.0
        %v1363 = vmax.f32 %v1235, 0.0
        %v1364 = vmax.f32 %v1236, 0.0
        %v1365 = vmax.f32 %v1237, 0.0
        %v1366 = vmax.f32 %v1238, 0.0
        %v1367 = vmax.f32 %v1239, 0.0
        %v1368 = vmax.f32 %v1240, 0.0
        %v1369 = vmax.f32 %v1241, 0.0
        %v1370 = vmax.f32 %v1242, 0.0
        %v1371 = vmax.f32 %v1243, 0.0
        %v1372 = vmax.f32 %v1244, 0.0
        %v1373 = vmax.f32 %v1245, 0.0
        %v1374 = vmax.f32 %v1246, 0.0
        %v1375 = vmax.f32 %v1247, 0.0
        %v1376 = vmax.f32 %v1248, 0.0
        %v1377 = vmax.f32 %v1249, 0.0
        %v1378 = vmax.f32 %v1250, 0.0
        %v1379 = vmax.f32 %v1251, 0.0
        %v1380 = vmax.f32 %v1252, 0.0
        %v1381 = vmax.f32 %v1253, 0.0
        %v1382 = vmax.f32 %v1254, 0.0
        %v1383 = vmax.f32 %v1255, 0.0
        %v1384 = vmax.f32 %v1256, 0.0
        %v1385 = vmax.f32 %v1257, 0.0
        %v1386 = vmax.f32 %v1258, 0.0
        %v1387 = vmax.f32 %v1259, 0.0
        %v1388 = vmax.f32 %v1260, 0.0
        %v1389 = vmax.f32 %v1261, 0.0
        %v1390 = vmax.f32 %v1262, 0.0
        %v1391 = vmax.f32 %v1263, 0.0
        %v1392 = vmax.f32 %v1264, 0.0
        %v1393 = vmax.f32 %v1265, 0.0
        %v1394 = vmax.f32 %v1266, 0.0
        %v1395 = vmax.f32 %v1267, 0.0
        %v1396 = vmax.f32 %v1268, 0.0
        %v1397 = vmax.f32 %v1269, 0.0
        %v1398 = vmax.f32 %v1270, 0.0
        %v1399 = vmax.f32 %v1271, 0.0
        %v1400 = vmax.f32 %v1272, 0.0
        %v1401 = vmax.f32 %v1273, 0.0
        %v1402 = vmax.f32 %v1274, 0.0
        %v1403 = vmax.f32 %v1275, 0.0
        %v1404 = vmax.f32 %v1276, 0.0
        %v1405 = vmax.f32 %v1277, 0.0
        %v1406 = vmax.f32 %v1278, 0.0
        %v1407 = vmax.f32 %v1279, 0.0
        %v1408 = vmax.f32 %v1280, 0.0
        %v1409 = vmax.f32 %v1281, 0.0
        %v1410 = vmax.f32 %v1282, 0.0
        %v1411 = vmax.f32 %v1283, 0.0
        %v1412 = vmax.f32 %v1284, 0.0
        %v1413 = vmax.f32 %v1285, 0.0
        %v1414 = vmax.f32 %v1286, 0.0
        %v1415 = vmax.f32 %v1287, 0.0
        %v1416 = vmax.f32 %v1288, 0.0
        %v1417 = vmax.f32 %v1289, 0.0
        %v1418 = vmax.f32 %v1290, 0.0
        %v1419 = vmax.f32 %v1291, 0.0
        %v1420 = vmax.f32 %v1292, 0.0
        %v1421 = vmax.f32 %v1293, 0.0
        %v1422 = vld [vmem:[#allocation2] sm:$0xff]
        %v1423 = vld [vmem:[#allocation2 + $0x8] sm:$0xff]
        %v1424 = vld [vmem:[#allocation2 + $0x10] sm:$0xff]
        %v1425 = vld [vmem:[#allocation2 + $0x18] sm:$0xff]
        %v1426 = vld [vmem:[#allocation2 + $0x20] sm:$0xff]
        %v1427 = vld [vmem:[#allocation2 + $0x28] sm:$0xff]
        %v1428 = vld [vmem:[#allocation2 + $0x30] sm:$0xff]
        %v1429 = vld [vmem:[#allocation2 + $0x38] sm:$0xff]
        %v1430 = vld [vmem:[#allocation2 + $0x40] sm:$0xff]
        %v1431 = vld [vmem:[#allocation2 + $0x48] sm:$0xff]
        %v1432 = vld [vmem:[#allocation2 + $0x50] sm:$0xff]
        %v1433 = vld [vmem:[#allocation2 + $0x58] sm:$0xff]
        %v1434 = vld [vmem:[#allocation2 + $0x60] sm:$0xff]
        %v1435 = vld [vmem:[#allocation2 + $0x68] sm:$0xff]
        %v1436 = vld [vmem:[#allocation2 + $0x70] sm:$0xff]
        %v1437 = vld [vmem:[#allocation2 + $0x78] sm:$0xff]
        %v1438 = vld [vmem:[#allocation2 + $0x80] sm:$0xff]
        %v1439 = vld [vmem:[#allocation2 + $0x88] sm:$0xff]
        %v1440 = vld [vmem:[#allocation2 + $0x90] sm:$0xff]
        %v1441 = vld [vmem:[#allocation2 + $0x98] sm:$0xff]
        %v1442 = vld [vmem:[#allocation2 + $0xa0] sm:$0xff]
        %v1443 = vld [vmem:[#allocation2 + $0xa8] sm:$0xff]
        %v1444 = vld [vmem:[#allocation2 + $0xb0] sm:$0xff]
        %v1445 = vld [vmem:[#allocation2 + $0xb8] sm:$0xff]
        %v1446 = vld [vmem:[#allocation2 + $0xc0] sm:$0xff]
        %v1447 = vld [vmem:[#allocation2 + $0xc8] sm:$0xff]
        %v1448 = vld [vmem:[#allocation2 + $0xd0] sm:$0xff]
        %v1449 = vld [vmem:[#allocation2 + $0xd8] sm:$0xff]
        %v1450 = vld [vmem:[#allocation2 + $0xe0] sm:$0xff]
        %v1451 = vld [vmem:[#allocation2 + $0xe8] sm:$0xff]
        %v1452 = vld [vmem:[#allocation2 + $0xf0] sm:$0xff]
        %v1453 = vld [vmem:[#allocation2 + $0xf8] sm:$0xff]
        %v1454 = vld [vmem:[#allocation2 + $0x100] sm:$0xff]
        %v1455 = vld [vmem:[#allocation2 + $0x108] sm:$0xff]
        %v1456 = vld [vmem:[#allocation2 + $0x110] sm:$0xff]
        %v1457 = vld [vmem:[#allocation2 + $0x118] sm:$0xff]
        %v1458 = vld [vmem:[#allocation2 + $0x120] sm:$0xff]
        %v1459 = vld [vmem:[#allocation2 + $0x128] sm:$0xff]
        %v1460 = vld [vmem:[#allocation2 + $0x130] sm:$0xff]
        %v1461 = vld [vmem:[#allocation2 + $0x138] sm:$0xff]
        %v1462 = vld [vmem:[#allocation2 + $0x140] sm:$0xff]
        %v1463 = vld [vmem:[#allocation2 + $0x148] sm:$0xff]
        %v1464 = vld [vmem:[#allocation2 + $0x150] sm:$0xff]
        %v1465 = vld [vmem:[#allocation2 + $0x158] sm:$0xff]
        %v1466 = vld [vmem:[#allocation2 + $0x160] sm:$0xff]
        %v1467 = vld [vmem:[#allocation2 + $0x168] sm:$0xff]
        %v1468 = vld [vmem:[#allocation2 + $0x170] sm:$0xff]
        %v1469 = vld [vmem:[#allocation2 + $0x178] sm:$0xff]
        %v1470 = vld [vmem:[#allocation2 + $0x180] sm:$0xff]
        %v1471 = vld [vmem:[#allocation2 + $0x188] sm:$0xff]
        %v1472 = vld [vmem:[#allocation2 + $0x190] sm:$0xff]
        %v1473 = vld [vmem:[#allocation2 + $0x198] sm:$0xff]
        %v1474 = vld [vmem:[#allocation2 + $0x1a0] sm:$0xff]
        %v1475 = vld [vmem:[#allocation2 + $0x1a8] sm:$0xff]
        %v1476 = vld [vmem:[#allocation2 + $0x1b0] sm:$0xff]
        %v1477 = vld [vmem:[#allocation2 + $0x1b8] sm:$0xff]
        %v1478 = vld [vmem:[#allocation2 + $0x1c0] sm:$0xff]
        %v1479 = vld [vmem:[#allocation2 + $0x1c8] sm:$0xff]
        %v1480 = vld [vmem:[#allocation2 + $0x1d0] sm:$0xff]
        %v1481 = vld [vmem:[#allocation2 + $0x1d8] sm:$0xff]
        %v1482 = vld [vmem:[#allocation2 + $0x1e0] sm:$0xff]
        %v1483 = vld [vmem:[#allocation2 + $0x1e8] sm:$0xff]
        %v1484 = vld [vmem:[#allocation2 + $0x1f0] sm:$0xff]
        %v1485 = vld [vmem:[#allocation2 + $0x1f8] sm:$0xff]
        %v1486 = vld [vmem:[#allocation2 + $0x200] sm:$0xff]
        %v1487 = vld [vmem:[#allocation2 + $0x208] sm:$0xff]
        %v1488 = vld [vmem:[#allocation2 + $0x210] sm:$0xff]
        %v1489 = vld [vmem:[#allocation2 + $0x218] sm:$0xff]
        %v1490 = vld [vmem:[#allocation2 + $0x220] sm:$0xff]
        %v1491 = vld [vmem:[#allocation2 + $0x228] sm:$0xff]
        %v1492 = vld [vmem:[#allocation2 + $0x230] sm:$0xff]
        %v1493 = vld [vmem:[#allocation2 + $0x238] sm:$0xff]
        %v1494 = vld [vmem:[#allocation2 + $0x240] sm:$0xff]
        %v1495 = vld [vmem:[#allocation2 + $0x248] sm:$0xff]
        %v1496 = vld [vmem:[#allocation2 + $0x250] sm:$0xff]
        %v1497 = vld [vmem:[#allocation2 + $0x258] sm:$0xff]
        %v1498 = vld [vmem:[#allocation2 + $0x260] sm:$0xff]
        %v1499 = vld [vmem:[#allocation2 + $0x268] sm:$0xff]
        %v1500 = vld [vmem:[#allocation2 + $0x270] sm:$0xff]
        %v1501 = vld [vmem:[#allocation2 + $0x278] sm:$0xff]
        %v1502 = vld [vmem:[#allocation2 + $0x280] sm:$0xff]
        %v1503 = vld [vmem:[#allocation2 + $0x288] sm:$0xff]
        %v1504 = vld [vmem:[#allocation2 + $0x290] sm:$0xff]
        %v1505 = vld [vmem:[#allocation2 + $0x298] sm:$0xff]
        %v1506 = vld [vmem:[#allocation2 + $0x2a0] sm:$0xff]
        %v1507 = vld [vmem:[#allocation2 + $0x2a8] sm:$0xff]
        %v1508 = vld [vmem:[#allocation2 + $0x2b0] sm:$0xff]
        %v1509 = vld [vmem:[#allocation2 + $0x2b8] sm:$0xff]
        %v1510 = vld [vmem:[#allocation2 + $0x2c0] sm:$0xff]
        %v1511 = vld [vmem:[#allocation2 + $0x2c8] sm:$0xff]
        %v1512 = vld [vmem:[#allocation2 + $0x2d0] sm:$0xff]
        %v1513 = vld [vmem:[#allocation2 + $0x2d8] sm:$0xff]
        %v1514 = vld [vmem:[#allocation2 + $0x2e0] sm:$0xff]
        %v1515 = vld [vmem:[#allocation2 + $0x2e8] sm:$0xff]
        %v1516 = vld [vmem:[#allocation2 + $0x2f0] sm:$0xff]
        %v1517 = vld [vmem:[#allocation2 + $0x2f8] sm:$0xff]
        %v1518 = vld [vmem:[#allocation2 + $0x300] sm:$0xff]
        %v1519 = vld [vmem:[#allocation2 + $0x308] sm:$0xff]
        %v1520 = vld [vmem:[#allocation2 + $0x310] sm:$0xff]
        %v1521 = vld [vmem:[#allocation2 + $0x318] sm:$0xff]
        %v1522 = vld [vmem:[#allocation2 + $0x320] sm:$0xff]
        %v1523 = vld [vmem:[#allocation2 + $0x328] sm:$0xff]
        %v1524 = vld [vmem:[#allocation2 + $0x330] sm:$0xff]
        %v1525 = vld [vmem:[#allocation2 + $0x338] sm:$0xff]
        %v1526 = vld [vmem:[#allocation2 + $0x340] sm:$0xff]
        %v1527 = vld [vmem:[#allocation2 + $0x348] sm:$0xff]
        %v1528 = vld [vmem:[#allocation2 + $0x350] sm:$0xff]
        %v1529 = vld [vmem:[#allocation2 + $0x358] sm:$0xff]
        %v1530 = vld [vmem:[#allocation2 + $0x360] sm:$0xff]
        %v1531 = vld [vmem:[#allocation2 + $0x368] sm:$0xff]
        %v1532 = vld [vmem:[#allocation2 + $0x370] sm:$0xff]
        %v1533 = vld [vmem:[#allocation2 + $0x378] sm:$0xff]
        %v1534 = vld [vmem:[#allocation2 + $0x380] sm:$0xff]
        %v1535 = vld [vmem:[#allocation2 + $0x388] sm:$0xff]
        %v1536 = vld [vmem:[#allocation2 + $0x390] sm:$0xff]
        %v1537 = vld [vmem:[#allocation2 + $0x398] sm:$0xff]
        %v1538 = vld [vmem:[#allocation2 + $0x3a0] sm:$0xff]
        %v1539 = vld [vmem:[#allocation2 + $0x3a8] sm:$0xff]
        %v1540 = vld [vmem:[#allocation2 + $0x3b0] sm:$0xff]
        %v1541 = vld [vmem:[#allocation2 + $0x3b8] sm:$0xff]
        %v1542 = vld [vmem:[#allocation2 + $0x3c0] sm:$0xff]
        %v1543 = vld [vmem:[#allocation2 + $0x3c8] sm:$0xff]
        %v1544 = vld [vmem:[#allocation2 + $0x3d0] sm:$0xff]
        %v1545 = vld [vmem:[#allocation2 + $0x3d8] sm:$0xff]
        %v1546 = vld [vmem:[#allocation2 + $0x3e0] sm:$0xff]
        %v1547 = vld [vmem:[#allocation2 + $0x3e8] sm:$0xff]
        %v1548 = vld [vmem:[#allocation2 + $0x3f0] sm:$0xff]
        %v1549 = vld [vmem:[#allocation2 + $0x3f8] sm:$0xff]
        %v1550 = vld [vmem:[#allocation2 + $0x400] sm:$0xff]
        %v1551 = vld [vmem:[#allocation2 + $0x408] sm:$0xff]
        %v1552 = vld [vmem:[#allocation2 + $0x410] sm:$0xff]
        %v1553 = vld [vmem:[#allocation2 + $0x418] sm:$0xff]
        %v1554 = vld [vmem:[#allocation2 + $0x420] sm:$0xff]
        %v1555 = vld [vmem:[#allocation2 + $0x428] sm:$0xff]
        %v1556 = vld [vmem:[#allocation2 + $0x430] sm:$0xff]
        %v1557 = vld [vmem:[#allocation2 + $0x438] sm:$0xff]
        %v1558 = vld [vmem:[#allocation2 + $0x440] sm:$0xff]
        %v1559 = vld [vmem:[#allocation2 + $0x448] sm:$0xff]
        %v1560 = vld [vmem:[#allocation2 + $0x450] sm:$0xff]
        %v1561 = vld [vmem:[#allocation2 + $0x458] sm:$0xff]
        %v1562 = vld [vmem:[#allocation2 + $0x460] sm:$0xff]
        %v1563 = vld [vmem:[#allocation2 + $0x468] sm:$0xff]
        %v1564 = vld [vmem:[#allocation2 + $0x470] sm:$0xff]
        %v1565 = vld [vmem:[#allocation2 + $0x478] sm:$0xff]
        %v1566 = vld [vmem:[#allocation2 + $0x480] sm:$0xff]
        %v1567 = vld [vmem:[#allocation2 + $0x488] sm:$0xff]
        %v1568 = vld [vmem:[#allocation2 + $0x490] sm:$0xff]
        %v1569 = vld [vmem:[#allocation2 + $0x498] sm:$0xff]
        %v1570 = vld [vmem:[#allocation2 + $0x4a0] sm:$0xff]
        %v1571 = vld [vmem:[#allocation2 + $0x4a8] sm:$0xff]
        %v1572 = vld [vmem:[#allocation2 + $0x4b0] sm:$0xff]
        %v1573 = vld [vmem:[#allocation2 + $0x4b8] sm:$0xff]
        %v1574 = vld [vmem:[#allocation2 + $0x4c0] sm:$0xff]
        %v1575 = vld [vmem:[#allocation2 + $0x4c8] sm:$0xff]
        %v1576 = vld [vmem:[#allocation2 + $0x4d0] sm:$0xff]
        %v1577 = vld [vmem:[#allocation2 + $0x4d8] sm:$0xff]
        %v1578 = vld [vmem:[#allocation2 + $0x4e0] sm:$0xff]
        %v1579 = vld [vmem:[#allocation2 + $0x4e8] sm:$0xff]
        %v1580 = vld [vmem:[#allocation2 + $0x4f0] sm:$0xff]
        %v1581 = vld [vmem:[#allocation2 + $0x4f8] sm:$0xff]
        %v1582 = vld [vmem:[#allocation2 + $0x500] sm:$0xff]
        %v1583 = vld [vmem:[#allocation2 + $0x508] sm:$0xff]
        %v1584 = vld [vmem:[#allocation2 + $0x510] sm:$0xff]
        %v1585 = vld [vmem:[#allocation2 + $0x518] sm:$0xff]
        %v1586 = vld [vmem:[#allocation2 + $0x520] sm:$0xff]
        %v1587 = vld [vmem:[#allocation2 + $0x528] sm:$0xff]
        %v1588 = vld [vmem:[#allocation2 + $0x530] sm:$0xff]
        %v1589 = vld [vmem:[#allocation2 + $0x538] sm:$0xff]
        %v1590 = vld [vmem:[#allocation2 + $0x540] sm:$0xff]
        %v1591 = vld [vmem:[#allocation2 + $0x548] sm:$0xff]
        %v1592 = vld [vmem:[#allocation2 + $0x550] sm:$0xff]
        %v1593 = vld [vmem:[#allocation2 + $0x558] sm:$0xff]
        %v1594 = vld [vmem:[#allocation2 + $0x560] sm:$0xff]
        %v1595 = vld [vmem:[#allocation2 + $0x568] sm:$0xff]
        %v1596 = vld [vmem:[#allocation2 + $0x570] sm:$0xff]
        %v1597 = vld [vmem:[#allocation2 + $0x578] sm:$0xff]
        %v1598 = vld [vmem:[#allocation2 + $0x580] sm:$0xff]
        %v1599 = vld [vmem:[#allocation2 + $0x588] sm:$0xff]
        %v1600 = vld [vmem:[#allocation2 + $0x590] sm:$0xff]
        %v1601 = vld [vmem:[#allocation2 + $0x598] sm:$0xff]
        %v1602 = vld [vmem:[#allocation2 + $0x5a0] sm:$0xff]
        %v1603 = vld [vmem:[#allocation2 + $0x5a8] sm:$0xff]
        %v1604 = vld [vmem:[#allocation2 + $0x5b0] sm:$0xff]
        %v1605 = vld [vmem:[#allocation2 + $0x5b8] sm:$0xff]
        %v1606 = vld [vmem:[#allocation2 + $0x5c0] sm:$0xff]
        %v1607 = vld [vmem:[#allocation2 + $0x5c8] sm:$0xff]
        %v1608 = vld [vmem:[#allocation2 + $0x5d0] sm:$0xff]
        %v1609 = vld [vmem:[#allocation2 + $0x5d8] sm:$0xff]
        %v1610 = vld [vmem:[#allocation2 + $0x5e0] sm:$0xff]
        %v1611 = vld [vmem:[#allocation2 + $0x5e8] sm:$0xff]
        %v1612 = vld [vmem:[#allocation2 + $0x5f0] sm:$0xff]
        %v1613 = vld [vmem:[#allocation2 + $0x5f8] sm:$0xff]
        %v1614 = vld [vmem:[#allocation2 + $0x600] sm:$0xff]
        %v1615 = vld [vmem:[#allocation2 + $0x608] sm:$0xff]
        %v1616 = vld [vmem:[#allocation2 + $0x610] sm:$0xff]
        %v1617 = vld [vmem:[#allocation2 + $0x618] sm:$0xff]
        %v1618 = vld [vmem:[#allocation2 + $0x620] sm:$0xff]
        %v1619 = vld [vmem:[#allocation2 + $0x628] sm:$0xff]
        %v1620 = vld [vmem:[#allocation2 + $0x630] sm:$0xff]
        %v1621 = vld [vmem:[#allocation2 + $0x638] sm:$0xff]
        %v1622 = vld [vmem:[#allocation2 + $0x640] sm:$0xff]
        %v1623 = vld [vmem:[#allocation2 + $0x648] sm:$0xff]
        %v1624 = vld [vmem:[#allocation2 + $0x650] sm:$0xff]
        %v1625 = vld [vmem:[#allocation2 + $0x658] sm:$0xff]
        %v1626 = vld [vmem:[#allocation2 + $0x660] sm:$0xff]
        %v1627 = vld [vmem:[#allocation2 + $0x668] sm:$0xff]
        %v1628 = vld [vmem:[#allocation2 + $0x670] sm:$0xff]
        %v1629 = vld [vmem:[#allocation2 + $0x678] sm:$0xff]
        %v1630 = vld [vmem:[#allocation2 + $0x680] sm:$0xff]
        %v1631 = vld [vmem:[#allocation2 + $0x688] sm:$0xff]
        %v1632 = vld [vmem:[#allocation2 + $0x690] sm:$0xff]
        %v1633 = vld [vmem:[#allocation2 + $0x698] sm:$0xff]
        %v1634 = vld [vmem:[#allocation2 + $0x6a0] sm:$0xff]
        %v1635 = vld [vmem:[#allocation2 + $0x6a8] sm:$0xff]
        %v1636 = vld [vmem:[#allocation2 + $0x6b0] sm:$0xff]
        %v1637 = vld [vmem:[#allocation2 + $0x6b8] sm:$0xff]
        %v1638 = vld [vmem:[#allocation2 + $0x6c0] sm:$0xff]
        %v1639 = vld [vmem:[#allocation2 + $0x6c8] sm:$0xff]
        %v1640 = vld [vmem:[#allocation2 + $0x6d0] sm:$0xff]
        %v1641 = vld [vmem:[#allocation2 + $0x6d8] sm:$0xff]
        %v1642 = vld [vmem:[#allocation2 + $0x6e0] sm:$0xff]
        %v1643 = vld [vmem:[#allocation2 + $0x6e8] sm:$0xff]
        %v1644 = vld [vmem:[#allocation2 + $0x6f0] sm:$0xff]
        %v1645 = vld [vmem:[#allocation2 + $0x6f8] sm:$0xff]
        %v1646 = vld [vmem:[#allocation2 + $0x700] sm:$0xff]
        %v1647 = vld [vmem:[#allocation2 + $0x708] sm:$0xff]
        %v1648 = vld [vmem:[#allocation2 + $0x710] sm:$0xff]
        %v1649 = vld [vmem:[#allocation2 + $0x718] sm:$0xff]
        %v1650 = vld [vmem:[#allocation2 + $0x720] sm:$0xff]
        %v1651 = vld [vmem:[#allocation2 + $0x728] sm:$0xff]
        %v1652 = vld [vmem:[#allocation2 + $0x730] sm:$0xff]
        %v1653 = vld [vmem:[#allocation2 + $0x738] sm:$0xff]
        %v1654 = vld [vmem:[#allocation2 + $0x740] sm:$0xff]
        %v1655 = vld [vmem:[#allocation2 + $0x748] sm:$0xff]
        %v1656 = vld [vmem:[#allocation2 + $0x750] sm:$0xff]
        %v1657 = vld [vmem:[#allocation2 + $0x758] sm:$0xff]
        %v1658 = vld [vmem:[#allocation2 + $0x760] sm:$0xff]
        %v1659 = vld [vmem:[#allocation2 + $0x768] sm:$0xff]
        %v1660 = vld [vmem:[#allocation2 + $0x770] sm:$0xff]
        %v1661 = vld [vmem:[#allocation2 + $0x778] sm:$0xff]
        %v1662 = vld [vmem:[#allocation2 + $0x780] sm:$0xff]
        %v1663 = vld [vmem:[#allocation2 + $0x788] sm:$0xff]
        %v1664 = vld [vmem:[#allocation2 + $0x790] sm:$0xff]
        %v1665 = vld [vmem:[#allocation2 + $0x798] sm:$0xff]
        %v1666 = vld [vmem:[#allocation2 + $0x7a0] sm:$0xff]
        %v1667 = vld [vmem:[#allocation2 + $0x7a8] sm:$0xff]
        %v1668 = vld [vmem:[#allocation2 + $0x7b0] sm:$0xff]
        %v1669 = vld [vmem:[#allocation2 + $0x7b8] sm:$0xff]
        %v1670 = vld [vmem:[#allocation2 + $0x7c0] sm:$0xff]
        %v1671 = vld [vmem:[#allocation2 + $0x7c8] sm:$0xff]
        %v1672 = vld [vmem:[#allocation2 + $0x7d0] sm:$0xff]
        %v1673 = vld [vmem:[#allocation2 + $0x7d8] sm:$0xff]
        %v1674 = vld [vmem:[#allocation2 + $0x7e0] sm:$0xff]
        %v1675 = vld [vmem:[#allocation2 + $0x7e8] sm:$0xff]
        %v1676 = vld [vmem:[#allocation2 + $0x7f0] sm:$0xff]
        %v1677 = vld [vmem:[#allocation2 + $0x7f8] sm:$0xff]
        %v1678 = vld [vmem:[%s4] sm:$0xf]
        %v1680 = vlaneseq
        %v1681 = vshrl.u32 %v1680, 7
        %v1682 = vsub.s32 0, %v1681
        %v1683 = vrot.slane %v1678, %v1682
        %v1684 = vlaneseq
        %v1685 = vshrl.u32 %v1684, 7
        %v1686 = vsub.s32 1, %v1685
        %v1687 = vrot.slane %v1678, %v1686
        %v1688 = vlaneseq
        %v1689 = vshrl.u32 %v1688, 7
        %v1690 = vsub.s32 2, %v1689
        %v1691 = vrot.slane %v1678, %v1690
        %v1692 = vlaneseq
        %v1693 = vshrl.u32 %v1692, 7
        %v1694 = vsub.s32 3, %v1693
        %v1695 = vrot.slane %v1678, %v1694
        %1700 = vmatprep.subr.mxu0 %v1483
        %1701 = vmatpush1.msra.mxu0 %v1482
        %1702 = vmatprep.subr.mxu0 %v1479
        %1703 = vmatpush1.msra.mxu0 %v1478
        %1704 = vmatprep.subr.mxu0 %v1475
        %1705 = vmatpush1.msra.mxu0 %v1474
        %1706 = vmatprep.subr.mxu0 %v1471
        %1707 = vmatpush1.msra.mxu0 %v1470
        %1708 = vmatprep.subr.mxu0 %v1467
        %1709 = vmatpush1.msra.mxu0 %v1466
        %1710 = vmatprep.subr.mxu0 %v1463
        %1711 = vmatpush1.msra.mxu0 %v1462
        %1712 = vmatprep.subr.mxu0 %v1459
        %1713 = vmatpush1.msra.mxu0 %v1458
        %1714 = vmatprep.subr.mxu0 %v1455
        %1715 = vmatpush1.msra.mxu0 %v1454
        %1716 = vmatprep.subr.mxu0 %v1451
        %1717 = vmatpush1.msra.mxu0 %v1450
        %1718 = vmatprep.subr.mxu0 %v1447
        %1719 = vmatpush1.msra.mxu0 %v1446
        %1720 = vmatprep.subr.mxu0 %v1443
        %1721 = vmatpush1.msra.mxu0 %v1442
        %1722 = vmatprep.subr.mxu0 %v1439
        %1723 = vmatpush1.msra.mxu0 %v1438
        %1724 = vmatprep.subr.mxu0 %v1435
        %1725 = vmatpush1.msra.mxu0 %v1434
        %1726 = vmatprep.subr.mxu0 %v1431
        %1727 = vmatpush1.msra.mxu0 %v1430
        %1728 = vmatprep.subr.mxu0 %v1427
        %1729 = vmatpush1.msra.mxu0 %v1426
        %1730 = vmatprep.subr.mxu0 %v1423
        %1731 = vmatpush1.msra.mxu0 %v1422
        %1732 = vmatprep.subr.mxu0 %v1547
        %1733 = vmatpush2.msra.mxu0 %v1546
        %1734 = vmatprep.subr.mxu0 %v1543
        %1735 = vmatpush2.msra.mxu0 %v1542
        %1736 = vmatprep.subr.mxu0 %v1539
        %1737 = vmatpush2.msra.mxu0 %v1538
        %1738 = vmatprep.subr.mxu0 %v1535
        %1739 = vmatpush2.msra.mxu0 %v1534
        %1740 = vmatprep.subr.mxu0 %v1531
        %1741 = vmatpush2.msra.mxu0 %v1530
        %1742 = vmatprep.subr.mxu0 %v1527
        %1743 = vmatpush2.msra.mxu0 %v1526
        %1744 = vmatprep.subr.mxu0 %v1523
        %1745 = vmatpush2.msra.mxu0 %v1522
        %1746 = vmatprep.subr.mxu0 %v1519
        %1747 = vmatpush2.msra.mxu0 %v1518
        %1748 = vmatprep.subr.mxu0 %v1515
        %1749 = vmatpush2.msra.mxu0 %v1514
        %1750 = vmatprep.subr.mxu0 %v1511
        %1751 = vmatpush2.msra.mxu0 %v1510
        %1752 = vmatprep.subr.mxu0 %v1507
        %1753 = vmatpush2.msra.mxu0 %v1506
        %1754 = vmatprep.subr.mxu0 %v1503
        %1755 = vmatpush2.msra.mxu0 %v1502
        %1756 = vmatprep.subr.mxu0 %v1499
        %1757 = vmatpush2.msra.mxu0 %v1498
        %1758 = vmatprep.subr.mxu0 %v1495
        %1759 = vmatpush2.msra.mxu0 %v1494
        %1760 = vmatprep.subr.mxu0 %v1491
        %1761 = vmatpush2.msra.mxu0 %v1490
        %1762 = vmatprep.subr.mxu0 %v1487
        %1763 = vmatpush2.msra.mxu0 %v1486
        %1764 = vmatprep.mubr.f32.mxu0 %v1295
        %1765 = vmatmul.mubr.f32.gmra.mxu0 %v1294
        %v1766 = vpop.f32.mrf.mxu0
        %v1767 = vadd.f32 %v1683, %v1766
        %v1768 = vpop.f32.mrf.mxu0
        %v1769 = vadd.f32 %v1687, %v1768
        %1770 = vmatprep.mubr.f32.mxu0 %v1299
        %1771 = vmatmul.mubr.f32.gmra.mxu0 %v1298
        %v1772 = vpop.f32.mrf.mxu0
        %v1773 = vadd.f32 %v1683, %v1772
        %v1774 = vpop.f32.mrf.mxu0
        %v1775 = vadd.f32 %v1687, %v1774
        %1776 = vmatprep.mubr.f32.mxu0 %v1303
        %1777 = vmatmul.mubr.f32.gmra.mxu0 %v1302
        %v1778 = vpop.f32.mrf.mxu0
        %v1779 = vadd.f32 %v1683, %v1778
        %v1780 = vpop.f32.mrf.mxu0
        %v1781 = vadd.f32 %v1687, %v1780
        %1782 = vmatprep.mubr.f32.mxu0 %v1307
        %1783 = vmatmul.mubr.f32.gmra.mxu0 %v1306
        %v1784 = vpop.f32.mrf.mxu0
        %v1785 = vadd.f32 %v1683, %v1784
        %v1786 = vpop.f32.mrf.mxu0
        %v1787 = vadd.f32 %v1687, %v1786
        %1788 = vmatprep.mubr.f32.mxu0 %v1311
        %1789 = vmatmul.mubr.f32.gmra.mxu0 %v1310
        %v1790 = vpop.f32.mrf.mxu0
        %v1791 = vadd.f32 %v1683, %v1790
        %v1792 = vpop.f32.mrf.mxu0
        %v1793 = vadd.f32 %v1687, %v1792
        %1794 = vmatprep.mubr.f32.mxu0 %v1315
        %1795 = vmatmul.mubr.f32.gmra.mxu0 %v1314
        %v1796 = vpop.f32.mrf.mxu0
        %v1797 = vadd.f32 %v1683, %v1796
        %v1798 = vpop.f32.mrf.mxu0
        %v1799 = vadd.f32 %v1687, %v1798
        %1800 = vmatprep.mubr.f32.mxu0 %v1319
        %1801 = vmatmul.mubr.f32.gmra.mxu0 %v1318
        %v1802 = vpop.f32.mrf.mxu0
        %v1803 = vadd.f32 %v1683, %v1802
        %v1804 = vpop.f32.mrf.mxu0
        %v1805 = vadd.f32 %v1687, %v1804
        %1806 = vmatprep.mubr.f32.mxu0 %v1323
        %1807 = vmatmul.mubr.f32.gmra.mxu0 %v1322
        %v1808 = vpop.f32.mrf.mxu0
        %v1809 = vadd.f32 %v1683, %v1808
        %v1810 = vpop.f32.mrf.mxu0
        %v1811 = vadd.f32 %v1687, %v1810
        %1812 = vmatprep.mubr.f32.mxu0 %v1327
        %1813 = vmatmul.mubr.f32.gmra.mxu0 %v1326
        %v1814 = vpop.f32.mrf.mxu0
        %v1815 = vadd.f32 %v1683, %v1814
        %v1816 = vpop.f32.mrf.mxu0
        %v1817 = vadd.f32 %v1687, %v1816
        %1818 = vmatprep.mubr.f32.mxu0 %v1331
        %1819 = vmatmul.mubr.f32.gmra.mxu0 %v1330
        %v1820 = vpop.f32.mrf.mxu0
        %v1821 = vadd.f32 %v1683, %v1820
        %v1822 = vpop.f32.mrf.mxu0
        %v1823 = vadd.f32 %v1687, %v1822
        %1824 = vmatprep.mubr.f32.mxu0 %v1335
        %1825 = vmatmul.mubr.f32.gmra.mxu0 %v1334
        %v1826 = vpop.f32.mrf.mxu0
        %v1827 = vadd.f32 %v1683, %v1826
        %v1828 = vpop.f32.mrf.mxu0
        %v1829 = vadd.f32 %v1687, %v1828
        %1830 = vmatprep.mubr.f32.mxu0 %v1339
        %1831 = vmatmul.mubr.f32.gmra.mxu0 %v1338
        %v1832 = vpop.f32.mrf.mxu0
        %v1833 = vadd.f32 %v1683, %v1832
        %v1834 = vpop.f32.mrf.mxu0
        %v1835 = vadd.f32 %v1687, %v1834
        %1836 = vmatprep.mubr.f32.mxu0 %v1343
        %1837 = vmatmul.mubr.f32.gmra.mxu0 %v1342
        %v1838 = vpop.f32.mrf.mxu0
        %v1839 = vadd.f32 %v1683, %v1838
        %v1840 = vpop.f32.mrf.mxu0
        %v1841 = vadd.f32 %v1687, %v1840
        %1842 = vmatprep.mubr.f32.mxu0 %v1347
        %1843 = vmatmul.mubr.f32.gmra.mxu0 %v1346
        %v1844 = vpop.f32.mrf.mxu0
        %v1845 = vadd.f32 %v1683, %v1844
        %v1846 = vpop.f32.mrf.mxu0
        %v1847 = vadd.f32 %v1687, %v1846
        %1848 = vmatprep.mubr.f32.mxu0 %v1351
        %1849 = vmatmul.mubr.f32.gmra.mxu0 %v1350
        %v1850 = vpop.f32.mrf.mxu0
        %v1851 = vadd.f32 %v1683, %v1850
        %v1852 = vpop.f32.mrf.mxu0
        %v1853 = vadd.f32 %v1687, %v1852
        %1854 = vmatprep.mubr.f32.mxu0 %v1355
        %1855 = vmatmul.mubr.f32.gmra.mxu0 %v1354
        %v1856 = vpop.f32.mrf.mxu0
        %v1857 = vadd.f32 %v1683, %v1856
        %v1858 = vpop.f32.mrf.mxu0
        %v1859 = vadd.f32 %v1687, %v1858
        %1860 = vmatprep.mubr.f32.mxu0 %v1359
        %1861 = vmatmul.mubr.f32.gmra.mxu0 %v1358
        %v1862 = vpop.f32.mrf.mxu0
        %v1863 = vadd.f32 %v1683, %v1862
        %v1864 = vpop.f32.mrf.mxu0
        %v1865 = vadd.f32 %v1687, %v1864
        %1866 = vmatprep.mubr.f32.mxu0 %v1363
        %1867 = vmatmul.mubr.f32.gmra.mxu0 %v1362
        %v1868 = vpop.f32.mrf.mxu0
        %v1869 = vadd.f32 %v1683, %v1868
        %v1870 = vpop.f32.mrf.mxu0
        %v1871 = vadd.f32 %v1687, %v1870
        %1872 = vmatprep.mubr.f32.mxu0 %v1367
        %1873 = vmatmul.mubr.f32.gmra.mxu0 %v1366
        %v1874 = vpop.f32.mrf.mxu0
        %v1875 = vadd.f32 %v1683, %v1874
        %v1876 = vpop.f32.mrf.mxu0
        %v1877 = vadd.f32 %v1687, %v1876
        %1878 = vmatprep.mubr.f32.mxu0 %v1371
        %1879 = vmatmul.mubr.f32.gmra.mxu0 %v1370
        %v1880 = vpop.f32.mrf.mxu0
        %v1881 = vadd.f32 %v1683, %v1880
        %v1882 = vpop.f32.mrf.mxu0
        %v1883 = vadd.f32 %v1687, %v1882
        %1884 = vmatprep.mubr.f32.mxu0 %v1375
        %1885 = vmatmul.mubr.f32.gmra.mxu0 %v1374
        %v1886 = vpop.f32.mrf.mxu0
        %v1887 = vadd.f32 %v1683, %v1886
        %v1888 = vpop.f32.mrf.mxu0
        %v1889 = vadd.f32 %v1687, %v1888
        %1890 = vmatprep.mubr.f32.mxu0 %v1379
        %1891 = vmatmul.mubr.f32.gmra.mxu0 %v1378
        %v1892 = vpop.f32.mrf.mxu0
        %v1893 = vadd.f32 %v1683, %v1892
        %v1894 = vpop.f32.mrf.mxu0
        %v1895 = vadd.f32 %v1687, %v1894
        %1896 = vmatprep.mubr.f32.mxu0 %v1383
        %1897 = vmatmul.mubr.f32.gmra.mxu0 %v1382
        %v1898 = vpop.f32.mrf.mxu0
        %v1899 = vadd.f32 %v1683, %v1898
        %v1900 = vpop.f32.mrf.mxu0
        %v1901 = vadd.f32 %v1687, %v1900
        %1902 = vmatprep.mubr.f32.mxu0 %v1387
        %1903 = vmatmul.mubr.f32.gmra.mxu0 %v1386
        %v1904 = vpop.f32.mrf.mxu0
        %v1905 = vadd.f32 %v1683, %v1904
        %v1906 = vpop.f32.mrf.mxu0
        %v1907 = vadd.f32 %v1687, %v1906
        %1908 = vmatprep.mubr.f32.mxu0 %v1391
        %1909 = vmatmul.mubr.f32.gmra.mxu0 %v1390
        %v1910 = vpop.f32.mrf.mxu0
        %v1911 = vadd.f32 %v1683, %v1910
        %v1912 = vpop.f32.mrf.mxu0
        %v1913 = vadd.f32 %v1687, %v1912
        %1914 = vmatprep.mubr.f32.mxu0 %v1395
        %1915 = vmatmul.mubr.f32.gmra.mxu0 %v1394
        %v1916 = vpop.f32.mrf.mxu0
        %v1917 = vadd.f32 %v1683, %v1916
        %v1918 = vpop.f32.mrf.mxu0
        %v1919 = vadd.f32 %v1687, %v1918
        %1920 = vmatprep.mubr.f32.mxu0 %v1399
        %1921 = vmatmul.mubr.f32.gmra.mxu0 %v1398
        %v1922 = vpop.f32.mrf.mxu0
        %v1923 = vadd.f32 %v1683, %v1922
        %v1924 = vpop.f32.mrf.mxu0
        %v1925 = vadd.f32 %v1687, %v1924
        %1926 = vmatprep.mubr.f32.mxu0 %v1403
        %1927 = vmatmul.mubr.f32.gmra.mxu0 %v1402
        %v1928 = vpop.f32.mrf.mxu0
        %v1929 = vadd.f32 %v1683, %v1928
        %v1930 = vpop.f32.mrf.mxu0
        %v1931 = vadd.f32 %v1687, %v1930
        %1932 = vmatprep.mubr.f32.mxu0 %v1407
        %1933 = vmatmul.mubr.f32.gmra.mxu0 %v1406
        %v1934 = vpop.f32.mrf.mxu0
        %v1935 = vadd.f32 %v1683, %v1934
        %v1936 = vpop.f32.mrf.mxu0
        %v1937 = vadd.f32 %v1687, %v1936
        %1938 = vmatprep.mubr.f32.mxu0 %v1411
        %1939 = vmatmul.mubr.f32.gmra.mxu0 %v1410
        %v1940 = vpop.f32.mrf.mxu0
        %v1941 = vadd.f32 %v1683, %v1940
        %v1942 = vpop.f32.mrf.mxu0
        %v1943 = vadd.f32 %v1687, %v1942
        %1944 = vmatprep.mubr.f32.mxu0 %v1415
        %1945 = vmatmul.mubr.f32.gmra.mxu0 %v1414
        %v1946 = vpop.f32.mrf.mxu0
        %v1947 = vadd.f32 %v1683, %v1946
        %v1948 = vpop.f32.mrf.mxu0
        %v1949 = vadd.f32 %v1687, %v1948
        %1950 = vmatprep.mubr.f32.mxu0 %v1419
        %1951 = vmatmul.mubr.f32.gmra.mxu0 %v1418
        %v1952 = vpop.f32.mrf.mxu0
        %v1953 = vadd.f32 %v1683, %v1952
        %v1954 = vpop.f32.mrf.mxu0
        %v1955 = vadd.f32 %v1687, %v1954
        %1956 = vdwg.mxu0
        %1957 = vmatprep.subr.mxu0 %v1611
        %1958 = vmatpush1.msra.mxu0 %v1610
        %1959 = vmatprep.subr.mxu0 %v1607
        %1960 = vmatpush1.msra.mxu0 %v1606
        %1961 = vmatprep.subr.mxu0 %v1603
        %1962 = vmatpush1.msra.mxu0 %v1602
        %1963 = vmatprep.subr.mxu0 %v1599
        %1964 = vmatpush1.msra.mxu0 %v1598
        %1965 = vmatprep.subr.mxu0 %v1595
        %1966 = vmatpush1.msra.mxu0 %v1594
        %1967 = vmatprep.subr.mxu0 %v1591
        %1968 = vmatpush1.msra.mxu0 %v1590
        %1969 = vmatprep.subr.mxu0 %v1587
        %1970 = vmatpush1.msra.mxu0 %v1586
        %1971 = vmatprep.subr.mxu0 %v1583
        %1972 = vmatpush1.msra.mxu0 %v1582
        %1973 = vmatprep.subr.mxu0 %v1579
        %1974 = vmatpush1.msra.mxu0 %v1578
        %1975 = vmatprep.subr.mxu0 %v1575
        %1976 = vmatpush1.msra.mxu0 %v1574
        %1977 = vmatprep.subr.mxu0 %v1571
        %1978 = vmatpush1.msra.mxu0 %v1570
        %1979 = vmatprep.subr.mxu0 %v1567
        %1980 = vmatpush1.msra.mxu0 %v1566
        %1981 = vmatprep.subr.mxu0 %v1563
        %1982 = vmatpush1.msra.mxu0 %v1562
        %1983 = vmatprep.subr.mxu0 %v1559
        %1984 = vmatpush1.msra.mxu0 %v1558
        %1985 = vmatprep.subr.mxu0 %v1555
        %1986 = vmatpush1.msra.mxu0 %v1554
        %1987 = vmatprep.subr.mxu0 %v1551
        %1988 = vmatpush1.msra.mxu0 %v1550
        %1989 = vmatprep.subr.mxu0 %v1675
        %1990 = vmatpush2.msra.mxu0 %v1674
        %1991 = vmatprep.subr.mxu0 %v1671
        %1992 = vmatpush2.msra.mxu0 %v1670
        %1993 = vmatprep.subr.mxu0 %v1667
        %1994 = vmatpush2.msra.mxu0 %v1666
        %1995 = vmatprep.subr.mxu0 %v1663
        %1996 = vmatpush2.msra.mxu0 %v1662
        %1997 = vmatprep.subr.mxu0 %v1659
        %1998 = vmatpush2.msra.mxu0 %v1658
        %1999 = vmatprep.subr.mxu0 %v1655
        %2000 = vmatpush2.msra.mxu0 %v1654
        %2001 = vmatprep.subr.mxu0 %v1651
        %2002 = vmatpush2.msra.mxu0 %v1650
        %2003 = vmatprep.subr.mxu0 %v1647
        %2004 = vmatpush2.msra.mxu0 %v1646
        %2005 = vmatprep.subr.mxu0 %v1643
        %2006 = vmatpush2.msra.mxu0 %v1642
        %2007 = vmatprep.subr.mxu0 %v1639
        %2008 = vmatpush2.msra.mxu0 %v1638
        %2009 = vmatprep.subr.mxu0 %v1635
        %2010 = vmatpush2.msra.mxu0 %v1634
        %2011 = vmatprep.subr.mxu0 %v1631
        %2012 = vmatpush2.msra.mxu0 %v1630
        %2013 = vmatprep.subr.mxu0 %v1627
        %2014 = vmatpush2.msra.mxu0 %v1626
        %2015 = vmatprep.subr.mxu0 %v1623
        %2016 = vmatpush2.msra.mxu0 %v1622
        %2017 = vmatprep.subr.mxu0 %v1619
        %2018 = vmatpush2.msra.mxu0 %v1618
        %2019 = vmatprep.subr.mxu0 %v1615
        %2020 = vmatpush2.msra.mxu0 %v1614
        %2021 = vmatprep.mubr.f32.mxu0 %v1297
        %2022 = vmatmul.mubr.f32.gmra.mxu0 %v1296
        %v2023 = vpop.f32.mrf.mxu0
        %v2024 = vadd.f32 %v1767, %v2023
        %v2025 = vpop.f32.mrf.mxu0
        %v2026 = vadd.f32 %v1769, %v2025
        %2027 = vmatprep.mubr.f32.mxu0 %v1301
        %2028 = vmatmul.mubr.f32.gmra.mxu0 %v1300
        %v2029 = vpop.f32.mrf.mxu0
        %v2030 = vadd.f32 %v1773, %v2029
        %v2031 = vpop.f32.mrf.mxu0
        %v2032 = vadd.f32 %v1775, %v2031
        %2033 = vmatprep.mubr.f32.mxu0 %v1305
        %2034 = vmatmul.mubr.f32.gmra.mxu0 %v1304
        %v2035 = vpop.f32.mrf.mxu0
        %v2036 = vadd.f32 %v1779, %v2035
        %v2037 = vpop.f32.mrf.mxu0
        %v2038 = vadd.f32 %v1781, %v2037
        %2039 = vmatprep.mubr.f32.mxu0 %v1309
        %2040 = vmatmul.mubr.f32.gmra.mxu0 %v1308
        %v2041 = vpop.f32.mrf.mxu0
        %v2042 = vadd.f32 %v1785, %v2041
        %v2043 = vpop.f32.mrf.mxu0
        %v2044 = vadd.f32 %v1787, %v2043
        %2045 = vmatprep.mubr.f32.mxu0 %v1313
        %2046 = vmatmul.mubr.f32.gmra.mxu0 %v1312
        %v2047 = vpop.f32.mrf.mxu0
        %v2048 = vadd.f32 %v1791, %v2047
        %v2049 = vpop.f32.mrf.mxu0
        %v2050 = vadd.f32 %v1793, %v2049
        %2051 = vmatprep.mubr.f32.mxu0 %v1317
        %2052 = vmatmul.mubr.f32.gmra.mxu0 %v1316
        %v2053 = vpop.f32.mrf.mxu0
        %v2054 = vadd.f32 %v1797, %v2053
        %v2055 = vpop.f32.mrf.mxu0
        %v2056 = vadd.f32 %v1799, %v2055
        %2057 = vmatprep.mubr.f32.mxu0 %v1321
        %2058 = vmatmul.mubr.f32.gmra.mxu0 %v1320
        %v2059 = vpop.f32.mrf.mxu0
        %v2060 = vadd.f32 %v1803, %v2059
        %v2061 = vpop.f32.mrf.mxu0
        %v2062 = vadd.f32 %v1805, %v2061
        %2063 = vmatprep.mubr.f32.mxu0 %v1325
        %2064 = vmatmul.mubr.f32.gmra.mxu0 %v1324
        %v2065 = vpop.f32.mrf.mxu0
        %v2066 = vadd.f32 %v1809, %v2065
        %v2067 = vpop.f32.mrf.mxu0
        %v2068 = vadd.f32 %v1811, %v2067
        %2069 = vmatprep.mubr.f32.mxu0 %v1329
        %2070 = vmatmul.mubr.f32.gmra.mxu0 %v1328
        %v2071 = vpop.f32.mrf.mxu0
        %v2072 = vadd.f32 %v1815, %v2071
        %v2073 = vpop.f32.mrf.mxu0
        %v2074 = vadd.f32 %v1817, %v2073
        %2075 = vmatprep.mubr.f32.mxu0 %v1333
        %2076 = vmatmul.mubr.f32.gmra.mxu0 %v1332
        %v2077 = vpop.f32.mrf.mxu0
        %v2078 = vadd.f32 %v1821, %v2077
        %v2079 = vpop.f32.mrf.mxu0
        %v2080 = vadd.f32 %v1823, %v2079
        %2081 = vmatprep.mubr.f32.mxu0 %v1337
        %2082 = vmatmul.mubr.f32.gmra.mxu0 %v1336
        %v2083 = vpop.f32.mrf.mxu0
        %v2084 = vadd.f32 %v1827, %v2083
        %v2085 = vpop.f32.mrf.mxu0
        %v2086 = vadd.f32 %v1829, %v2085
        %2087 = vmatprep.mubr.f32.mxu0 %v1341
        %2088 = vmatmul.mubr.f32.gmra.mxu0 %v1340
        %v2089 = vpop.f32.mrf.mxu0
        %v2090 = vadd.f32 %v1833, %v2089
        %v2091 = vpop.f32.mrf.mxu0
        %v2092 = vadd.f32 %v1835, %v2091
        %2093 = vmatprep.mubr.f32.mxu0 %v1345
        %2094 = vmatmul.mubr.f32.gmra.mxu0 %v1344
        %v2095 = vpop.f32.mrf.mxu0
        %v2096 = vadd.f32 %v1839, %v2095
        %v2097 = vpop.f32.mrf.mxu0
        %v2098 = vadd.f32 %v1841, %v2097
        %2099 = vmatprep.mubr.f32.mxu0 %v1349
        %2100 = vmatmul.mubr.f32.gmra.mxu0 %v1348
        %v2101 = vpop.f32.mrf.mxu0
        %v2102 = vadd.f32 %v1845, %v2101
        %v2103 = vpop.f32.mrf.mxu0
        %v2104 = vadd.f32 %v1847, %v2103
        %2105 = vmatprep.mubr.f32.mxu0 %v1353
        %2106 = vmatmul.mubr.f32.gmra.mxu0 %v1352
        %v2107 = vpop.f32.mrf.mxu0
        %v2108 = vadd.f32 %v1851, %v2107
        %v2109 = vpop.f32.mrf.mxu0
        %v2110 = vadd.f32 %v1853, %v2109
        %2111 = vmatprep.mubr.f32.mxu0 %v1357
        %2112 = vmatmul.mubr.f32.gmra.mxu0 %v1356
        %v2113 = vpop.f32.mrf.mxu0
        %v2114 = vadd.f32 %v1857, %v2113
        %v2115 = vpop.f32.mrf.mxu0
        %v2116 = vadd.f32 %v1859, %v2115
        %2117 = vmatprep.mubr.f32.mxu0 %v1361
        %2118 = vmatmul.mubr.f32.gmra.mxu0 %v1360
        %v2119 = vpop.f32.mrf.mxu0
        %v2120 = vadd.f32 %v1863, %v2119
        %v2121 = vpop.f32.mrf.mxu0
        %v2122 = vadd.f32 %v1865, %v2121
        %2123 = vmatprep.mubr.f32.mxu0 %v1365
        %2124 = vmatmul.mubr.f32.gmra.mxu0 %v1364
        %v2125 = vpop.f32.mrf.mxu0
        %v2126 = vadd.f32 %v1869, %v2125
        %v2127 = vpop.f32.mrf.mxu0
        %v2128 = vadd.f32 %v1871, %v2127
        %2129 = vmatprep.mubr.f32.mxu0 %v1369
        %2130 = vmatmul.mubr.f32.gmra.mxu0 %v1368
        %v2131 = vpop.f32.mrf.mxu0
        %v2132 = vadd.f32 %v1875, %v2131
        %v2133 = vpop.f32.mrf.mxu0
        %v2134 = vadd.f32 %v1877, %v2133
        %2135 = vmatprep.mubr.f32.mxu0 %v1373
        %2136 = vmatmul.mubr.f32.gmra.mxu0 %v1372
        %v2137 = vpop.f32.mrf.mxu0
        %v2138 = vadd.f32 %v1881, %v2137
        %v2139 = vpop.f32.mrf.mxu0
        %v2140 = vadd.f32 %v1883, %v2139
        %2141 = vmatprep.mubr.f32.mxu0 %v1377
        %2142 = vmatmul.mubr.f32.gmra.mxu0 %v1376
        %v2143 = vpop.f32.mrf.mxu0
        %v2144 = vadd.f32 %v1887, %v2143
        %v2145 = vpop.f32.mrf.mxu0
        %v2146 = vadd.f32 %v1889, %v2145
        %2147 = vmatprep.mubr.f32.mxu0 %v1381
        %2148 = vmatmul.mubr.f32.gmra.mxu0 %v1380
        %v2149 = vpop.f32.mrf.mxu0
        %v2150 = vadd.f32 %v1893, %v2149
        %v2151 = vpop.f32.mrf.mxu0
        %v2152 = vadd.f32 %v1895, %v2151
        %2153 = vmatprep.mubr.f32.mxu0 %v1385
        %2154 = vmatmul.mubr.f32.gmra.mxu0 %v1384
        %v2155 = vpop.f32.mrf.mxu0
        %v2156 = vadd.f32 %v1899, %v2155
        %v2157 = vpop.f32.mrf.mxu0
        %v2158 = vadd.f32 %v1901, %v2157
        %2159 = vmatprep.mubr.f32.mxu0 %v1389
        %2160 = vmatmul.mubr.f32.gmra.mxu0 %v1388
        %v2161 = vpop.f32.mrf.mxu0
        %v2162 = vadd.f32 %v1905, %v2161
        %v2163 = vpop.f32.mrf.mxu0
        %v2164 = vadd.f32 %v1907, %v2163
        %2165 = vmatprep.mubr.f32.mxu0 %v1393
        %2166 = vmatmul.mubr.f32.gmra.mxu0 %v1392
        %v2167 = vpop.f32.mrf.mxu0
        %v2168 = vadd.f32 %v1911, %v2167
        %v2169 = vpop.f32.mrf.mxu0
        %v2170 = vadd.f32 %v1913, %v2169
        %2171 = vmatprep.mubr.f32.mxu0 %v1397
        %2172 = vmatmul.mubr.f32.gmra.mxu0 %v1396
        %v2173 = vpop.f32.mrf.mxu0
        %v2174 = vadd.f32 %v1917, %v2173
        %v2175 = vpop.f32.mrf.mxu0
        %v2176 = vadd.f32 %v1919, %v2175
        %2177 = vmatprep.mubr.f32.mxu0 %v1401
        %2178 = vmatmul.mubr.f32.gmra.mxu0 %v1400
        %v2179 = vpop.f32.mrf.mxu0
        %v2180 = vadd.f32 %v1923, %v2179
        %v2181 = vpop.f32.mrf.mxu0
        %v2182 = vadd.f32 %v1925, %v2181
        %2183 = vmatprep.mubr.f32.mxu0 %v1405
        %2184 = vmatmul.mubr.f32.gmra.mxu0 %v1404
        %v2185 = vpop.f32.mrf.mxu0
        %v2186 = vadd.f32 %v1929, %v2185
        %v2187 = vpop.f32.mrf.mxu0
        %v2188 = vadd.f32 %v1931, %v2187
        %2189 = vmatprep.mubr.f32.mxu0 %v1409
        %2190 = vmatmul.mubr.f32.gmra.mxu0 %v1408
        %v2191 = vpop.f32.mrf.mxu0
        %v2192 = vadd.f32 %v1935, %v2191
        %v2193 = vpop.f32.mrf.mxu0
        %v2194 = vadd.f32 %v1937, %v2193
        %2195 = vmatprep.mubr.f32.mxu0 %v1413
        %2196 = vmatmul.mubr.f32.gmra.mxu0 %v1412
        %v2197 = vpop.f32.mrf.mxu0
        %v2198 = vadd.f32 %v1941, %v2197
        %v2199 = vpop.f32.mrf.mxu0
        %v2200 = vadd.f32 %v1943, %v2199
        %2201 = vmatprep.mubr.f32.mxu0 %v1417
        %2202 = vmatmul.mubr.f32.gmra.mxu0 %v1416
        %v2203 = vpop.f32.mrf.mxu0
        %v2204 = vadd.f32 %v1947, %v2203
        %v2205 = vpop.f32.mrf.mxu0
        %v2206 = vadd.f32 %v1949, %v2205
        %2207 = vmatprep.mubr.f32.mxu0 %v1421
        %2208 = vmatmul.mubr.f32.gmra.mxu0 %v1420
        %v2209 = vpop.f32.mrf.mxu0
        %v2210 = vadd.f32 %v1953, %v2209
        %v2211 = vpop.f32.mrf.mxu0
        %v2212 = vadd.f32 %v1955, %v2211
        %2213 = vdwg.mxu0
        %2214 = vmatprep.subr.mxu0 %v1485
        %2215 = vmatpush1.msra.mxu0 %v1484
        %2216 = vmatprep.subr.mxu0 %v1481
        %2217 = vmatpush1.msra.mxu0 %v1480
        %2218 = vmatprep.subr.mxu0 %v1477
        %2219 = vmatpush1.msra.mxu0 %v1476
        %2220 = vmatprep.subr.mxu0 %v1473
        %2221 = vmatpush1.msra.mxu0 %v1472
        %2222 = vmatprep.subr.mxu0 %v1469
        %2223 = vmatpush1.msra.mxu0 %v1468
        %2224 = vmatprep.subr.mxu0 %v1465
        %2225 = vmatpush1.msra.mxu0 %v1464
        %2226 = vmatprep.subr.mxu0 %v1461
        %2227 = vmatpush1.msra.mxu0 %v1460
        %2228 = vmatprep.subr.mxu0 %v1457
        %2229 = vmatpush1.msra.mxu0 %v1456
        %2230 = vmatprep.subr.mxu0 %v1453
        %2231 = vmatpush1.msra.mxu0 %v1452
        %2232 = vmatprep.subr.mxu0 %v1449
        %2233 = vmatpush1.msra.mxu0 %v1448
        %2234 = vmatprep.subr.mxu0 %v1445
        %2235 = vmatpush1.msra.mxu0 %v1444
        %2236 = vmatprep.subr.mxu0 %v1441
        %2237 = vmatpush1.msra.mxu0 %v1440
        %2238 = vmatprep.subr.mxu0 %v1437
        %2239 = vmatpush1.msra.mxu0 %v1436
        %2240 = vmatprep.subr.mxu0 %v1433
        %2241 = vmatpush1.msra.mxu0 %v1432
        %2242 = vmatprep.subr.mxu0 %v1429
        %2243 = vmatpush1.msra.mxu0 %v1428
        %2244 = vmatprep.subr.mxu0 %v1425
        %2245 = vmatpush1.msra.mxu0 %v1424
        %2246 = vmatprep.subr.mxu0 %v1549
        %2247 = vmatpush2.msra.mxu0 %v1548
        %2248 = vmatprep.subr.mxu0 %v1545
        %2249 = vmatpush2.msra.mxu0 %v1544
        %2250 = vmatprep.subr.mxu0 %v1541
        %2251 = vmatpush2.msra.mxu0 %v1540
        %2252 = vmatprep.subr.mxu0 %v1537
        %2253 = vmatpush2.msra.mxu0 %v1536
        %2254 = vmatprep.subr.mxu0 %v1533
        %2255 = vmatpush2.msra.mxu0 %v1532
        %2256 = vmatprep.subr.mxu0 %v1529
        %2257 = vmatpush2.msra.mxu0 %v1528
        %2258 = vmatprep.subr.mxu0 %v1525
        %2259 = vmatpush2.msra.mxu0 %v1524
        %2260 = vmatprep.subr.mxu0 %v1521
        %2261 = vmatpush2.msra.mxu0 %v1520
        %2262 = vmatprep.subr.mxu0 %v1517
        %2263 = vmatpush2.msra.mxu0 %v1516
        %2264 = vmatprep.subr.mxu0 %v1513
        %2265 = vmatpush2.msra.mxu0 %v1512
        %2266 = vmatprep.subr.mxu0 %v1509
        %2267 = vmatpush2.msra.mxu0 %v1508
        %2268 = vmatprep.subr.mxu0 %v1505
        %2269 = vmatpush2.msra.mxu0 %v1504
        %2270 = vmatprep.subr.mxu0 %v1501
        %2271 = vmatpush2.msra.mxu0 %v1500
        %2272 = vmatprep.subr.mxu0 %v1497
        %2273 = vmatpush2.msra.mxu0 %v1496
        %2274 = vmatprep.subr.mxu0 %v1493
        %2275 = vmatpush2.msra.mxu0 %v1492
        %2276 = vmatprep.subr.mxu0 %v1489
        %2277 = vmatpush2.msra.mxu0 %v1488
        %2278 = vmatprep.mubr.f32.mxu0 %v1295
        %2279 = vmatmul.mubr.f32.gmra.mxu0 %v1294
        %v2280 = vpop.f32.mrf.mxu0
        %v2281 = vadd.f32 %v1691, %v2280
        %v2282 = vpop.f32.mrf.mxu0
        %v2283 = vadd.f32 %v1695, %v2282
        %2284 = vmatprep.mubr.f32.mxu0 %v1299
        %2285 = vmatmul.mubr.f32.gmra.mxu0 %v1298
        %v2286 = vpop.f32.mrf.mxu0
        %v2287 = vadd.f32 %v1691, %v2286
        %v2288 = vpop.f32.mrf.mxu0
        %v2289 = vadd.f32 %v1695, %v2288
        %2290 = vmatprep.mubr.f32.mxu0 %v1303
        %2291 = vmatmul.mubr.f32.gmra.mxu0 %v1302
        %v2292 = vpop.f32.mrf.mxu0
        %v2293 = vadd.f32 %v1691, %v2292
        %v2294 = vpop.f32.mrf.mxu0
        %v2295 = vadd.f32 %v1695, %v2294
        %2296 = vmatprep.mubr.f32.mxu0 %v1307
        %2297 = vmatmul.mubr.f32.gmra.mxu0 %v1306
        %v2298 = vpop.f32.mrf.mxu0
        %v2299 = vadd.f32 %v1691, %v2298
        %v2300 = vpop.f32.mrf.mxu0
        %v2301 = vadd.f32 %v1695, %v2300
        %2302 = vmatprep.mubr.f32.mxu0 %v1311
        %2303 = vmatmul.mubr.f32.gmra.mxu0 %v1310
        %v2304 = vpop.f32.mrf.mxu0
        %v2305 = vadd.f32 %v1691, %v2304
        %v2306 = vpop.f32.mrf.mxu0
        %v2307 = vadd.f32 %v1695, %v2306
        %2308 = vmatprep.mubr.f32.mxu0 %v1315
        %2309 = vmatmul.mubr.f32.gmra.mxu0 %v1314
        %v2310 = vpop.f32.mrf.mxu0
        %v2311 = vadd.f32 %v1691, %v2310
        %v2312 = vpop.f32.mrf.mxu0
        %v2313 = vadd.f32 %v1695, %v2312
        %2314 = vmatprep.mubr.f32.mxu0 %v1319
        %2315 = vmatmul.mubr.f32.gmra.mxu0 %v1318
        %v2316 = vpop.f32.mrf.mxu0
        %v2317 = vadd.f32 %v1691, %v2316
        %v2318 = vpop.f32.mrf.mxu0
        %v2319 = vadd.f32 %v1695, %v2318
        %2320 = vmatprep.mubr.f32.mxu0 %v1323
        %2321 = vmatmul.mubr.f32.gmra.mxu0 %v1322
        %v2322 = vpop.f32.mrf.mxu0
        %v2323 = vadd.f32 %v1691, %v2322
        %v2324 = vpop.f32.mrf.mxu0
        %v2325 = vadd.f32 %v1695, %v2324
        %2326 = vmatprep.mubr.f32.mxu0 %v1327
        %2327 = vmatmul.mubr.f32.gmra.mxu0 %v1326
        %v2328 = vpop.f32.mrf.mxu0
        %v2329 = vadd.f32 %v1691, %v2328
        %v2330 = vpop.f32.mrf.mxu0
        %v2331 = vadd.f32 %v1695, %v2330
        %2332 = vmatprep.mubr.f32.mxu0 %v1331
        %2333 = vmatmul.mubr.f32.gmra.mxu0 %v1330
        %v2334 = vpop.f32.mrf.mxu0
        %v2335 = vadd.f32 %v1691, %v2334
        %v2336 = vpop.f32.mrf.mxu0
        %v2337 = vadd.f32 %v1695, %v2336
        %2338 = vmatprep.mubr.f32.mxu0 %v1335
        %2339 = vmatmul.mubr.f32.gmra.mxu0 %v1334
        %v2340 = vpop.f32.mrf.mxu0
        %v2341 = vadd.f32 %v1691, %v2340
        %v2342 = vpop.f32.mrf.mxu0
        %v2343 = vadd.f32 %v1695, %v2342
        %2344 = vmatprep.mubr.f32.mxu0 %v1339
        %2345 = vmatmul.mubr.f32.gmra.mxu0 %v1338
        %v2346 = vpop.f32.mrf.mxu0
        %v2347 = vadd.f32 %v1691, %v2346
        %v2348 = vpop.f32.mrf.mxu0
        %v2349 = vadd.f32 %v1695, %v2348
        %2350 = vmatprep.mubr.f32.mxu0 %v1343
        %2351 = vmatmul.mubr.f32.gmra.mxu0 %v1342
        %v2352 = vpop.f32.mrf.mxu0
        %v2353 = vadd.f32 %v1691, %v2352
        %v2354 = vpop.f32.mrf.mxu0
        %v2355 = vadd.f32 %v1695, %v2354
        %2356 = vmatprep.mubr.f32.mxu0 %v1347
        %2357 = vmatmul.mubr.f32.gmra.mxu0 %v1346
        %v2358 = vpop.f32.mrf.mxu0
        %v2359 = vadd.f32 %v1691, %v2358
        %v2360 = vpop.f32.mrf.mxu0
        %v2361 = vadd.f32 %v1695, %v2360
        %2362 = vmatprep.mubr.f32.mxu0 %v1351
        %2363 = vmatmul.mubr.f32.gmra.mxu0 %v1350
        %v2364 = vpop.f32.mrf.mxu0
        %v2365 = vadd.f32 %v1691, %v2364
        %v2366 = vpop.f32.mrf.mxu0
        %v2367 = vadd.f32 %v1695, %v2366
        %2368 = vmatprep.mubr.f32.mxu0 %v1355
        %2369 = vmatmul.mubr.f32.gmra.mxu0 %v1354
        %v2370 = vpop.f32.mrf.mxu0
        %v2371 = vadd.f32 %v1691, %v2370
        %v2372 = vpop.f32.mrf.mxu0
        %v2373 = vadd.f32 %v1695, %v2372
        %2374 = vmatprep.mubr.f32.mxu0 %v1359
        %2375 = vmatmul.mubr.f32.gmra.mxu0 %v1358
        %v2376 = vpop.f32.mrf.mxu0
        %v2377 = vadd.f32 %v1691, %v2376
        %v2378 = vpop.f32.mrf.mxu0
        %v2379 = vadd.f32 %v1695, %v2378
        %2380 = vmatprep.mubr.f32.mxu0 %v1363
        %2381 = vmatmul.mubr.f32.gmra.mxu0 %v1362
        %v2382 = vpop.f32.mrf.mxu0
        %v2383 = vadd.f32 %v1691, %v2382
        %v2384 = vpop.f32.mrf.mxu0
        %v2385 = vadd.f32 %v1695, %v2384
        %2386 = vmatprep.mubr.f32.mxu0 %v1367
        %2387 = vmatmul.mubr.f32.gmra.mxu0 %v1366
        %v2388 = vpop.f32.mrf.mxu0
        %v2389 = vadd.f32 %v1691, %v2388
        %v2390 = vpop.f32.mrf.mxu0
        %v2391 = vadd.f32 %v1695, %v2390
        %2392 = vmatprep.mubr.f32.mxu0 %v1371
        %2393 = vmatmul.mubr.f32.gmra.mxu0 %v1370
        %v2394 = vpop.f32.mrf.mxu0
        %v2395 = vadd.f32 %v1691, %v2394
        %v2396 = vpop.f32.mrf.mxu0
        %v2397 = vadd.f32 %v1695, %v2396
        %2398 = vmatprep.mubr.f32.mxu0 %v1375
        %2399 = vmatmul.mubr.f32.gmra.mxu0 %v1374
        %v2400 = vpop.f32.mrf.mxu0
        %v2401 = vadd.f32 %v1691, %v2400
        %v2402 = vpop.f32.mrf.mxu0
        %v2403 = vadd.f32 %v1695, %v2402
        %2404 = vmatprep.mubr.f32.mxu0 %v1379
        %2405 = vmatmul.mubr.f32.gmra.mxu0 %v1378
        %v2406 = vpop.f32.mrf.mxu0
        %v2407 = vadd.f32 %v1691, %v2406
        %v2408 = vpop.f32.mrf.mxu0
        %v2409 = vadd.f32 %v1695, %v2408
        %2410 = vmatprep.mubr.f32.mxu0 %v1383
        %2411 = vmatmul.mubr.f32.gmra.mxu0 %v1382
        %v2412 = vpop.f32.mrf.mxu0
        %v2413 = vadd.f32 %v1691, %v2412
        %v2414 = vpop.f32.mrf.mxu0
        %v2415 = vadd.f32 %v1695, %v2414
        %2416 = vmatprep.mubr.f32.mxu0 %v1387
        %2417 = vmatmul.mubr.f32.gmra.mxu0 %v1386
        %v2418 = vpop.f32.mrf.mxu0
        %v2419 = vadd.f32 %v1691, %v2418
        %v2420 = vpop.f32.mrf.mxu0
        %v2421 = vadd.f32 %v1695, %v2420
        %2422 = vmatprep.mubr.f32.mxu0 %v1391
        %2423 = vmatmul.mubr.f32.gmra.mxu0 %v1390
        %v2424 = vpop.f32.mrf.mxu0
        %v2425 = vadd.f32 %v1691, %v2424
        %v2426 = vpop.f32.mrf.mxu0
        %v2427 = vadd.f32 %v1695, %v2426
        %2428 = vmatprep.mubr.f32.mxu0 %v1395
        %2429 = vmatmul.mubr.f32.gmra.mxu0 %v1394
        %v2430 = vpop.f32.mrf.mxu0
        %v2431 = vadd.f32 %v1691, %v2430
        %v2432 = vpop.f32.mrf.mxu0
        %v2433 = vadd.f32 %v1695, %v2432
        %2434 = vmatprep.mubr.f32.mxu0 %v1399
        %2435 = vmatmul.mubr.f32.gmra.mxu0 %v1398
        %v2436 = vpop.f32.mrf.mxu0
        %v2437 = vadd.f32 %v1691, %v2436
        %v2438 = vpop.f32.mrf.mxu0
        %v2439 = vadd.f32 %v1695, %v2438
        %2440 = vmatprep.mubr.f32.mxu0 %v1403
        %2441 = vmatmul.mubr.f32.gmra.mxu0 %v1402
        %v2442 = vpop.f32.mrf.mxu0
        %v2443 = vadd.f32 %v1691, %v2442
        %v2444 = vpop.f32.mrf.mxu0
        %v2445 = vadd.f32 %v1695, %v2444
        %2446 = vmatprep.mubr.f32.mxu0 %v1407
        %2447 = vmatmul.mubr.f32.gmra.mxu0 %v1406
        %v2448 = vpop.f32.mrf.mxu0
        %v2449 = vadd.f32 %v1691, %v2448
        %v2450 = vpop.f32.mrf.mxu0
        %v2451 = vadd.f32 %v1695, %v2450
        %2452 = vmatprep.mubr.f32.mxu0 %v1411
        %2453 = vmatmul.mubr.f32.gmra.mxu0 %v1410
        %v2454 = vpop.f32.mrf.mxu0
        %v2455 = vadd.f32 %v1691, %v2454
        %v2456 = vpop.f32.mrf.mxu0
        %v2457 = vadd.f32 %v1695, %v2456
        %2458 = vmatprep.mubr.f32.mxu0 %v1415
        %2459 = vmatmul.mubr.f32.gmra.mxu0 %v1414
        %v2460 = vpop.f32.mrf.mxu0
        %v2461 = vadd.f32 %v1691, %v2460
        %v2462 = vpop.f32.mrf.mxu0
        %v2463 = vadd.f32 %v1695, %v2462
        %2464 = vmatprep.mubr.f32.mxu0 %v1419
        %2465 = vmatmul.mubr.f32.gmra.mxu0 %v1418
        %v2466 = vpop.f32.mrf.mxu0
        %v2467 = vadd.f32 %v1691, %v2466
        %v2468 = vpop.f32.mrf.mxu0
        %v2469 = vadd.f32 %v1695, %v2468
        %2470 = vdwg.mxu0
        %2471 = vmatprep.subr.mxu0 %v1613
        %2472 = vmatpush1.msra.mxu0 %v1612
        %2473 = vmatprep.subr.mxu0 %v1609
        %2474 = vmatpush1.msra.mxu0 %v1608
        %2475 = vmatprep.subr.mxu0 %v1605
        %2476 = vmatpush1.msra.mxu0 %v1604
        %2477 = vmatprep.subr.mxu0 %v1601
        %2478 = vmatpush1.msra.mxu0 %v1600
        %2479 = vmatprep.subr.mxu0 %v1597
        %2480 = vmatpush1.msra.mxu0 %v1596
        %2481 = vmatprep.subr.mxu0 %v1593
        %2482 = vmatpush1.msra.mxu0 %v1592
        %2483 = vmatprep.subr.mxu0 %v1589
        %2484 = vmatpush1.msra.mxu0 %v1588
        %2485 = vmatprep.subr.mxu0 %v1585
        %2486 = vmatpush1.msra.mxu0 %v1584
        %2487 = vmatprep.subr.mxu0 %v1581
        %2488 = vmatpush1.msra.mxu0 %v1580
        %2489 = vmatprep.subr.mxu0 %v1577
        %2490 = vmatpush1.msra.mxu0 %v1576
        %2491 = vmatprep.subr.mxu0 %v1573
        %2492 = vmatpush1.msra.mxu0 %v1572
        %2493 = vmatprep.subr.mxu0 %v1569
        %2494 = vmatpush1.msra.mxu0 %v1568
        %2495 = vmatprep.subr.mxu0 %v1565
        %2496 = vmatpush1.msra.mxu0 %v1564
        %2497 = vmatprep.subr.mxu0 %v1561
        %2498 = vmatpush1.msra.mxu0 %v1560
        %2499 = vmatprep.subr.mxu0 %v1557
        %2500 = vmatpush1.msra.mxu0 %v1556
        %2501 = vmatprep.subr.mxu0 %v1553
        %2502 = vmatpush1.msra.mxu0 %v1552
        %2503 = vmatprep.subr.mxu0 %v1677
        %2504 = vmatpush2.msra.mxu0 %v1676
        %2505 = vmatprep.subr.mxu0 %v1673
        %2506 = vmatpush2.msra.mxu0 %v1672
        %2507 = vmatprep.subr.mxu0 %v1669
        %2508 = vmatpush2.msra.mxu0 %v1668
        %2509 = vmatprep.subr.mxu0 %v1665
        %2510 = vmatpush2.msra.mxu0 %v1664
        %2511 = vmatprep.subr.mxu0 %v1661
        %2512 = vmatpush2.msra.mxu0 %v1660
        %2513 = vmatprep.subr.mxu0 %v1657
        %2514 = vmatpush2.msra.mxu0 %v1656
        %2515 = vmatprep.subr.mxu0 %v1653
        %2516 = vmatpush2.msra.mxu0 %v1652
        %2517 = vmatprep.subr.mxu0 %v1649
        %2518 = vmatpush2.msra.mxu0 %v1648
        %2519 = vmatprep.subr.mxu0 %v1645
        %2520 = vmatpush2.msra.mxu0 %v1644
        %2521 = vmatprep.subr.mxu0 %v1641
        %2522 = vmatpush2.msra.mxu0 %v1640
        %2523 = vmatprep.subr.mxu0 %v1637
        %2524 = vmatpush2.msra.mxu0 %v1636
        %2525 = vmatprep.subr.mxu0 %v1633
        %2526 = vmatpush2.msra.mxu0 %v1632
        %2527 = vmatprep.subr.mxu0 %v1629
        %2528 = vmatpush2.msra.mxu0 %v1628
        %2529 = vmatprep.subr.mxu0 %v1625
        %2530 = vmatpush2.msra.mxu0 %v1624
        %2531 = vmatprep.subr.mxu0 %v1621
        %2532 = vmatpush2.msra.mxu0 %v1620
        %2533 = vmatprep.subr.mxu0 %v1617
        %2534 = vmatpush2.msra.mxu0 %v1616
        %2535 = vmatprep.mubr.f32.mxu0 %v1297
        %2536 = vmatmul.mubr.f32.gmra.mxu0 %v1296
        %v2537 = vpop.f32.mrf.mxu0
        %v2538 = vadd.f32 %v2281, %v2537
        %v2539 = vpop.f32.mrf.mxu0
        %v2540 = vadd.f32 %v2283, %v2539
        %2541 = vmatprep.mubr.f32.mxu0 %v1301
        %2542 = vmatmul.mubr.f32.gmra.mxu0 %v1300
        %v2543 = vpop.f32.mrf.mxu0
        %v2544 = vadd.f32 %v2287, %v2543
        %v2545 = vpop.f32.mrf.mxu0
        %v2546 = vadd.f32 %v2289, %v2545
        %2547 = vmatprep.mubr.f32.mxu0 %v1305
        %2548 = vmatmul.mubr.f32.gmra.mxu0 %v1304
        %v2549 = vpop.f32.mrf.mxu0
        %v2550 = vadd.f32 %v2293, %v2549
        %v2551 = vpop.f32.mrf.mxu0
        %v2552 = vadd.f32 %v2295, %v2551
        %2553 = vmatprep.mubr.f32.mxu0 %v1309
        %2554 = vmatmul.mubr.f32.gmra.mxu0 %v1308
        %v2555 = vpop.f32.mrf.mxu0
        %v2556 = vadd.f32 %v2299, %v2555
        %v2557 = vpop.f32.mrf.mxu0
        %v2558 = vadd.f32 %v2301, %v2557
        %2559 = vmatprep.mubr.f32.mxu0 %v1313
        %2560 = vmatmul.mubr.f32.gmra.mxu0 %v1312
        %v2561 = vpop.f32.mrf.mxu0
        %v2562 = vadd.f32 %v2305, %v2561
        %v2563 = vpop.f32.mrf.mxu0
        %v2564 = vadd.f32 %v2307, %v2563
        %2565 = vmatprep.mubr.f32.mxu0 %v1317
        %2566 = vmatmul.mubr.f32.gmra.mxu0 %v1316
        %v2567 = vpop.f32.mrf.mxu0
        %v2568 = vadd.f32 %v2311, %v2567
        %v2569 = vpop.f32.mrf.mxu0
        %v2570 = vadd.f32 %v2313, %v2569
        %2571 = vmatprep.mubr.f32.mxu0 %v1321
        %2572 = vmatmul.mubr.f32.gmra.mxu0 %v1320
        %v2573 = vpop.f32.mrf.mxu0
        %v2574 = vadd.f32 %v2317, %v2573
        %v2575 = vpop.f32.mrf.mxu0
        %v2576 = vadd.f32 %v2319, %v2575
        %2577 = vmatprep.mubr.f32.mxu0 %v1325
        %2578 = vmatmul.mubr.f32.gmra.mxu0 %v1324
        %v2579 = vpop.f32.mrf.mxu0
        %v2580 = vadd.f32 %v2323, %v2579
        %v2581 = vpop.f32.mrf.mxu0
        %v2582 = vadd.f32 %v2325, %v2581
        %2583 = vmatprep.mubr.f32.mxu0 %v1329
        %2584 = vmatmul.mubr.f32.gmra.mxu0 %v1328
        %v2585 = vpop.f32.mrf.mxu0
        %v2586 = vadd.f32 %v2329, %v2585
        %v2587 = vpop.f32.mrf.mxu0
        %v2588 = vadd.f32 %v2331, %v2587
        %2589 = vmatprep.mubr.f32.mxu0 %v1333
        %2590 = vmatmul.mubr.f32.gmra.mxu0 %v1332
        %v2591 = vpop.f32.mrf.mxu0
        %v2592 = vadd.f32 %v2335, %v2591
        %v2593 = vpop.f32.mrf.mxu0
        %v2594 = vadd.f32 %v2337, %v2593
        %2595 = vmatprep.mubr.f32.mxu0 %v1337
        %2596 = vmatmul.mubr.f32.gmra.mxu0 %v1336
        %v2597 = vpop.f32.mrf.mxu0
        %v2598 = vadd.f32 %v2341, %v2597
        %v2599 = vpop.f32.mrf.mxu0
        %v2600 = vadd.f32 %v2343, %v2599
        %2601 = vmatprep.mubr.f32.mxu0 %v1341
        %2602 = vmatmul.mubr.f32.gmra.mxu0 %v1340
        %v2603 = vpop.f32.mrf.mxu0
        %v2604 = vadd.f32 %v2347, %v2603
        %v2605 = vpop.f32.mrf.mxu0
        %v2606 = vadd.f32 %v2349, %v2605
        %2607 = vmatprep.mubr.f32.mxu0 %v1345
        %2608 = vmatmul.mubr.f32.gmra.mxu0 %v1344
        %v2609 = vpop.f32.mrf.mxu0
        %v2610 = vadd.f32 %v2353, %v2609
        %v2611 = vpop.f32.mrf.mxu0
        %v2612 = vadd.f32 %v2355, %v2611
        %2613 = vmatprep.mubr.f32.mxu0 %v1349
        %2614 = vmatmul.mubr.f32.gmra.mxu0 %v1348
        %v2615 = vpop.f32.mrf.mxu0
        %v2616 = vadd.f32 %v2359, %v2615
        %v2617 = vpop.f32.mrf.mxu0
        %v2618 = vadd.f32 %v2361, %v2617
        %2619 = vmatprep.mubr.f32.mxu0 %v1353
        %2620 = vmatmul.mubr.f32.gmra.mxu0 %v1352
        %v2621 = vpop.f32.mrf.mxu0
        %v2622 = vadd.f32 %v2365, %v2621
        %v2623 = vpop.f32.mrf.mxu0
        %v2624 = vadd.f32 %v2367, %v2623
        %2625 = vmatprep.mubr.f32.mxu0 %v1357
        %2626 = vmatmul.mubr.f32.gmra.mxu0 %v1356
        %v2627 = vpop.f32.mrf.mxu0
        %v2628 = vadd.f32 %v2371, %v2627
        %v2629 = vpop.f32.mrf.mxu0
        %v2630 = vadd.f32 %v2373, %v2629
        %2631 = vmatprep.mubr.f32.mxu0 %v1361
        %2632 = vmatmul.mubr.f32.gmra.mxu0 %v1360
        %v2633 = vpop.f32.mrf.mxu0
        %v2634 = vadd.f32 %v2377, %v2633
        %v2635 = vpop.f32.mrf.mxu0
        %v2636 = vadd.f32 %v2379, %v2635
        %2637 = vmatprep.mubr.f32.mxu0 %v1365
        %2638 = vmatmul.mubr.f32.gmra.mxu0 %v1364
        %v2639 = vpop.f32.mrf.mxu0
        %v2640 = vadd.f32 %v2383, %v2639
        %v2641 = vpop.f32.mrf.mxu0
        %v2642 = vadd.f32 %v2385, %v2641
        %2643 = vmatprep.mubr.f32.mxu0 %v1369
        %2644 = vmatmul.mubr.f32.gmra.mxu0 %v1368
        %v2645 = vpop.f32.mrf.mxu0
        %v2646 = vadd.f32 %v2389, %v2645
        %v2647 = vpop.f32.mrf.mxu0
        %v2648 = vadd.f32 %v2391, %v2647
        %2649 = vmatprep.mubr.f32.mxu0 %v1373
        %2650 = vmatmul.mubr.f32.gmra.mxu0 %v1372
        %v2651 = vpop.f32.mrf.mxu0
        %v2652 = vadd.f32 %v2395, %v2651
        %v2653 = vpop.f32.mrf.mxu0
        %v2654 = vadd.f32 %v2397, %v2653
        %2655 = vmatprep.mubr.f32.mxu0 %v1377
        %2656 = vmatmul.mubr.f32.gmra.mxu0 %v1376
        %v2657 = vpop.f32.mrf.mxu0
        %v2658 = vadd.f32 %v2401, %v2657
        %v2659 = vpop.f32.mrf.mxu0
        %v2660 = vadd.f32 %v2403, %v2659
        %2661 = vmatprep.mubr.f32.mxu0 %v1381
        %2662 = vmatmul.mubr.f32.gmra.mxu0 %v1380
        %v2663 = vpop.f32.mrf.mxu0
        %v2664 = vadd.f32 %v2407, %v2663
        %v2665 = vpop.f32.mrf.mxu0
        %v2666 = vadd.f32 %v2409, %v2665
        %2667 = vmatprep.mubr.f32.mxu0 %v1385
        %2668 = vmatmul.mubr.f32.gmra.mxu0 %v1384
        %v2669 = vpop.f32.mrf.mxu0
        %v2670 = vadd.f32 %v2413, %v2669
        %v2671 = vpop.f32.mrf.mxu0
        %v2672 = vadd.f32 %v2415, %v2671
        %2673 = vmatprep.mubr.f32.mxu0 %v1389
        %2674 = vmatmul.mubr.f32.gmra.mxu0 %v1388
        %v2675 = vpop.f32.mrf.mxu0
        %v2676 = vadd.f32 %v2419, %v2675
        %v2677 = vpop.f32.mrf.mxu0
        %v2678 = vadd.f32 %v2421, %v2677
        %2679 = vmatprep.mubr.f32.mxu0 %v1393
        %2680 = vmatmul.mubr.f32.gmra.mxu0 %v1392
        %v2681 = vpop.f32.mrf.mxu0
        %v2682 = vadd.f32 %v2425, %v2681
        %v2683 = vpop.f32.mrf.mxu0
        %v2684 = vadd.f32 %v2427, %v2683
        %2685 = vmatprep.mubr.f32.mxu0 %v1397
        %2686 = vmatmul.mubr.f32.gmra.mxu0 %v1396
        %v2687 = vpop.f32.mrf.mxu0
        %v2688 = vadd.f32 %v2431, %v2687
        %v2689 = vpop.f32.mrf.mxu0
        %v2690 = vadd.f32 %v2433, %v2689
        %2691 = vmatprep.mubr.f32.mxu0 %v1401
        %2692 = vmatmul.mubr.f32.gmra.mxu0 %v1400
        %v2693 = vpop.f32.mrf.mxu0
        %v2694 = vadd.f32 %v2437, %v2693
        %v2695 = vpop.f32.mrf.mxu0
        %v2696 = vadd.f32 %v2439, %v2695
        %2697 = vmatprep.mubr.f32.mxu0 %v1405
        %2698 = vmatmul.mubr.f32.gmra.mxu0 %v1404
        %v2699 = vpop.f32.mrf.mxu0
        %v2700 = vadd.f32 %v2443, %v2699
        %v2701 = vpop.f32.mrf.mxu0
        %v2702 = vadd.f32 %v2445, %v2701
        %2703 = vmatprep.mubr.f32.mxu0 %v1409
        %2704 = vmatmul.mubr.f32.gmra.mxu0 %v1408
        %v2705 = vpop.f32.mrf.mxu0
        %v2706 = vadd.f32 %v2449, %v2705
        %v2707 = vpop.f32.mrf.mxu0
        %v2708 = vadd.f32 %v2451, %v2707
        %2709 = vmatprep.mubr.f32.mxu0 %v1413
        %2710 = vmatmul.mubr.f32.gmra.mxu0 %v1412
        %v2711 = vpop.f32.mrf.mxu0
        %v2712 = vadd.f32 %v2455, %v2711
        %v2713 = vpop.f32.mrf.mxu0
        %v2714 = vadd.f32 %v2457, %v2713
        %2715 = vmatprep.mubr.f32.mxu0 %v1417
        %2716 = vmatmul.mubr.f32.gmra.mxu0 %v1416
        %v2717 = vpop.f32.mrf.mxu0
        %v2718 = vadd.f32 %v2461, %v2717
        %v2719 = vpop.f32.mrf.mxu0
        %v2720 = vadd.f32 %v2463, %v2719
        %2721 = vmatprep.mubr.f32.mxu0 %v1421
        %2722 = vmatmul.mubr.f32.gmra.mxu0 %v1420
        %v2723 = vpop.f32.mrf.mxu0
        %v2724 = vadd.f32 %v2467, %v2723
        %v2725 = vpop.f32.mrf.mxu0
        %v2726 = vadd.f32 %v2469, %v2725
        %2727 = vdwg.mxu0
        %v2728 = vmax.f32 %v2024, 0.0
        %v2729 = vmax.f32 %v2026, 0.0
        %v2730 = vmax.f32 %v2538, 0.0
        %v2731 = vmax.f32 %v2540, 0.0
        %v2732 = vmax.f32 %v2030, 0.0
        %v2733 = vmax.f32 %v2032, 0.0
        %v2734 = vmax.f32 %v2544, 0.0
        %v2735 = vmax.f32 %v2546, 0.0
        %v2736 = vmax.f32 %v2036, 0.0
        %v2737 = vmax.f32 %v2038, 0.0
        %v2738 = vmax.f32 %v2550, 0.0
        %v2739 = vmax.f32 %v2552, 0.0
        %v2740 = vmax.f32 %v2042, 0.0
        %v2741 = vmax.f32 %v2044, 0.0
        %v2742 = vmax.f32 %v2556, 0.0
        %v2743 = vmax.f32 %v2558, 0.0
        %v2744 = vmax.f32 %v2048, 0.0
        %v2745 = vmax.f32 %v2050, 0.0
        %v2746 = vmax.f32 %v2562, 0.0
        %v2747 = vmax.f32 %v2564, 0.0
        %v2748 = vmax.f32 %v2054, 0.0
        %v2749 = vmax.f32 %v2056, 0.0
        %v2750 = vmax.f32 %v2568, 0.0
        %v2751 = vmax.f32 %v2570, 0.0
        %v2752 = vmax.f32 %v2060, 0.0
        %v2753 = vmax.f32 %v2062, 0.0
        %v2754 = vmax.f32 %v2574, 0.0
        %v2755 = vmax.f32 %v2576, 0.0
        %v2756 = vmax.f32 %v2066, 0.0
        %v2757 = vmax.f32 %v2068, 0.0
        %v2758 = vmax.f32 %v2580, 0.0
        %v2759 = vmax.f32 %v2582, 0.0
        %v2760 = vmax.f32 %v2072, 0.0
        %v2761 = vmax.f32 %v2074, 0.0
        %v2762 = vmax.f32 %v2586, 0.0
        %v2763 = vmax.f32 %v2588, 0.0
        %v2764 = vmax.f32 %v2078, 0.0
        %v2765 = vmax.f32 %v2080, 0.0
        %v2766 = vmax.f32 %v2592, 0.0
        %v2767 = vmax.f32 %v2594, 0.0
        %v2768 = vmax.f32 %v2084, 0.0
        %v2769 = vmax.f32 %v2086, 0.0
        %v2770 = vmax.f32 %v2598, 0.0
        %v2771 = vmax.f32 %v2600, 0.0
        %v2772 = vmax.f32 %v2090, 0.0
        %v2773 = vmax.f32 %v2092, 0.0
        %v2774 = vmax.f32 %v2604, 0.0
        %v2775 = vmax.f32 %v2606, 0.0
        %v2776 = vmax.f32 %v2096, 0.0
        %v2777 = vmax.f32 %v2098, 0.0
        %v2778 = vmax.f32 %v2610, 0.0
        %v2779 = vmax.f32 %v2612, 0.0
        %v2780 = vmax.f32 %v2102, 0.0
        %v2781 = vmax.f32 %v2104, 0.0
        %v2782 = vmax.f32 %v2616, 0.0
        %v2783 = vmax.f32 %v2618, 0.0
        %v2784 = vmax.f32 %v2108, 0.0
        %v2785 = vmax.f32 %v2110, 0.0
        %v2786 = vmax.f32 %v2622, 0.0
        %v2787 = vmax.f32 %v2624, 0.0
        %v2788 = vmax.f32 %v2114, 0.0
        %v2789 = vmax.f32 %v2116, 0.0
        %v2790 = vmax.f32 %v2628, 0.0
        %v2791 = vmax.f32 %v2630, 0.0
        %v2792 = vmax.f32 %v2120, 0.0
        %v2793 = vmax.f32 %v2122, 0.0
        %v2794 = vmax.f32 %v2634, 0.0
        %v2795 = vmax.f32 %v2636, 0.0
        %v2796 = vmax.f32 %v2126, 0.0
        %v2797 = vmax.f32 %v2128, 0.0
        %v2798 = vmax.f32 %v2640, 0.0
        %v2799 = vmax.f32 %v2642, 0.0
        %v2800 = vmax.f32 %v2132, 0.0
        %v2801 = vmax.f32 %v2134, 0.0
        %v2802 = vmax.f32 %v2646, 0.0
        %v2803 = vmax.f32 %v2648, 0.0
        %v2804 = vmax.f32 %v2138, 0.0
        %v2805 = vmax.f32 %v2140, 0.0
        %v2806 = vmax.f32 %v2652, 0.0
        %v2807 = vmax.f32 %v2654, 0.0
        %v2808 = vmax.f32 %v2144, 0.0
        %v2809 = vmax.f32 %v2146, 0.0
        %v2810 = vmax.f32 %v2658, 0.0
        %v2811 = vmax.f32 %v2660, 0.0
        %v2812 = vmax.f32 %v2150, 0.0
        %v2813 = vmax.f32 %v2152, 0.0
        %v2814 = vmax.f32 %v2664, 0.0
        %v2815 = vmax.f32 %v2666, 0.0
        %v2816 = vmax.f32 %v2156, 0.0
        %v2817 = vmax.f32 %v2158, 0.0
        %v2818 = vmax.f32 %v2670, 0.0
        %v2819 = vmax.f32 %v2672, 0.0
        %v2820 = vmax.f32 %v2162, 0.0
        %v2821 = vmax.f32 %v2164, 0.0
        %v2822 = vmax.f32 %v2676, 0.0
        %v2823 = vmax.f32 %v2678, 0.0
        %v2824 = vmax.f32 %v2168, 0.0
        %v2825 = vmax.f32 %v2170, 0.0
        %v2826 = vmax.f32 %v2682, 0.0
        %v2827 = vmax.f32 %v2684, 0.0
        %v2828 = vmax.f32 %v2174, 0.0
        %v2829 = vmax.f32 %v2176, 0.0
        %v2830 = vmax.f32 %v2688, 0.0
        %v2831 = vmax.f32 %v2690, 0.0
        %v2832 = vmax.f32 %v2180, 0.0
        %v2833 = vmax.f32 %v2182, 0.0
        %v2834 = vmax.f32 %v2694, 0.0
        %v2835 = vmax.f32 %v2696, 0.0
        %v2836 = vmax.f32 %v2186, 0.0
        %v2837 = vmax.f32 %v2188, 0.0
        %v2838 = vmax.f32 %v2700, 0.0
        %v2839 = vmax.f32 %v2702, 0.0
        %v2840 = vmax.f32 %v2192, 0.0
        %v2841 = vmax.f32 %v2194, 0.0
        %v2842 = vmax.f32 %v2706, 0.0
        %v2843 = vmax.f32 %v2708, 0.0
        %v2844 = vmax.f32 %v2198, 0.0
        %v2845 = vmax.f32 %v2200, 0.0
        %v2846 = vmax.f32 %v2712, 0.0
        %v2847 = vmax.f32 %v2714, 0.0
        %v2848 = vmax.f32 %v2204, 0.0
        %v2849 = vmax.f32 %v2206, 0.0
        %v2850 = vmax.f32 %v2718, 0.0
        %v2851 = vmax.f32 %v2720, 0.0
        %v2852 = vmax.f32 %v2210, 0.0
        %v2853 = vmax.f32 %v2212, 0.0
        %v2854 = vmax.f32 %v2724, 0.0
        %v2855 = vmax.f32 %v2726, 0.0
        %v2856 = vld [vmem:[#allocation4] sm:$0xff]
        %v2857 = vld [vmem:[#allocation4 + $0x8] sm:$0xff]
        %v2858 = vld [vmem:[#allocation4 + $0x10] sm:$0xff]
        %v2859 = vld [vmem:[#allocation4 + $0x18] sm:$0xff]
        %v2860 = vld [vmem:[#allocation4 + $0x20] sm:$0xff]
        %v2861 = vld [vmem:[#allocation4 + $0x28] sm:$0xff]
        %v2862 = vld [vmem:[#allocation4 + $0x30] sm:$0xff]
        %v2863 = vld [vmem:[#allocation4 + $0x38] sm:$0xff]
        %v2864 = vld [vmem:[#allocation4 + $0x40] sm:$0xff]
        %v2865 = vld [vmem:[#allocation4 + $0x48] sm:$0xff]
        %v2866 = vld [vmem:[#allocation4 + $0x50] sm:$0xff]
        %v2867 = vld [vmem:[#allocation4 + $0x58] sm:$0xff]
        %v2868 = vld [vmem:[#allocation4 + $0x60] sm:$0xff]
        %v2869 = vld [vmem:[#allocation4 + $0x68] sm:$0xff]
        %v2870 = vld [vmem:[#allocation4 + $0x70] sm:$0xff]
        %v2871 = vld [vmem:[#allocation4 + $0x78] sm:$0xff]
        %v2872 = vld [vmem:[#allocation4 + $0x80] sm:$0xff]
        %v2873 = vld [vmem:[#allocation4 + $0x88] sm:$0xff]
        %v2874 = vld [vmem:[#allocation4 + $0x90] sm:$0xff]
        %v2875 = vld [vmem:[#allocation4 + $0x98] sm:$0xff]
        %v2876 = vld [vmem:[#allocation4 + $0xa0] sm:$0xff]
        %v2877 = vld [vmem:[#allocation4 + $0xa8] sm:$0xff]
        %v2878 = vld [vmem:[#allocation4 + $0xb0] sm:$0xff]
        %v2879 = vld [vmem:[#allocation4 + $0xb8] sm:$0xff]
        %v2880 = vld [vmem:[#allocation4 + $0xc0] sm:$0xff]
        %v2881 = vld [vmem:[#allocation4 + $0xc8] sm:$0xff]
        %v2882 = vld [vmem:[#allocation4 + $0xd0] sm:$0xff]
        %v2883 = vld [vmem:[#allocation4 + $0xd8] sm:$0xff]
        %v2884 = vld [vmem:[#allocation4 + $0xe0] sm:$0xff]
        %v2885 = vld [vmem:[#allocation4 + $0xe8] sm:$0xff]
        %v2886 = vld [vmem:[#allocation4 + $0xf0] sm:$0xff]
        %v2887 = vld [vmem:[#allocation4 + $0xf8] sm:$0xff]
        %v2888 = vld [vmem:[#allocation4 + $0x100] sm:$0xff]
        %v2889 = vld [vmem:[#allocation4 + $0x108] sm:$0xff]
        %v2890 = vld [vmem:[#allocation4 + $0x110] sm:$0xff]
        %v2891 = vld [vmem:[#allocation4 + $0x118] sm:$0xff]
        %v2892 = vld [vmem:[#allocation4 + $0x120] sm:$0xff]
        %v2893 = vld [vmem:[#allocation4 + $0x128] sm:$0xff]
        %v2894 = vld [vmem:[#allocation4 + $0x130] sm:$0xff]
        %v2895 = vld [vmem:[#allocation4 + $0x138] sm:$0xff]
        %v2896 = vld [vmem:[#allocation4 + $0x140] sm:$0xff]
        %v2897 = vld [vmem:[#allocation4 + $0x148] sm:$0xff]
        %v2898 = vld [vmem:[#allocation4 + $0x150] sm:$0xff]
        %v2899 = vld [vmem:[#allocation4 + $0x158] sm:$0xff]
        %v2900 = vld [vmem:[#allocation4 + $0x160] sm:$0xff]
        %v2901 = vld [vmem:[#allocation4 + $0x168] sm:$0xff]
        %v2902 = vld [vmem:[#allocation4 + $0x170] sm:$0xff]
        %v2903 = vld [vmem:[#allocation4 + $0x178] sm:$0xff]
        %v2904 = vld [vmem:[#allocation4 + $0x180] sm:$0xff]
        %v2905 = vld [vmem:[#allocation4 + $0x188] sm:$0xff]
        %v2906 = vld [vmem:[#allocation4 + $0x190] sm:$0xff]
        %v2907 = vld [vmem:[#allocation4 + $0x198] sm:$0xff]
        %v2908 = vld [vmem:[#allocation4 + $0x1a0] sm:$0xff]
        %v2909 = vld [vmem:[#allocation4 + $0x1a8] sm:$0xff]
        %v2910 = vld [vmem:[#allocation4 + $0x1b0] sm:$0xff]
        %v2911 = vld [vmem:[#allocation4 + $0x1b8] sm:$0xff]
        %v2912 = vld [vmem:[#allocation4 + $0x1c0] sm:$0xff]
        %v2913 = vld [vmem:[#allocation4 + $0x1c8] sm:$0xff]
        %v2914 = vld [vmem:[#allocation4 + $0x1d0] sm:$0xff]
        %v2915 = vld [vmem:[#allocation4 + $0x1d8] sm:$0xff]
        %v2916 = vld [vmem:[#allocation4 + $0x1e0] sm:$0xff]
        %v2917 = vld [vmem:[#allocation4 + $0x1e8] sm:$0xff]
        %v2918 = vld [vmem:[#allocation4 + $0x1f0] sm:$0xff]
        %v2919 = vld [vmem:[#allocation4 + $0x1f8] sm:$0xff]
        %v2920 = vld [vmem:[#allocation4 + $0x200] sm:$0xff]
        %v2921 = vld [vmem:[#allocation4 + $0x208] sm:$0xff]
        %v2922 = vld [vmem:[#allocation4 + $0x210] sm:$0xff]
        %v2923 = vld [vmem:[#allocation4 + $0x218] sm:$0xff]
        %v2924 = vld [vmem:[#allocation4 + $0x220] sm:$0xff]
        %v2925 = vld [vmem:[#allocation4 + $0x228] sm:$0xff]
        %v2926 = vld [vmem:[#allocation4 + $0x230] sm:$0xff]
        %v2927 = vld [vmem:[#allocation4 + $0x238] sm:$0xff]
        %v2928 = vld [vmem:[#allocation4 + $0x240] sm:$0xff]
        %v2929 = vld [vmem:[#allocation4 + $0x248] sm:$0xff]
        %v2930 = vld [vmem:[#allocation4 + $0x250] sm:$0xff]
        %v2931 = vld [vmem:[#allocation4 + $0x258] sm:$0xff]
        %v2932 = vld [vmem:[#allocation4 + $0x260] sm:$0xff]
        %v2933 = vld [vmem:[#allocation4 + $0x268] sm:$0xff]
        %v2934 = vld [vmem:[#allocation4 + $0x270] sm:$0xff]
        %v2935 = vld [vmem:[#allocation4 + $0x278] sm:$0xff]
        %v2936 = vld [vmem:[#allocation4 + $0x280] sm:$0xff]
        %v2937 = vld [vmem:[#allocation4 + $0x288] sm:$0xff]
        %v2938 = vld [vmem:[#allocation4 + $0x290] sm:$0xff]
        %v2939 = vld [vmem:[#allocation4 + $0x298] sm:$0xff]
        %v2940 = vld [vmem:[#allocation4 + $0x2a0] sm:$0xff]
        %v2941 = vld [vmem:[#allocation4 + $0x2a8] sm:$0xff]
        %v2942 = vld [vmem:[#allocation4 + $0x2b0] sm:$0xff]
        %v2943 = vld [vmem:[#allocation4 + $0x2b8] sm:$0xff]
        %v2944 = vld [vmem:[#allocation4 + $0x2c0] sm:$0xff]
        %v2945 = vld [vmem:[#allocation4 + $0x2c8] sm:$0xff]
        %v2946 = vld [vmem:[#allocation4 + $0x2d0] sm:$0xff]
        %v2947 = vld [vmem:[#allocation4 + $0x2d8] sm:$0xff]
        %v2948 = vld [vmem:[#allocation4 + $0x2e0] sm:$0xff]
        %v2949 = vld [vmem:[#allocation4 + $0x2e8] sm:$0xff]
        %v2950 = vld [vmem:[#allocation4 + $0x2f0] sm:$0xff]
        %v2951 = vld [vmem:[#allocation4 + $0x2f8] sm:$0xff]
        %v2952 = vld [vmem:[#allocation4 + $0x300] sm:$0xff]
        %v2953 = vld [vmem:[#allocation4 + $0x308] sm:$0xff]
        %v2954 = vld [vmem:[#allocation4 + $0x310] sm:$0xff]
        %v2955 = vld [vmem:[#allocation4 + $0x318] sm:$0xff]
        %v2956 = vld [vmem:[#allocation4 + $0x320] sm:$0xff]
        %v2957 = vld [vmem:[#allocation4 + $0x328] sm:$0xff]
        %v2958 = vld [vmem:[#allocation4 + $0x330] sm:$0xff]
        %v2959 = vld [vmem:[#allocation4 + $0x338] sm:$0xff]
        %v2960 = vld [vmem:[#allocation4 + $0x340] sm:$0xff]
        %v2961 = vld [vmem:[#allocation4 + $0x348] sm:$0xff]
        %v2962 = vld [vmem:[#allocation4 + $0x350] sm:$0xff]
        %v2963 = vld [vmem:[#allocation4 + $0x358] sm:$0xff]
        %v2964 = vld [vmem:[#allocation4 + $0x360] sm:$0xff]
        %v2965 = vld [vmem:[#allocation4 + $0x368] sm:$0xff]
        %v2966 = vld [vmem:[#allocation4 + $0x370] sm:$0xff]
        %v2967 = vld [vmem:[#allocation4 + $0x378] sm:$0xff]
        %v2968 = vld [vmem:[#allocation4 + $0x380] sm:$0xff]
        %v2969 = vld [vmem:[#allocation4 + $0x388] sm:$0xff]
        %v2970 = vld [vmem:[#allocation4 + $0x390] sm:$0xff]
        %v2971 = vld [vmem:[#allocation4 + $0x398] sm:$0xff]
        %v2972 = vld [vmem:[#allocation4 + $0x3a0] sm:$0xff]
        %v2973 = vld [vmem:[#allocation4 + $0x3a8] sm:$0xff]
        %v2974 = vld [vmem:[#allocation4 + $0x3b0] sm:$0xff]
        %v2975 = vld [vmem:[#allocation4 + $0x3b8] sm:$0xff]
        %v2976 = vld [vmem:[#allocation4 + $0x3c0] sm:$0xff]
        %v2977 = vld [vmem:[#allocation4 + $0x3c8] sm:$0xff]
        %v2978 = vld [vmem:[#allocation4 + $0x3d0] sm:$0xff]
        %v2979 = vld [vmem:[#allocation4 + $0x3d8] sm:$0xff]
        %v2980 = vld [vmem:[#allocation4 + $0x3e0] sm:$0xff]
        %v2981 = vld [vmem:[#allocation4 + $0x3e8] sm:$0xff]
        %v2982 = vld [vmem:[#allocation4 + $0x3f0] sm:$0xff]
        %v2983 = vld [vmem:[#allocation4 + $0x3f8] sm:$0xff]
        %v2984 = vld [vmem:[#allocation4 + $0x400] sm:$0xff]
        %v2985 = vld [vmem:[#allocation4 + $0x408] sm:$0xff]
        %v2986 = vld [vmem:[#allocation4 + $0x410] sm:$0xff]
        %v2987 = vld [vmem:[#allocation4 + $0x418] sm:$0xff]
        %v2988 = vld [vmem:[#allocation4 + $0x420] sm:$0xff]
        %v2989 = vld [vmem:[#allocation4 + $0x428] sm:$0xff]
        %v2990 = vld [vmem:[#allocation4 + $0x430] sm:$0xff]
        %v2991 = vld [vmem:[#allocation4 + $0x438] sm:$0xff]
        %v2992 = vld [vmem:[#allocation4 + $0x440] sm:$0xff]
        %v2993 = vld [vmem:[#allocation4 + $0x448] sm:$0xff]
        %v2994 = vld [vmem:[#allocation4 + $0x450] sm:$0xff]
        %v2995 = vld [vmem:[#allocation4 + $0x458] sm:$0xff]
        %v2996 = vld [vmem:[#allocation4 + $0x460] sm:$0xff]
        %v2997 = vld [vmem:[#allocation4 + $0x468] sm:$0xff]
        %v2998 = vld [vmem:[#allocation4 + $0x470] sm:$0xff]
        %v2999 = vld [vmem:[#allocation4 + $0x478] sm:$0xff]
        %v3000 = vld [vmem:[#allocation4 + $0x480] sm:$0xff]
        %v3001 = vld [vmem:[#allocation4 + $0x488] sm:$0xff]
        %v3002 = vld [vmem:[#allocation4 + $0x490] sm:$0xff]
        %v3003 = vld [vmem:[#allocation4 + $0x498] sm:$0xff]
        %v3004 = vld [vmem:[#allocation4 + $0x4a0] sm:$0xff]
        %v3005 = vld [vmem:[#allocation4 + $0x4a8] sm:$0xff]
        %v3006 = vld [vmem:[#allocation4 + $0x4b0] sm:$0xff]
        %v3007 = vld [vmem:[#allocation4 + $0x4b8] sm:$0xff]
        %v3008 = vld [vmem:[#allocation4 + $0x4c0] sm:$0xff]
        %v3009 = vld [vmem:[#allocation4 + $0x4c8] sm:$0xff]
        %v3010 = vld [vmem:[#allocation4 + $0x4d0] sm:$0xff]
        %v3011 = vld [vmem:[#allocation4 + $0x4d8] sm:$0xff]
        %v3012 = vld [vmem:[#allocation4 + $0x4e0] sm:$0xff]
        %v3013 = vld [vmem:[#allocation4 + $0x4e8] sm:$0xff]
        %v3014 = vld [vmem:[#allocation4 + $0x4f0] sm:$0xff]
        %v3015 = vld [vmem:[#allocation4 + $0x4f8] sm:$0xff]
        %v3016 = vld [vmem:[#allocation4 + $0x500] sm:$0xff]
        %v3017 = vld [vmem:[#allocation4 + $0x508] sm:$0xff]
        %v3018 = vld [vmem:[#allocation4 + $0x510] sm:$0xff]
        %v3019 = vld [vmem:[#allocation4 + $0x518] sm:$0xff]
        %v3020 = vld [vmem:[#allocation4 + $0x520] sm:$0xff]
        %v3021 = vld [vmem:[#allocation4 + $0x528] sm:$0xff]
        %v3022 = vld [vmem:[#allocation4 + $0x530] sm:$0xff]
        %v3023 = vld [vmem:[#allocation4 + $0x538] sm:$0xff]
        %v3024 = vld [vmem:[#allocation4 + $0x540] sm:$0xff]
        %v3025 = vld [vmem:[#allocation4 + $0x548] sm:$0xff]
        %v3026 = vld [vmem:[#allocation4 + $0x550] sm:$0xff]
        %v3027 = vld [vmem:[#allocation4 + $0x558] sm:$0xff]
        %v3028 = vld [vmem:[#allocation4 + $0x560] sm:$0xff]
        %v3029 = vld [vmem:[#allocation4 + $0x568] sm:$0xff]
        %v3030 = vld [vmem:[#allocation4 + $0x570] sm:$0xff]
        %v3031 = vld [vmem:[#allocation4 + $0x578] sm:$0xff]
        %v3032 = vld [vmem:[#allocation4 + $0x580] sm:$0xff]
        %v3033 = vld [vmem:[#allocation4 + $0x588] sm:$0xff]
        %v3034 = vld [vmem:[#allocation4 + $0x590] sm:$0xff]
        %v3035 = vld [vmem:[#allocation4 + $0x598] sm:$0xff]
        %v3036 = vld [vmem:[#allocation4 + $0x5a0] sm:$0xff]
        %v3037 = vld [vmem:[#allocation4 + $0x5a8] sm:$0xff]
        %v3038 = vld [vmem:[#allocation4 + $0x5b0] sm:$0xff]
        %v3039 = vld [vmem:[#allocation4 + $0x5b8] sm:$0xff]
        %v3040 = vld [vmem:[#allocation4 + $0x5c0] sm:$0xff]
        %v3041 = vld [vmem:[#allocation4 + $0x5c8] sm:$0xff]
        %v3042 = vld [vmem:[#allocation4 + $0x5d0] sm:$0xff]
        %v3043 = vld [vmem:[#allocation4 + $0x5d8] sm:$0xff]
        %v3044 = vld [vmem:[#allocation4 + $0x5e0] sm:$0xff]
        %v3045 = vld [vmem:[#allocation4 + $0x5e8] sm:$0xff]
        %v3046 = vld [vmem:[#allocation4 + $0x5f0] sm:$0xff]
        %v3047 = vld [vmem:[#allocation4 + $0x5f8] sm:$0xff]
        %v3048 = vld [vmem:[#allocation4 + $0x600] sm:$0xff]
        %v3049 = vld [vmem:[#allocation4 + $0x608] sm:$0xff]
        %v3050 = vld [vmem:[#allocation4 + $0x610] sm:$0xff]
        %v3051 = vld [vmem:[#allocation4 + $0x618] sm:$0xff]
        %v3052 = vld [vmem:[#allocation4 + $0x620] sm:$0xff]
        %v3053 = vld [vmem:[#allocation4 + $0x628] sm:$0xff]
        %v3054 = vld [vmem:[#allocation4 + $0x630] sm:$0xff]
        %v3055 = vld [vmem:[#allocation4 + $0x638] sm:$0xff]
        %v3056 = vld [vmem:[#allocation4 + $0x640] sm:$0xff]
        %v3057 = vld [vmem:[#allocation4 + $0x648] sm:$0xff]
        %v3058 = vld [vmem:[#allocation4 + $0x650] sm:$0xff]
        %v3059 = vld [vmem:[#allocation4 + $0x658] sm:$0xff]
        %v3060 = vld [vmem:[#allocation4 + $0x660] sm:$0xff]
        %v3061 = vld [vmem:[#allocation4 + $0x668] sm:$0xff]
        %v3062 = vld [vmem:[#allocation4 + $0x670] sm:$0xff]
        %v3063 = vld [vmem:[#allocation4 + $0x678] sm:$0xff]
        %v3064 = vld [vmem:[#allocation4 + $0x680] sm:$0xff]
        %v3065 = vld [vmem:[#allocation4 + $0x688] sm:$0xff]
        %v3066 = vld [vmem:[#allocation4 + $0x690] sm:$0xff]
        %v3067 = vld [vmem:[#allocation4 + $0x698] sm:$0xff]
        %v3068 = vld [vmem:[#allocation4 + $0x6a0] sm:$0xff]
        %v3069 = vld [vmem:[#allocation4 + $0x6a8] sm:$0xff]
        %v3070 = vld [vmem:[#allocation4 + $0x6b0] sm:$0xff]
        %v3071 = vld [vmem:[#allocation4 + $0x6b8] sm:$0xff]
        %v3072 = vld [vmem:[#allocation4 + $0x6c0] sm:$0xff]
        %v3073 = vld [vmem:[#allocation4 + $0x6c8] sm:$0xff]
        %v3074 = vld [vmem:[#allocation4 + $0x6d0] sm:$0xff]
        %v3075 = vld [vmem:[#allocation4 + $0x6d8] sm:$0xff]
        %v3076 = vld [vmem:[#allocation4 + $0x6e0] sm:$0xff]
        %v3077 = vld [vmem:[#allocation4 + $0x6e8] sm:$0xff]
        %v3078 = vld [vmem:[#allocation4 + $0x6f0] sm:$0xff]
        %v3079 = vld [vmem:[#allocation4 + $0x6f8] sm:$0xff]
        %v3080 = vld [vmem:[#allocation4 + $0x700] sm:$0xff]
        %v3081 = vld [vmem:[#allocation4 + $0x708] sm:$0xff]
        %v3082 = vld [vmem:[#allocation4 + $0x710] sm:$0xff]
        %v3083 = vld [vmem:[#allocation4 + $0x718] sm:$0xff]
        %v3084 = vld [vmem:[#allocation4 + $0x720] sm:$0xff]
        %v3085 = vld [vmem:[#allocation4 + $0x728] sm:$0xff]
        %v3086 = vld [vmem:[#allocation4 + $0x730] sm:$0xff]
        %v3087 = vld [vmem:[#allocation4 + $0x738] sm:$0xff]
        %v3088 = vld [vmem:[#allocation4 + $0x740] sm:$0xff]
        %v3089 = vld [vmem:[#allocation4 + $0x748] sm:$0xff]
        %v3090 = vld [vmem:[#allocation4 + $0x750] sm:$0xff]
        %v3091 = vld [vmem:[#allocation4 + $0x758] sm:$0xff]
        %v3092 = vld [vmem:[#allocation4 + $0x760] sm:$0xff]
        %v3093 = vld [vmem:[#allocation4 + $0x768] sm:$0xff]
        %v3094 = vld [vmem:[#allocation4 + $0x770] sm:$0xff]
        %v3095 = vld [vmem:[#allocation4 + $0x778] sm:$0xff]
        %v3096 = vld [vmem:[#allocation4 + $0x780] sm:$0xff]
        %v3097 = vld [vmem:[#allocation4 + $0x788] sm:$0xff]
        %v3098 = vld [vmem:[#allocation4 + $0x790] sm:$0xff]
        %v3099 = vld [vmem:[#allocation4 + $0x798] sm:$0xff]
        %v3100 = vld [vmem:[#allocation4 + $0x7a0] sm:$0xff]
        %v3101 = vld [vmem:[#allocation4 + $0x7a8] sm:$0xff]
        %v3102 = vld [vmem:[#allocation4 + $0x7b0] sm:$0xff]
        %v3103 = vld [vmem:[#allocation4 + $0x7b8] sm:$0xff]
        %v3104 = vld [vmem:[#allocation4 + $0x7c0] sm:$0xff]
        %v3105 = vld [vmem:[#allocation4 + $0x7c8] sm:$0xff]
        %v3106 = vld [vmem:[#allocation4 + $0x7d0] sm:$0xff]
        %v3107 = vld [vmem:[#allocation4 + $0x7d8] sm:$0xff]
        %v3108 = vld [vmem:[#allocation4 + $0x7e0] sm:$0xff]
        %v3109 = vld [vmem:[#allocation4 + $0x7e8] sm:$0xff]
        %v3110 = vld [vmem:[#allocation4 + $0x7f0] sm:$0xff]
        %v3111 = vld [vmem:[#allocation4 + $0x7f8] sm:$0xff]
        %v3112 = vld [vmem:[%s6] sm:$0xf]
        %v3114 = vlaneseq
        %v3115 = vshrl.u32 %v3114, 7
        %v3116 = vsub.s32 0, %v3115
        %v3117 = vrot.slane %v3112, %v3116
        %v3118 = vlaneseq
        %v3119 = vshrl.u32 %v3118, 7
        %v3120 = vsub.s32 1, %v3119
        %v3121 = vrot.slane %v3112, %v3120
        %v3122 = vlaneseq
        %v3123 = vshrl.u32 %v3122, 7
        %v3124 = vsub.s32 2, %v3123
        %v3125 = vrot.slane %v3112, %v3124
        %v3126 = vlaneseq
        %v3127 = vshrl.u32 %v3126, 7
        %v3128 = vsub.s32 3, %v3127
        %v3129 = vrot.slane %v3112, %v3128
        %3134 = vmatprep.subr.mxu0 %v2917
        %3135 = vmatpush1.msra.mxu0 %v2916
        %3136 = vmatprep.subr.mxu0 %v2913
        %3137 = vmatpush1.msra.mxu0 %v2912
        %3138 = vmatprep.subr.mxu0 %v2909
        %3139 = vmatpush1.msra.mxu0 %v2908
        %3140 = vmatprep.subr.mxu0 %v2905
        %3141 = vmatpush1.msra.mxu0 %v2904
        %3142 = vmatprep.subr.mxu0 %v2901
        %3143 = vmatpush1.msra.mxu0 %v2900
        %3144 = vmatprep.subr.mxu0 %v2897
        %3145 = vmatpush1.msra.mxu0 %v2896
        %3146 = vmatprep.subr.mxu0 %v2893
        %3147 = vmatpush1.msra.mxu0 %v2892
        %3148 = vmatprep.subr.mxu0 %v2889
        %3149 = vmatpush1.msra.mxu0 %v2888
        %3150 = vmatprep.subr.mxu0 %v2885
        %3151 = vmatpush1.msra.mxu0 %v2884
        %3152 = vmatprep.subr.mxu0 %v2881
        %3153 = vmatpush1.msra.mxu0 %v2880
        %3154 = vmatprep.subr.mxu0 %v2877
        %3155 = vmatpush1.msra.mxu0 %v2876
        %3156 = vmatprep.subr.mxu0 %v2873
        %3157 = vmatpush1.msra.mxu0 %v2872
        %3158 = vmatprep.subr.mxu0 %v2869
        %3159 = vmatpush1.msra.mxu0 %v2868
        %3160 = vmatprep.subr.mxu0 %v2865
        %3161 = vmatpush1.msra.mxu0 %v2864
        %3162 = vmatprep.subr.mxu0 %v2861
        %3163 = vmatpush1.msra.mxu0 %v2860
        %3164 = vmatprep.subr.mxu0 %v2857
        %3165 = vmatpush1.msra.mxu0 %v2856
        %3166 = vmatprep.subr.mxu0 %v2981
        %3167 = vmatpush2.msra.mxu0 %v2980
        %3168 = vmatprep.subr.mxu0 %v2977
        %3169 = vmatpush2.msra.mxu0 %v2976
        %3170 = vmatprep.subr.mxu0 %v2973
        %3171 = vmatpush2.msra.mxu0 %v2972
        %3172 = vmatprep.subr.mxu0 %v2969
        %3173 = vmatpush2.msra.mxu0 %v2968
        %3174 = vmatprep.subr.mxu0 %v2965
        %3175 = vmatpush2.msra.mxu0 %v2964
        %3176 = vmatprep.subr.mxu0 %v2961
        %3177 = vmatpush2.msra.mxu0 %v2960
        %3178 = vmatprep.subr.mxu0 %v2957
        %3179 = vmatpush2.msra.mxu0 %v2956
        %3180 = vmatprep.subr.mxu0 %v2953
        %3181 = vmatpush2.msra.mxu0 %v2952
        %3182 = vmatprep.subr.mxu0 %v2949
        %3183 = vmatpush2.msra.mxu0 %v2948
        %3184 = vmatprep.subr.mxu0 %v2945
        %3185 = vmatpush2.msra.mxu0 %v2944
        %3186 = vmatprep.subr.mxu0 %v2941
        %3187 = vmatpush2.msra.mxu0 %v2940
        %3188 = vmatprep.subr.mxu0 %v2937
        %3189 = vmatpush2.msra.mxu0 %v2936
        %3190 = vmatprep.subr.mxu0 %v2933
        %3191 = vmatpush2.msra.mxu0 %v2932
        %3192 = vmatprep.subr.mxu0 %v2929
        %3193 = vmatpush2.msra.mxu0 %v2928
        %3194 = vmatprep.subr.mxu0 %v2925
        %3195 = vmatpush2.msra.mxu0 %v2924
        %3196 = vmatprep.subr.mxu0 %v2921
        %3197 = vmatpush2.msra.mxu0 %v2920
        %3198 = vmatprep.mubr.f32.mxu0 %v2729
        %3199 = vmatmul.mubr.f32.gmra.mxu0 %v2728
        %v3200 = vpop.f32.mrf.mxu0
        %v3201 = vadd.f32 %v3117, %v3200
        %v3202 = vpop.f32.mrf.mxu0
        %v3203 = vadd.f32 %v3121, %v3202
        %3204 = vmatprep.mubr.f32.mxu0 %v2733
        %3205 = vmatmul.mubr.f32.gmra.mxu0 %v2732
        %v3206 = vpop.f32.mrf.mxu0
        %v3207 = vadd.f32 %v3117, %v3206
        %v3208 = vpop.f32.mrf.mxu0
        %v3209 = vadd.f32 %v3121, %v3208
        %3210 = vmatprep.mubr.f32.mxu0 %v2737
        %3211 = vmatmul.mubr.f32.gmra.mxu0 %v2736
        %v3212 = vpop.f32.mrf.mxu0
        %v3213 = vadd.f32 %v3117, %v3212
        %v3214 = vpop.f32.mrf.mxu0
        %v3215 = vadd.f32 %v3121, %v3214
        %3216 = vmatprep.mubr.f32.mxu0 %v2741
        %3217 = vmatmul.mubr.f32.gmra.mxu0 %v2740
        %v3218 = vpop.f32.mrf.mxu0
        %v3219 = vadd.f32 %v3117, %v3218
        %v3220 = vpop.f32.mrf.mxu0
        %v3221 = vadd.f32 %v3121, %v3220
        %3222 = vmatprep.mubr.f32.mxu0 %v2745
        %3223 = vmatmul.mubr.f32.gmra.mxu0 %v2744
        %v3224 = vpop.f32.mrf.mxu0
        %v3225 = vadd.f32 %v3117, %v3224
        %v3226 = vpop.f32.mrf.mxu0
        %v3227 = vadd.f32 %v3121, %v3226
        %3228 = vmatprep.mubr.f32.mxu0 %v2749
        %3229 = vmatmul.mubr.f32.gmra.mxu0 %v2748
        %v3230 = vpop.f32.mrf.mxu0
        %v3231 = vadd.f32 %v3117, %v3230
        %v3232 = vpop.f32.mrf.mxu0
        %v3233 = vadd.f32 %v3121, %v3232
        %3234 = vmatprep.mubr.f32.mxu0 %v2753
        %3235 = vmatmul.mubr.f32.gmra.mxu0 %v2752
        %v3236 = vpop.f32.mrf.mxu0
        %v3237 = vadd.f32 %v3117, %v3236
        %v3238 = vpop.f32.mrf.mxu0
        %v3239 = vadd.f32 %v3121, %v3238
        %3240 = vmatprep.mubr.f32.mxu0 %v2757
        %3241 = vmatmul.mubr.f32.gmra.mxu0 %v2756
        %v3242 = vpop.f32.mrf.mxu0
        %v3243 = vadd.f32 %v3117, %v3242
        %v3244 = vpop.f32.mrf.mxu0
        %v3245 = vadd.f32 %v3121, %v3244
        %3246 = vmatprep.mubr.f32.mxu0 %v2761
        %3247 = vmatmul.mubr.f32.gmra.mxu0 %v2760
        %v3248 = vpop.f32.mrf.mxu0
        %v3249 = vadd.f32 %v3117, %v3248
        %v3250 = vpop.f32.mrf.mxu0
        %v3251 = vadd.f32 %v3121, %v3250
        %3252 = vmatprep.mubr.f32.mxu0 %v2765
        %3253 = vmatmul.mubr.f32.gmra.mxu0 %v2764
        %v3254 = vpop.f32.mrf.mxu0
        %v3255 = vadd.f32 %v3117, %v3254
        %v3256 = vpop.f32.mrf.mxu0
        %v3257 = vadd.f32 %v3121, %v3256
        %3258 = vmatprep.mubr.f32.mxu0 %v2769
        %3259 = vmatmul.mubr.f32.gmra.mxu0 %v2768
        %v3260 = vpop.f32.mrf.mxu0
        %v3261 = vadd.f32 %v3117, %v3260
        %v3262 = vpop.f32.mrf.mxu0
        %v3263 = vadd.f32 %v3121, %v3262
        %3264 = vmatprep.mubr.f32.mxu0 %v2773
        %3265 = vmatmul.mubr.f32.gmra.mxu0 %v2772
        %v3266 = vpop.f32.mrf.mxu0
        %v3267 = vadd.f32 %v3117, %v3266
        %v3268 = vpop.f32.mrf.mxu0
        %v3269 = vadd.f32 %v3121, %v3268
        %3270 = vmatprep.mubr.f32.mxu0 %v2777
        %3271 = vmatmul.mubr.f32.gmra.mxu0 %v2776
        %v3272 = vpop.f32.mrf.mxu0
        %v3273 = vadd.f32 %v3117, %v3272
        %v3274 = vpop.f32.mrf.mxu0
        %v3275 = vadd.f32 %v3121, %v3274
        %3276 = vmatprep.mubr.f32.mxu0 %v2781
        %3277 = vmatmul.mubr.f32.gmra.mxu0 %v2780
        %v3278 = vpop.f32.mrf.mxu0
        %v3279 = vadd.f32 %v3117, %v3278
        %v3280 = vpop.f32.mrf.mxu0
        %v3281 = vadd.f32 %v3121, %v3280
        %3282 = vmatprep.mubr.f32.mxu0 %v2785
        %3283 = vmatmul.mubr.f32.gmra.mxu0 %v2784
        %v3284 = vpop.f32.mrf.mxu0
        %v3285 = vadd.f32 %v3117, %v3284
        %v3286 = vpop.f32.mrf.mxu0
        %v3287 = vadd.f32 %v3121, %v3286
        %3288 = vmatprep.mubr.f32.mxu0 %v2789
        %3289 = vmatmul.mubr.f32.gmra.mxu0 %v2788
        %v3290 = vpop.f32.mrf.mxu0
        %v3291 = vadd.f32 %v3117, %v3290
        %v3292 = vpop.f32.mrf.mxu0
        %v3293 = vadd.f32 %v3121, %v3292
        %3294 = vmatprep.mubr.f32.mxu0 %v2793
        %3295 = vmatmul.mubr.f32.gmra.mxu0 %v2792
        %v3296 = vpop.f32.mrf.mxu0
        %v3297 = vadd.f32 %v3117, %v3296
        %v3298 = vpop.f32.mrf.mxu0
        %v3299 = vadd.f32 %v3121, %v3298
        %3300 = vmatprep.mubr.f32.mxu0 %v2797
        %3301 = vmatmul.mubr.f32.gmra.mxu0 %v2796
        %v3302 = vpop.f32.mrf.mxu0
        %v3303 = vadd.f32 %v3117, %v3302
        %v3304 = vpop.f32.mrf.mxu0
        %v3305 = vadd.f32 %v3121, %v3304
        %3306 = vmatprep.mubr.f32.mxu0 %v2801
        %3307 = vmatmul.mubr.f32.gmra.mxu0 %v2800
        %v3308 = vpop.f32.mrf.mxu0
        %v3309 = vadd.f32 %v3117, %v3308
        %v3310 = vpop.f32.mrf.mxu0
        %v3311 = vadd.f32 %v3121, %v3310
        %3312 = vmatprep.mubr.f32.mxu0 %v2805
        %3313 = vmatmul.mubr.f32.gmra.mxu0 %v2804
        %v3314 = vpop.f32.mrf.mxu0
        %v3315 = vadd.f32 %v3117, %v3314
        %v3316 = vpop.f32.mrf.mxu0
        %v3317 = vadd.f32 %v3121, %v3316
        %3318 = vmatprep.mubr.f32.mxu0 %v2809
        %3319 = vmatmul.mubr.f32.gmra.mxu0 %v2808
        %v3320 = vpop.f32.mrf.mxu0
        %v3321 = vadd.f32 %v3117, %v3320
        %v3322 = vpop.f32.mrf.mxu0
        %v3323 = vadd.f32 %v3121, %v3322
        %3324 = vmatprep.mubr.f32.mxu0 %v2813
        %3325 = vmatmul.mubr.f32.gmra.mxu0 %v2812
        %v3326 = vpop.f32.mrf.mxu0
        %v3327 = vadd.f32 %v3117, %v3326
        %v3328 = vpop.f32.mrf.mxu0
        %v3329 = vadd.f32 %v3121, %v3328
        %3330 = vmatprep.mubr.f32.mxu0 %v2817
        %3331 = vmatmul.mubr.f32.gmra.mxu0 %v2816
        %v3332 = vpop.f32.mrf.mxu0
        %v3333 = vadd.f32 %v3117, %v3332
        %v3334 = vpop.f32.mrf.mxu0
        %v3335 = vadd.f32 %v3121, %v3334
        %3336 = vmatprep.mubr.f32.mxu0 %v2821
        %3337 = vmatmul.mubr.f32.gmra.mxu0 %v2820
        %v3338 = vpop.f32.mrf.mxu0
        %v3339 = vadd.f32 %v3117, %v3338
        %v3340 = vpop.f32.mrf.mxu0
        %v3341 = vadd.f32 %v3121, %v3340
        %3342 = vmatprep.mubr.f32.mxu0 %v2825
        %3343 = vmatmul.mubr.f32.gmra.mxu0 %v2824
        %v3344 = vpop.f32.mrf.mxu0
        %v3345 = vadd.f32 %v3117, %v3344
        %v3346 = vpop.f32.mrf.mxu0
        %v3347 = vadd.f32 %v3121, %v3346
        %3348 = vmatprep.mubr.f32.mxu0 %v2829
        %3349 = vmatmul.mubr.f32.gmra.mxu0 %v2828
        %v3350 = vpop.f32.mrf.mxu0
        %v3351 = vadd.f32 %v3117, %v3350
        %v3352 = vpop.f32.mrf.mxu0
        %v3353 = vadd.f32 %v3121, %v3352
        %3354 = vmatprep.mubr.f32.mxu0 %v2833
        %3355 = vmatmul.mubr.f32.gmra.mxu0 %v2832
        %v3356 = vpop.f32.mrf.mxu0
        %v3357 = vadd.f32 %v3117, %v3356
        %v3358 = vpop.f32.mrf.mxu0
        %v3359 = vadd.f32 %v3121, %v3358
        %3360 = vmatprep.mubr.f32.mxu0 %v2837
        %3361 = vmatmul.mubr.f32.gmra.mxu0 %v2836
        %v3362 = vpop.f32.mrf.mxu0
        %v3363 = vadd.f32 %v3117, %v3362
        %v3364 = vpop.f32.mrf.mxu0
        %v3365 = vadd.f32 %v3121, %v3364
        %3366 = vmatprep.mubr.f32.mxu0 %v2841
        %3367 = vmatmul.mubr.f32.gmra.mxu0 %v2840
        %v3368 = vpop.f32.mrf.mxu0
        %v3369 = vadd.f32 %v3117, %v3368
        %v3370 = vpop.f32.mrf.mxu0
        %v3371 = vadd.f32 %v3121, %v3370
        %3372 = vmatprep.mubr.f32.mxu0 %v2845
        %3373 = vmatmul.mubr.f32.gmra.mxu0 %v2844
        %v3374 = vpop.f32.mrf.mxu0
        %v3375 = vadd.f32 %v3117, %v3374
        %v3376 = vpop.f32.mrf.mxu0
        %v3377 = vadd.f32 %v3121, %v3376
        %3378 = vmatprep.mubr.f32.mxu0 %v2849
        %3379 = vmatmul.mubr.f32.gmra.mxu0 %v2848
        %v3380 = vpop.f32.mrf.mxu0
        %v3381 = vadd.f32 %v3117, %v3380
        %v3382 = vpop.f32.mrf.mxu0
        %v3383 = vadd.f32 %v3121, %v3382
        %3384 = vmatprep.mubr.f32.mxu0 %v2853
        %3385 = vmatmul.mubr.f32.gmra.mxu0 %v2852
        %v3386 = vpop.f32.mrf.mxu0
        %v3387 = vadd.f32 %v3117, %v3386
        %v3388 = vpop.f32.mrf.mxu0
        %v3389 = vadd.f32 %v3121, %v3388
        %3390 = vdwg.mxu0
        %3391 = vmatprep.subr.mxu0 %v3045
        %3392 = vmatpush1.msra.mxu0 %v3044
        %3393 = vmatprep.subr.mxu0 %v3041
        %3394 = vmatpush1.msra.mxu0 %v3040
        %3395 = vmatprep.subr.mxu0 %v3037
        %3396 = vmatpush1.msra.mxu0 %v3036
        %3397 = vmatprep.subr.mxu0 %v3033
        %3398 = vmatpush1.msra.mxu0 %v3032
        %3399 = vmatprep.subr.mxu0 %v3029
        %3400 = vmatpush1.msra.mxu0 %v3028
        %3401 = vmatprep.subr.mxu0 %v3025
        %3402 = vmatpush1.msra.mxu0 %v3024
        %3403 = vmatprep.subr.mxu0 %v3021
        %3404 = vmatpush1.msra.mxu0 %v3020
        %3405 = vmatprep.subr.mxu0 %v3017
        %3406 = vmatpush1.msra.mxu0 %v3016
        %3407 = vmatprep.subr.mxu0 %v3013
        %3408 = vmatpush1.msra.mxu0 %v3012
        %3409 = vmatprep.subr.mxu0 %v3009
        %3410 = vmatpush1.msra.mxu0 %v3008
        %3411 = vmatprep.subr.mxu0 %v3005
        %3412 = vmatpush1.msra.mxu0 %v3004
        %3413 = vmatprep.subr.mxu0 %v3001
        %3414 = vmatpush1.msra.mxu0 %v3000
        %3415 = vmatprep.subr.mxu0 %v2997
        %3416 = vmatpush1.msra.mxu0 %v2996
        %3417 = vmatprep.subr.mxu0 %v2993
        %3418 = vmatpush1.msra.mxu0 %v2992
        %3419 = vmatprep.subr.mxu0 %v2989
        %3420 = vmatpush1.msra.mxu0 %v2988
        %3421 = vmatprep.subr.mxu0 %v2985
        %3422 = vmatpush1.msra.mxu0 %v2984
        %3423 = vmatprep.subr.mxu0 %v3109
        %3424 = vmatpush2.msra.mxu0 %v3108
        %3425 = vmatprep.subr.mxu0 %v3105
        %3426 = vmatpush2.msra.mxu0 %v3104
        %3427 = vmatprep.subr.mxu0 %v3101
        %3428 = vmatpush2.msra.mxu0 %v3100
        %3429 = vmatprep.subr.mxu0 %v3097
        %3430 = vmatpush2.msra.mxu0 %v3096
        %3431 = vmatprep.subr.mxu0 %v3093
        %3432 = vmatpush2.msra.mxu0 %v3092
        %3433 = vmatprep.subr.mxu0 %v3089
        %3434 = vmatpush2.msra.mxu0 %v3088
        %3435 = vmatprep.subr.mxu0 %v3085
        %3436 = vmatpush2.msra.mxu0 %v3084
        %3437 = vmatprep.subr.mxu0 %v3081
        %3438 = vmatpush2.msra.mxu0 %v3080
        %3439 = vmatprep.subr.mxu0 %v3077
        %3440 = vmatpush2.msra.mxu0 %v3076
        %3441 = vmatprep.subr.mxu0 %v3073
        %3442 = vmatpush2.msra.mxu0 %v3072
        %3443 = vmatprep.subr.mxu0 %v3069
        %3444 = vmatpush2.msra.mxu0 %v3068
        %3445 = vmatprep.subr.mxu0 %v3065
        %3446 = vmatpush2.msra.mxu0 %v3064
        %3447 = vmatprep.subr.mxu0 %v3061
        %3448 = vmatpush2.msra.mxu0 %v3060
        %3449 = vmatprep.subr.mxu0 %v3057
        %3450 = vmatpush2.msra.mxu0 %v3056
        %3451 = vmatprep.subr.mxu0 %v3053
        %3452 = vmatpush2.msra.mxu0 %v3052
        %3453 = vmatprep.subr.mxu0 %v3049
        %3454 = vmatpush2.msra.mxu0 %v3048
        %3455 = vmatprep.mubr.f32.mxu0 %v2731
        %3456 = vmatmul.mubr.f32.gmra.mxu0 %v2730
        %v3457 = vpop.f32.mrf.mxu0
        %v3458 = vadd.f32 %v3201, %v3457
        %v3459 = vpop.f32.mrf.mxu0
        %v3460 = vadd.f32 %v3203, %v3459
        %3461 = vmatprep.mubr.f32.mxu0 %v2735
        %3462 = vmatmul.mubr.f32.gmra.mxu0 %v2734
        %v3463 = vpop.f32.mrf.mxu0
        %v3464 = vadd.f32 %v3207, %v3463
        %v3465 = vpop.f32.mrf.mxu0
        %v3466 = vadd.f32 %v3209, %v3465
        %3467 = vmatprep.mubr.f32.mxu0 %v2739
        %3468 = vmatmul.mubr.f32.gmra.mxu0 %v2738
        %v3469 = vpop.f32.mrf.mxu0
        %v3470 = vadd.f32 %v3213, %v3469
        %v3471 = vpop.f32.mrf.mxu0
        %v3472 = vadd.f32 %v3215, %v3471
        %3473 = vmatprep.mubr.f32.mxu0 %v2743
        %3474 = vmatmul.mubr.f32.gmra.mxu0 %v2742
        %v3475 = vpop.f32.mrf.mxu0
        %v3476 = vadd.f32 %v3219, %v3475
        %v3477 = vpop.f32.mrf.mxu0
        %v3478 = vadd.f32 %v3221, %v3477
        %3479 = vmatprep.mubr.f32.mxu0 %v2747
        %3480 = vmatmul.mubr.f32.gmra.mxu0 %v2746
        %v3481 = vpop.f32.mrf.mxu0
        %v3482 = vadd.f32 %v3225, %v3481
        %v3483 = vpop.f32.mrf.mxu0
        %v3484 = vadd.f32 %v3227, %v3483
        %3485 = vmatprep.mubr.f32.mxu0 %v2751
        %3486 = vmatmul.mubr.f32.gmra.mxu0 %v2750
        %v3487 = vpop.f32.mrf.mxu0
        %v3488 = vadd.f32 %v3231, %v3487
        %v3489 = vpop.f32.mrf.mxu0
        %v3490 = vadd.f32 %v3233, %v3489
        %3491 = vmatprep.mubr.f32.mxu0 %v2755
        %3492 = vmatmul.mubr.f32.gmra.mxu0 %v2754
        %v3493 = vpop.f32.mrf.mxu0
        %v3494 = vadd.f32 %v3237, %v3493
        %v3495 = vpop.f32.mrf.mxu0
        %v3496 = vadd.f32 %v3239, %v3495
        %3497 = vmatprep.mubr.f32.mxu0 %v2759
        %3498 = vmatmul.mubr.f32.gmra.mxu0 %v2758
        %v3499 = vpop.f32.mrf.mxu0
        %v3500 = vadd.f32 %v3243, %v3499
        %v3501 = vpop.f32.mrf.mxu0
        %v3502 = vadd.f32 %v3245, %v3501
        %3503 = vmatprep.mubr.f32.mxu0 %v2763
        %3504 = vmatmul.mubr.f32.gmra.mxu0 %v2762
        %v3505 = vpop.f32.mrf.mxu0
        %v3506 = vadd.f32 %v3249, %v3505
        %v3507 = vpop.f32.mrf.mxu0
        %v3508 = vadd.f32 %v3251, %v3507
        %3509 = vmatprep.mubr.f32.mxu0 %v2767
        %3510 = vmatmul.mubr.f32.gmra.mxu0 %v2766
        %v3511 = vpop.f32.mrf.mxu0
        %v3512 = vadd.f32 %v3255, %v3511
        %v3513 = vpop.f32.mrf.mxu0
        %v3514 = vadd.f32 %v3257, %v3513
        %3515 = vmatprep.mubr.f32.mxu0 %v2771
        %3516 = vmatmul.mubr.f32.gmra.mxu0 %v2770
        %v3517 = vpop.f32.mrf.mxu0
        %v3518 = vadd.f32 %v3261, %v3517
        %v3519 = vpop.f32.mrf.mxu0
        %v3520 = vadd.f32 %v3263, %v3519
        %3521 = vmatprep.mubr.f32.mxu0 %v2775
        %3522 = vmatmul.mubr.f32.gmra.mxu0 %v2774
        %v3523 = vpop.f32.mrf.mxu0
        %v3524 = vadd.f32 %v3267, %v3523
        %v3525 = vpop.f32.mrf.mxu0
        %v3526 = vadd.f32 %v3269, %v3525
        %3527 = vmatprep.mubr.f32.mxu0 %v2779
        %3528 = vmatmul.mubr.f32.gmra.mxu0 %v2778
        %v3529 = vpop.f32.mrf.mxu0
        %v3530 = vadd.f32 %v3273, %v3529
        %v3531 = vpop.f32.mrf.mxu0
        %v3532 = vadd.f32 %v3275, %v3531
        %3533 = vmatprep.mubr.f32.mxu0 %v2783
        %3534 = vmatmul.mubr.f32.gmra.mxu0 %v2782
        %v3535 = vpop.f32.mrf.mxu0
        %v3536 = vadd.f32 %v3279, %v3535
        %v3537 = vpop.f32.mrf.mxu0
        %v3538 = vadd.f32 %v3281, %v3537
        %3539 = vmatprep.mubr.f32.mxu0 %v2787
        %3540 = vmatmul.mubr.f32.gmra.mxu0 %v2786
        %v3541 = vpop.f32.mrf.mxu0
        %v3542 = vadd.f32 %v3285, %v3541
        %v3543 = vpop.f32.mrf.mxu0
        %v3544 = vadd.f32 %v3287, %v3543
        %3545 = vmatprep.mubr.f32.mxu0 %v2791
        %3546 = vmatmul.mubr.f32.gmra.mxu0 %v2790
        %v3547 = vpop.f32.mrf.mxu0
        %v3548 = vadd.f32 %v3291, %v3547
        %v3549 = vpop.f32.mrf.mxu0
        %v3550 = vadd.f32 %v3293, %v3549
        %3551 = vmatprep.mubr.f32.mxu0 %v2795
        %3552 = vmatmul.mubr.f32.gmra.mxu0 %v2794
        %v3553 = vpop.f32.mrf.mxu0
        %v3554 = vadd.f32 %v3297, %v3553
        %v3555 = vpop.f32.mrf.mxu0
        %v3556 = vadd.f32 %v3299, %v3555
        %3557 = vmatprep.mubr.f32.mxu0 %v2799
        %3558 = vmatmul.mubr.f32.gmra.mxu0 %v2798
        %v3559 = vpop.f32.mrf.mxu0
        %v3560 = vadd.f32 %v3303, %v3559
        %v3561 = vpop.f32.mrf.mxu0
        %v3562 = vadd.f32 %v3305, %v3561
        %3563 = vmatprep.mubr.f32.mxu0 %v2803
        %3564 = vmatmul.mubr.f32.gmra.mxu0 %v2802
        %v3565 = vpop.f32.mrf.mxu0
        %v3566 = vadd.f32 %v3309, %v3565
        %v3567 = vpop.f32.mrf.mxu0
        %v3568 = vadd.f32 %v3311, %v3567
        %3569 = vmatprep.mubr.f32.mxu0 %v2807
        %3570 = vmatmul.mubr.f32.gmra.mxu0 %v2806
        %v3571 = vpop.f32.mrf.mxu0
        %v3572 = vadd.f32 %v3315, %v3571
        %v3573 = vpop.f32.mrf.mxu0
        %v3574 = vadd.f32 %v3317, %v3573
        %3575 = vmatprep.mubr.f32.mxu0 %v2811
        %3576 = vmatmul.mubr.f32.gmra.mxu0 %v2810
        %v3577 = vpop.f32.mrf.mxu0
        %v3578 = vadd.f32 %v3321, %v3577
        %v3579 = vpop.f32.mrf.mxu0
        %v3580 = vadd.f32 %v3323, %v3579
        %3581 = vmatprep.mubr.f32.mxu0 %v2815
        %3582 = vmatmul.mubr.f32.gmra.mxu0 %v2814
        %v3583 = vpop.f32.mrf.mxu0
        %v3584 = vadd.f32 %v3327, %v3583
        %v3585 = vpop.f32.mrf.mxu0
        %v3586 = vadd.f32 %v3329, %v3585
        %3587 = vmatprep.mubr.f32.mxu0 %v2819
        %3588 = vmatmul.mubr.f32.gmra.mxu0 %v2818
        %v3589 = vpop.f32.mrf.mxu0
        %v3590 = vadd.f32 %v3333, %v3589
        %v3591 = vpop.f32.mrf.mxu0
        %v3592 = vadd.f32 %v3335, %v3591
        %3593 = vmatprep.mubr.f32.mxu0 %v2823
        %3594 = vmatmul.mubr.f32.gmra.mxu0 %v2822
        %v3595 = vpop.f32.mrf.mxu0
        %v3596 = vadd.f32 %v3339, %v3595
        %v3597 = vpop.f32.mrf.mxu0
        %v3598 = vadd.f32 %v3341, %v3597
        %3599 = vmatprep.mubr.f32.mxu0 %v2827
        %3600 = vmatmul.mubr.f32.gmra.mxu0 %v2826
        %v3601 = vpop.f32.mrf.mxu0
        %v3602 = vadd.f32 %v3345, %v3601
        %v3603 = vpop.f32.mrf.mxu0
        %v3604 = vadd.f32 %v3347, %v3603
        %3605 = vmatprep.mubr.f32.mxu0 %v2831
        %3606 = vmatmul.mubr.f32.gmra.mxu0 %v2830
        %v3607 = vpop.f32.mrf.mxu0
        %v3608 = vadd.f32 %v3351, %v3607
        %v3609 = vpop.f32.mrf.mxu0
        %v3610 = vadd.f32 %v3353, %v3609
        %3611 = vmatprep.mubr.f32.mxu0 %v2835
        %3612 = vmatmul.mubr.f32.gmra.mxu0 %v2834
        %v3613 = vpop.f32.mrf.mxu0
        %v3614 = vadd.f32 %v3357, %v3613
        %v3615 = vpop.f32.mrf.mxu0
        %v3616 = vadd.f32 %v3359, %v3615
        %3617 = vmatprep.mubr.f32.mxu0 %v2839
        %3618 = vmatmul.mubr.f32.gmra.mxu0 %v2838
        %v3619 = vpop.f32.mrf.mxu0
        %v3620 = vadd.f32 %v3363, %v3619
        %v3621 = vpop.f32.mrf.mxu0
        %v3622 = vadd.f32 %v3365, %v3621
        %3623 = vmatprep.mubr.f32.mxu0 %v2843
        %3624 = vmatmul.mubr.f32.gmra.mxu0 %v2842
        %v3625 = vpop.f32.mrf.mxu0
        %v3626 = vadd.f32 %v3369, %v3625
        %v3627 = vpop.f32.mrf.mxu0
        %v3628 = vadd.f32 %v3371, %v3627
        %3629 = vmatprep.mubr.f32.mxu0 %v2847
        %3630 = vmatmul.mubr.f32.gmra.mxu0 %v2846
        %v3631 = vpop.f32.mrf.mxu0
        %v3632 = vadd.f32 %v3375, %v3631
        %v3633 = vpop.f32.mrf.mxu0
        %v3634 = vadd.f32 %v3377, %v3633
        %3635 = vmatprep.mubr.f32.mxu0 %v2851
        %3636 = vmatmul.mubr.f32.gmra.mxu0 %v2850
        %v3637 = vpop.f32.mrf.mxu0
        %v3638 = vadd.f32 %v3381, %v3637
        %v3639 = vpop.f32.mrf.mxu0
        %v3640 = vadd.f32 %v3383, %v3639
        %3641 = vmatprep.mubr.f32.mxu0 %v2855
        %3642 = vmatmul.mubr.f32.gmra.mxu0 %v2854
        %v3643 = vpop.f32.mrf.mxu0
        %v3644 = vadd.f32 %v3387, %v3643
        %v3645 = vpop.f32.mrf.mxu0
        %v3646 = vadd.f32 %v3389, %v3645
        %3647 = vdwg.mxu0
        %3648 = vmatprep.subr.mxu0 %v2919
        %3649 = vmatpush1.msra.mxu0 %v2918
        %3650 = vmatprep.subr.mxu0 %v2915
        %3651 = vmatpush1.msra.mxu0 %v2914
        %3652 = vmatprep.subr.mxu0 %v2911
        %3653 = vmatpush1.msra.mxu0 %v2910
        %3654 = vmatprep.subr.mxu0 %v2907
        %3655 = vmatpush1.msra.mxu0 %v2906
        %3656 = vmatprep.subr.mxu0 %v2903
        %3657 = vmatpush1.msra.mxu0 %v2902
        %3658 = vmatprep.subr.mxu0 %v2899
        %3659 = vmatpush1.msra.mxu0 %v2898
        %3660 = vmatprep.subr.mxu0 %v2895
        %3661 = vmatpush1.msra.mxu0 %v2894
        %3662 = vmatprep.subr.mxu0 %v2891
        %3663 = vmatpush1.msra.mxu0 %v2890
        %3664 = vmatprep.subr.mxu0 %v2887
        %3665 = vmatpush1.msra.mxu0 %v2886
        %3666 = vmatprep.subr.mxu0 %v2883
        %3667 = vmatpush1.msra.mxu0 %v2882
        %3668 = vmatprep.subr.mxu0 %v2879
        %3669 = vmatpush1.msra.mxu0 %v2878
        %3670 = vmatprep.subr.mxu0 %v2875
        %3671 = vmatpush1.msra.mxu0 %v2874
        %3672 = vmatprep.subr.mxu0 %v2871
        %3673 = vmatpush1.msra.mxu0 %v2870
        %3674 = vmatprep.subr.mxu0 %v2867
        %3675 = vmatpush1.msra.mxu0 %v2866
        %3676 = vmatprep.subr.mxu0 %v2863
        %3677 = vmatpush1.msra.mxu0 %v2862
        %3678 = vmatprep.subr.mxu0 %v2859
        %3679 = vmatpush1.msra.mxu0 %v2858
        %3680 = vmatprep.subr.mxu0 %v2983
        %3681 = vmatpush2.msra.mxu0 %v2982
        %3682 = vmatprep.subr.mxu0 %v2979
        %3683 = vmatpush2.msra.mxu0 %v2978
        %3684 = vmatprep.subr.mxu0 %v2975
        %3685 = vmatpush2.msra.mxu0 %v2974
        %3686 = vmatprep.subr.mxu0 %v2971
        %3687 = vmatpush2.msra.mxu0 %v2970
        %3688 = vmatprep.subr.mxu0 %v2967
        %3689 = vmatpush2.msra.mxu0 %v2966
        %3690 = vmatprep.subr.mxu0 %v2963
        %3691 = vmatpush2.msra.mxu0 %v2962
        %3692 = vmatprep.subr.mxu0 %v2959
        %3693 = vmatpush2.msra.mxu0 %v2958
        %3694 = vmatprep.subr.mxu0 %v2955
        %3695 = vmatpush2.msra.mxu0 %v2954
        %3696 = vmatprep.subr.mxu0 %v2951
        %3697 = vmatpush2.msra.mxu0 %v2950
        %3698 = vmatprep.subr.mxu0 %v2947
        %3699 = vmatpush2.msra.mxu0 %v2946
        %3700 = vmatprep.subr.mxu0 %v2943
        %3701 = vmatpush2.msra.mxu0 %v2942
        %3702 = vmatprep.subr.mxu0 %v2939
        %3703 = vmatpush2.msra.mxu0 %v2938
        %3704 = vmatprep.subr.mxu0 %v2935
        %3705 = vmatpush2.msra.mxu0 %v2934
        %3706 = vmatprep.subr.mxu0 %v2931
        %3707 = vmatpush2.msra.mxu0 %v2930
        %3708 = vmatprep.subr.mxu0 %v2927
        %3709 = vmatpush2.msra.mxu0 %v2926
        %3710 = vmatprep.subr.mxu0 %v2923
        %3711 = vmatpush2.msra.mxu0 %v2922
        %3712 = vmatprep.mubr.f32.mxu0 %v2729
        %3713 = vmatmul.mubr.f32.gmra.mxu0 %v2728
        %v3714 = vpop.f32.mrf.mxu0
        %v3715 = vadd.f32 %v3125, %v3714
        %v3716 = vpop.f32.mrf.mxu0
        %v3717 = vadd.f32 %v3129, %v3716
        %3718 = vmatprep.mubr.f32.mxu0 %v2733
        %3719 = vmatmul.mubr.f32.gmra.mxu0 %v2732
        %v3720 = vpop.f32.mrf.mxu0
        %v3721 = vadd.f32 %v3125, %v3720
        %v3722 = vpop.f32.mrf.mxu0
        %v3723 = vadd.f32 %v3129, %v3722
        %3724 = vmatprep.mubr.f32.mxu0 %v2737
        %3725 = vmatmul.mubr.f32.gmra.mxu0 %v2736
        %v3726 = vpop.f32.mrf.mxu0
        %v3727 = vadd.f32 %v3125, %v3726
        %v3728 = vpop.f32.mrf.mxu0
        %v3729 = vadd.f32 %v3129, %v3728
        %3730 = vmatprep.mubr.f32.mxu0 %v2741
        %3731 = vmatmul.mubr.f32.gmra.mxu0 %v2740
        %v3732 = vpop.f32.mrf.mxu0
        %v3733 = vadd.f32 %v3125, %v3732
        %v3734 = vpop.f32.mrf.mxu0
        %v3735 = vadd.f32 %v3129, %v3734
        %3736 = vmatprep.mubr.f32.mxu0 %v2745
        %3737 = vmatmul.mubr.f32.gmra.mxu0 %v2744
        %v3738 = vpop.f32.mrf.mxu0
        %v3739 = vadd.f32 %v3125, %v3738
        %v3740 = vpop.f32.mrf.mxu0
        %v3741 = vadd.f32 %v3129, %v3740
        %3742 = vmatprep.mubr.f32.mxu0 %v2749
        %3743 = vmatmul.mubr.f32.gmra.mxu0 %v2748
        %v3744 = vpop.f32.mrf.mxu0
        %v3745 = vadd.f32 %v3125, %v3744
        %v3746 = vpop.f32.mrf.mxu0
        %v3747 = vadd.f32 %v3129, %v3746
        %3748 = vmatprep.mubr.f32.mxu0 %v2753
        %3749 = vmatmul.mubr.f32.gmra.mxu0 %v2752
        %v3750 = vpop.f32.mrf.mxu0
        %v3751 = vadd.f32 %v3125, %v3750
        %v3752 = vpop.f32.mrf.mxu0
        %v3753 = vadd.f32 %v3129, %v3752
        %3754 = vmatprep.mubr.f32.mxu0 %v2757
        %3755 = vmatmul.mubr.f32.gmra.mxu0 %v2756
        %v3756 = vpop.f32.mrf.mxu0
        %v3757 = vadd.f32 %v3125, %v3756
        %v3758 = vpop.f32.mrf.mxu0
        %v3759 = vadd.f32 %v3129, %v3758
        %3760 = vmatprep.mubr.f32.mxu0 %v2761
        %3761 = vmatmul.mubr.f32.gmra.mxu0 %v2760
        %v3762 = vpop.f32.mrf.mxu0
        %v3763 = vadd.f32 %v3125, %v3762
        %v3764 = vpop.f32.mrf.mxu0
        %v3765 = vadd.f32 %v3129, %v3764
        %3766 = vmatprep.mubr.f32.mxu0 %v2765
        %3767 = vmatmul.mubr.f32.gmra.mxu0 %v2764
        %v3768 = vpop.f32.mrf.mxu0
        %v3769 = vadd.f32 %v3125, %v3768
        %v3770 = vpop.f32.mrf.mxu0
        %v3771 = vadd.f32 %v3129, %v3770
        %3772 = vmatprep.mubr.f32.mxu0 %v2769
        %3773 = vmatmul.mubr.f32.gmra.mxu0 %v2768
        %v3774 = vpop.f32.mrf.mxu0
        %v3775 = vadd.f32 %v3125, %v3774
        %v3776 = vpop.f32.mrf.mxu0
        %v3777 = vadd.f32 %v3129, %v3776
        %3778 = vmatprep.mubr.f32.mxu0 %v2773
        %3779 = vmatmul.mubr.f32.gmra.mxu0 %v2772
        %v3780 = vpop.f32.mrf.mxu0
        %v3781 = vadd.f32 %v3125, %v3780
        %v3782 = vpop.f32.mrf.mxu0
        %v3783 = vadd.f32 %v3129, %v3782
        %3784 = vmatprep.mubr.f32.mxu0 %v2777
        %3785 = vmatmul.mubr.f32.gmra.mxu0 %v2776
        %v3786 = vpop.f32.mrf.mxu0
        %v3787 = vadd.f32 %v3125, %v3786
        %v3788 = vpop.f32.mrf.mxu0
        %v3789 = vadd.f32 %v3129, %v3788
        %3790 = vmatprep.mubr.f32.mxu0 %v2781
        %3791 = vmatmul.mubr.f32.gmra.mxu0 %v2780
        %v3792 = vpop.f32.mrf.mxu0
        %v3793 = vadd.f32 %v3125, %v3792
        %v3794 = vpop.f32.mrf.mxu0
        %v3795 = vadd.f32 %v3129, %v3794
        %3796 = vmatprep.mubr.f32.mxu0 %v2785
        %3797 = vmatmul.mubr.f32.gmra.mxu0 %v2784
        %v3798 = vpop.f32.mrf.mxu0
        %v3799 = vadd.f32 %v3125, %v3798
        %v3800 = vpop.f32.mrf.mxu0
        %v3801 = vadd.f32 %v3129, %v3800
        %3802 = vmatprep.mubr.f32.mxu0 %v2789
        %3803 = vmatmul.mubr.f32.gmra.mxu0 %v2788
        %v3804 = vpop.f32.mrf.mxu0
        %v3805 = vadd.f32 %v3125, %v3804
        %v3806 = vpop.f32.mrf.mxu0
        %v3807 = vadd.f32 %v3129, %v3806
        %3808 = vmatprep.mubr.f32.mxu0 %v2793
        %3809 = vmatmul.mubr.f32.gmra.mxu0 %v2792
        %v3810 = vpop.f32.mrf.mxu0
        %v3811 = vadd.f32 %v3125, %v3810
        %v3812 = vpop.f32.mrf.mxu0
        %v3813 = vadd.f32 %v3129, %v3812
        %3814 = vmatprep.mubr.f32.mxu0 %v2797
        %3815 = vmatmul.mubr.f32.gmra.mxu0 %v2796
        %v3816 = vpop.f32.mrf.mxu0
        %v3817 = vadd.f32 %v3125, %v3816
        %v3818 = vpop.f32.mrf.mxu0
        %v3819 = vadd.f32 %v3129, %v3818
        %3820 = vmatprep.mubr.f32.mxu0 %v2801
        %3821 = vmatmul.mubr.f32.gmra.mxu0 %v2800
        %v3822 = vpop.f32.mrf.mxu0
        %v3823 = vadd.f32 %v3125, %v3822
        %v3824 = vpop.f32.mrf.mxu0
        %v3825 = vadd.f32 %v3129, %v3824
        %3826 = vmatprep.mubr.f32.mxu0 %v2805
        %3827 = vmatmul.mubr.f32.gmra.mxu0 %v2804
        %v3828 = vpop.f32.mrf.mxu0
        %v3829 = vadd.f32 %v3125, %v3828
        %v3830 = vpop.f32.mrf.mxu0
        %v3831 = vadd.f32 %v3129, %v3830
        %3832 = vmatprep.mubr.f32.mxu0 %v2809
        %3833 = vmatmul.mubr.f32.gmra.mxu0 %v2808
        %v3834 = vpop.f32.mrf.mxu0
        %v3835 = vadd.f32 %v3125, %v3834
        %v3836 = vpop.f32.mrf.mxu0
        %v3837 = vadd.f32 %v3129, %v3836
        %3838 = vmatprep.mubr.f32.mxu0 %v2813
        %3839 = vmatmul.mubr.f32.gmra.mxu0 %v2812
        %v3840 = vpop.f32.mrf.mxu0
        %v3841 = vadd.f32 %v3125, %v3840
        %v3842 = vpop.f32.mrf.mxu0
        %v3843 = vadd.f32 %v3129, %v3842
        %3844 = vmatprep.mubr.f32.mxu0 %v2817
        %3845 = vmatmul.mubr.f32.gmra.mxu0 %v2816
        %v3846 = vpop.f32.mrf.mxu0
        %v3847 = vadd.f32 %v3125, %v3846
        %v3848 = vpop.f32.mrf.mxu0
        %v3849 = vadd.f32 %v3129, %v3848
        %3850 = vmatprep.mubr.f32.mxu0 %v2821
        %3851 = vmatmul.mubr.f32.gmra.mxu0 %v2820
        %v3852 = vpop.f32.mrf.mxu0
        %v3853 = vadd.f32 %v3125, %v3852
        %v3854 = vpop.f32.mrf.mxu0
        %v3855 = vadd.f32 %v3129, %v3854
        %3856 = vmatprep.mubr.f32.mxu0 %v2825
        %3857 = vmatmul.mubr.f32.gmra.mxu0 %v2824
        %v3858 = vpop.f32.mrf.mxu0
        %v3859 = vadd.f32 %v3125, %v3858
        %v3860 = vpop.f32.mrf.mxu0
        %v3861 = vadd.f32 %v3129, %v3860
        %3862 = vmatprep.mubr.f32.mxu0 %v2829
        %3863 = vmatmul.mubr.f32.gmra.mxu0 %v2828
        %v3864 = vpop.f32.mrf.mxu0
        %v3865 = vadd.f32 %v3125, %v3864
        %v3866 = vpop.f32.mrf.mxu0
        %v3867 = vadd.f32 %v3129, %v3866
        %3868 = vmatprep.mubr.f32.mxu0 %v2833
        %3869 = vmatmul.mubr.f32.gmra.mxu0 %v2832
        %v3870 = vpop.f32.mrf.mxu0
        %v3871 = vadd.f32 %v3125, %v3870
        %v3872 = vpop.f32.mrf.mxu0
        %v3873 = vadd.f32 %v3129, %v3872
        %3874 = vmatprep.mubr.f32.mxu0 %v2837
        %3875 = vmatmul.mubr.f32.gmra.mxu0 %v2836
        %v3876 = vpop.f32.mrf.mxu0
        %v3877 = vadd.f32 %v3125, %v3876
        %v3878 = vpop.f32.mrf.mxu0
        %v3879 = vadd.f32 %v3129, %v3878
        %3880 = vmatprep.mubr.f32.mxu0 %v2841
        %3881 = vmatmul.mubr.f32.gmra.mxu0 %v2840
        %v3882 = vpop.f32.mrf.mxu0
        %v3883 = vadd.f32 %v3125, %v3882
        %v3884 = vpop.f32.mrf.mxu0
        %v3885 = vadd.f32 %v3129, %v3884
        %3886 = vmatprep.mubr.f32.mxu0 %v2845
        %3887 = vmatmul.mubr.f32.gmra.mxu0 %v2844
        %v3888 = vpop.f32.mrf.mxu0
        %v3889 = vadd.f32 %v3125, %v3888
        %v3890 = vpop.f32.mrf.mxu0
        %v3891 = vadd.f32 %v3129, %v3890
        %3892 = vmatprep.mubr.f32.mxu0 %v2849
        %3893 = vmatmul.mubr.f32.gmra.mxu0 %v2848
        %v3894 = vpop.f32.mrf.mxu0
        %v3895 = vadd.f32 %v3125, %v3894
        %v3896 = vpop.f32.mrf.mxu0
        %v3897 = vadd.f32 %v3129, %v3896
        %3898 = vmatprep.mubr.f32.mxu0 %v2853
        %3899 = vmatmul.mubr.f32.gmra.mxu0 %v2852
        %v3900 = vpop.f32.mrf.mxu0
        %v3901 = vadd.f32 %v3125, %v3900
        %v3902 = vpop.f32.mrf.mxu0
        %v3903 = vadd.f32 %v3129, %v3902
        %3904 = vdwg.mxu0
        %3905 = vmatprep.subr.mxu0 %v3047
        %3906 = vmatpush1.msra.mxu0 %v3046
        %3907 = vmatprep.subr.mxu0 %v3043
        %3908 = vmatpush1.msra.mxu0 %v3042
        %3909 = vmatprep.subr.mxu0 %v3039
        %3910 = vmatpush1.msra.mxu0 %v3038
        %3911 = vmatprep.subr.mxu0 %v3035
        %3912 = vmatpush1.msra.mxu0 %v3034
        %3913 = vmatprep.subr.mxu0 %v3031
        %3914 = vmatpush1.msra.mxu0 %v3030
        %3915 = vmatprep.subr.mxu0 %v3027
        %3916 = vmatpush1.msra.mxu0 %v3026
        %3917 = vmatprep.subr.mxu0 %v3023
        %3918 = vmatpush1.msra.mxu0 %v3022
        %3919 = vmatprep.subr.mxu0 %v3019
        %3920 = vmatpush1.msra.mxu0 %v3018
        %3921 = vmatprep.subr.mxu0 %v3015
        %3922 = vmatpush1.msra.mxu0 %v3014
        %3923 = vmatprep.subr.mxu0 %v3011
        %3924 = vmatpush1.msra.mxu0 %v3010
        %3925 = vmatprep.subr.mxu0 %v3007
        %3926 = vmatpush1.msra.mxu0 %v3006
        %3927 = vmatprep.subr.mxu0 %v3003
        %3928 = vmatpush1.msra.mxu0 %v3002
        %3929 = vmatprep.subr.mxu0 %v2999
        %3930 = vmatpush1.msra.mxu0 %v2998
        %3931 = vmatprep.subr.mxu0 %v2995
        %3932 = vmatpush1.msra.mxu0 %v2994
        %3933 = vmatprep.subr.mxu0 %v2991
        %3934 = vmatpush1.msra.mxu0 %v2990
        %3935 = vmatprep.subr.mxu0 %v2987
        %3936 = vmatpush1.msra.mxu0 %v2986
        %3937 = vmatprep.subr.mxu0 %v3111
        %3938 = vmatpush2.msra.mxu0 %v3110
        %3939 = vmatprep.subr.mxu0 %v3107
        %3940 = vmatpush2.msra.mxu0 %v3106
        %3941 = vmatprep.subr.mxu0 %v3103
        %3942 = vmatpush2.msra.mxu0 %v3102
        %3943 = vmatprep.subr.mxu0 %v3099
        %3944 = vmatpush2.msra.mxu0 %v3098
        %3945 = vmatprep.subr.mxu0 %v3095
        %3946 = vmatpush2.msra.mxu0 %v3094
        %3947 = vmatprep.subr.mxu0 %v3091
        %3948 = vmatpush2.msra.mxu0 %v3090
        %3949 = vmatprep.subr.mxu0 %v3087
        %3950 = vmatpush2.msra.mxu0 %v3086
        %3951 = vmatprep.subr.mxu0 %v3083
        %3952 = vmatpush2.msra.mxu0 %v3082
        %3953 = vmatprep.subr.mxu0 %v3079
        %3954 = vmatpush2.msra.mxu0 %v3078
        %3955 = vmatprep.subr.mxu0 %v3075
        %3956 = vmatpush2.msra.mxu0 %v3074
        %3957 = vmatprep.subr.mxu0 %v3071
        %3958 = vmatpush2.msra.mxu0 %v3070
        %3959 = vmatprep.subr.mxu0 %v3067
        %3960 = vmatpush2.msra.mxu0 %v3066
        %3961 = vmatprep.subr.mxu0 %v3063
        %3962 = vmatpush2.msra.mxu0 %v3062
        %3963 = vmatprep.subr.mxu0 %v3059
        %3964 = vmatpush2.msra.mxu0 %v3058
        %3965 = vmatprep.subr.mxu0 %v3055
        %3966 = vmatpush2.msra.mxu0 %v3054
        %3967 = vmatprep.subr.mxu0 %v3051
        %3968 = vmatpush2.msra.mxu0 %v3050
        %3969 = vmatprep.mubr.f32.mxu0 %v2731
        %3970 = vmatmul.mubr.f32.gmra.mxu0 %v2730
        %v3971 = vpop.f32.mrf.mxu0
        %v3972 = vadd.f32 %v3715, %v3971
        %v3973 = vpop.f32.mrf.mxu0
        %v3974 = vadd.f32 %v3717, %v3973
        %3975 = vmatprep.mubr.f32.mxu0 %v2735
        %3976 = vmatmul.mubr.f32.gmra.mxu0 %v2734
        %v3977 = vpop.f32.mrf.mxu0
        %v3978 = vadd.f32 %v3721, %v3977
        %v3979 = vpop.f32.mrf.mxu0
        %v3980 = vadd.f32 %v3723, %v3979
        %3981 = vmatprep.mubr.f32.mxu0 %v2739
        %3982 = vmatmul.mubr.f32.gmra.mxu0 %v2738
        %v3983 = vpop.f32.mrf.mxu0
        %v3984 = vadd.f32 %v3727, %v3983
        %v3985 = vpop.f32.mrf.mxu0
        %v3986 = vadd.f32 %v3729, %v3985
        %3987 = vmatprep.mubr.f32.mxu0 %v2743
        %3988 = vmatmul.mubr.f32.gmra.mxu0 %v2742
        %v3989 = vpop.f32.mrf.mxu0
        %v3990 = vadd.f32 %v3733, %v3989
        %v3991 = vpop.f32.mrf.mxu0
        %v3992 = vadd.f32 %v3735, %v3991
        %3993 = vmatprep.mubr.f32.mxu0 %v2747
        %3994 = vmatmul.mubr.f32.gmra.mxu0 %v2746
        %v3995 = vpop.f32.mrf.mxu0
        %v3996 = vadd.f32 %v3739, %v3995
        %v3997 = vpop.f32.mrf.mxu0
        %v3998 = vadd.f32 %v3741, %v3997
        %3999 = vmatprep.mubr.f32.mxu0 %v2751
        %4000 = vmatmul.mubr.f32.gmra.mxu0 %v2750
        %v4001 = vpop.f32.mrf.mxu0
        %v4002 = vadd.f32 %v3745, %v4001
        %v4003 = vpop.f32.mrf.mxu0
        %v4004 = vadd.f32 %v3747, %v4003
        %4005 = vmatprep.mubr.f32.mxu0 %v2755
        %4006 = vmatmul.mubr.f32.gmra.mxu0 %v2754
        %v4007 = vpop.f32.mrf.mxu0
        %v4008 = vadd.f32 %v3751, %v4007
        %v4009 = vpop.f32.mrf.mxu0
        %v4010 = vadd.f32 %v3753, %v4009
        %4011 = vmatprep.mubr.f32.mxu0 %v2759
        %4012 = vmatmul.mubr.f32.gmra.mxu0 %v2758
        %v4013 = vpop.f32.mrf.mxu0
        %v4014 = vadd.f32 %v3757, %v4013
        %v4015 = vpop.f32.mrf.mxu0
        %v4016 = vadd.f32 %v3759, %v4015
        %4017 = vmatprep.mubr.f32.mxu0 %v2763
        %4018 = vmatmul.mubr.f32.gmra.mxu0 %v2762
        %v4019 = vpop.f32.mrf.mxu0
        %v4020 = vadd.f32 %v3763, %v4019
        %v4021 = vpop.f32.mrf.mxu0
        %v4022 = vadd.f32 %v3765, %v4021
        %4023 = vmatprep.mubr.f32.mxu0 %v2767
        %4024 = vmatmul.mubr.f32.gmra.mxu0 %v2766
        %v4025 = vpop.f32.mrf.mxu0
        %v4026 = vadd.f32 %v3769, %v4025
        %v4027 = vpop.f32.mrf.mxu0
        %v4028 = vadd.f32 %v3771, %v4027
        %4029 = vmatprep.mubr.f32.mxu0 %v2771
        %4030 = vmatmul.mubr.f32.gmra.mxu0 %v2770
        %v4031 = vpop.f32.mrf.mxu0
        %v4032 = vadd.f32 %v3775, %v4031
        %v4033 = vpop.f32.mrf.mxu0
        %v4034 = vadd.f32 %v3777, %v4033
        %4035 = vmatprep.mubr.f32.mxu0 %v2775
        %4036 = vmatmul.mubr.f32.gmra.mxu0 %v2774
        %v4037 = vpop.f32.mrf.mxu0
        %v4038 = vadd.f32 %v3781, %v4037
        %v4039 = vpop.f32.mrf.mxu0
        %v4040 = vadd.f32 %v3783, %v4039
        %4041 = vmatprep.mubr.f32.mxu0 %v2779
        %4042 = vmatmul.mubr.f32.gmra.mxu0 %v2778
        %v4043 = vpop.f32.mrf.mxu0
        %v4044 = vadd.f32 %v3787, %v4043
        %v4045 = vpop.f32.mrf.mxu0
        %v4046 = vadd.f32 %v3789, %v4045
        %4047 = vmatprep.mubr.f32.mxu0 %v2783
        %4048 = vmatmul.mubr.f32.gmra.mxu0 %v2782
        %v4049 = vpop.f32.mrf.mxu0
        %v4050 = vadd.f32 %v3793, %v4049
        %v4051 = vpop.f32.mrf.mxu0
        %v4052 = vadd.f32 %v3795, %v4051
        %4053 = vmatprep.mubr.f32.mxu0 %v2787
        %4054 = vmatmul.mubr.f32.gmra.mxu0 %v2786
        %v4055 = vpop.f32.mrf.mxu0
        %v4056 = vadd.f32 %v3799, %v4055
        %v4057 = vpop.f32.mrf.mxu0
        %v4058 = vadd.f32 %v3801, %v4057
        %4059 = vmatprep.mubr.f32.mxu0 %v2791
        %4060 = vmatmul.mubr.f32.gmra.mxu0 %v2790
        %v4061 = vpop.f32.mrf.mxu0
        %v4062 = vadd.f32 %v3805, %v4061
        %v4063 = vpop.f32.mrf.mxu0
        %v4064 = vadd.f32 %v3807, %v4063
        %4065 = vmatprep.mubr.f32.mxu0 %v2795
        %4066 = vmatmul.mubr.f32.gmra.mxu0 %v2794
        %v4067 = vpop.f32.mrf.mxu0
        %v4068 = vadd.f32 %v3811, %v4067
        %v4069 = vpop.f32.mrf.mxu0
        %v4070 = vadd.f32 %v3813, %v4069
        %4071 = vmatprep.mubr.f32.mxu0 %v2799
        %4072 = vmatmul.mubr.f32.gmra.mxu0 %v2798
        %v4073 = vpop.f32.mrf.mxu0
        %v4074 = vadd.f32 %v3817, %v4073
        %v4075 = vpop.f32.mrf.mxu0
        %v4076 = vadd.f32 %v3819, %v4075
        %4077 = vmatprep.mubr.f32.mxu0 %v2803
        %4078 = vmatmul.mubr.f32.gmra.mxu0 %v2802
        %v4079 = vpop.f32.mrf.mxu0
        %v4080 = vadd.f32 %v3823, %v4079
        %v4081 = vpop.f32.mrf.mxu0
        %v4082 = vadd.f32 %v3825, %v4081
        %4083 = vmatprep.mubr.f32.mxu0 %v2807
        %4084 = vmatmul.mubr.f32.gmra.mxu0 %v2806
        %v4085 = vpop.f32.mrf.mxu0
        %v4086 = vadd.f32 %v3829, %v4085
        %v4087 = vpop.f32.mrf.mxu0
        %v4088 = vadd.f32 %v3831, %v4087
        %4089 = vmatprep.mubr.f32.mxu0 %v2811
        %4090 = vmatmul.mubr.f32.gmra.mxu0 %v2810
        %v4091 = vpop.f32.mrf.mxu0
        %v4092 = vadd.f32 %v3835, %v4091
        %v4093 = vpop.f32.mrf.mxu0
        %v4094 = vadd.f32 %v3837, %v4093
        %4095 = vmatprep.mubr.f32.mxu0 %v2815
        %4096 = vmatmul.mubr.f32.gmra.mxu0 %v2814
        %v4097 = vpop.f32.mrf.mxu0
        %v4098 = vadd.f32 %v3841, %v4097
        %v4099 = vpop.f32.mrf.mxu0
        %v4100 = vadd.f32 %v3843, %v4099
        %4101 = vmatprep.mubr.f32.mxu0 %v2819
        %4102 = vmatmul.mubr.f32.gmra.mxu0 %v2818
        %v4103 = vpop.f32.mrf.mxu0
        %v4104 = vadd.f32 %v3847, %v4103
        %v4105 = vpop.f32.mrf.mxu0
        %v4106 = vadd.f32 %v3849, %v4105
        %4107 = vmatprep.mubr.f32.mxu0 %v2823
        %4108 = vmatmul.mubr.f32.gmra.mxu0 %v2822
        %v4109 = vpop.f32.mrf.mxu0
        %v4110 = vadd.f32 %v3853, %v4109
        %v4111 = vpop.f32.mrf.mxu0
        %v4112 = vadd.f32 %v3855, %v4111
        %4113 = vmatprep.mubr.f32.mxu0 %v2827
        %4114 = vmatmul.mubr.f32.gmra.mxu0 %v2826
        %v4115 = vpop.f32.mrf.mxu0
        %v4116 = vadd.f32 %v3859, %v4115
        %v4117 = vpop.f32.mrf.mxu0
        %v4118 = vadd.f32 %v3861, %v4117
        %4119 = vmatprep.mubr.f32.mxu0 %v2831
        %4120 = vmatmul.mubr.f32.gmra.mxu0 %v2830
        %v4121 = vpop.f32.mrf.mxu0
        %v4122 = vadd.f32 %v3865, %v4121
        %v4123 = vpop.f32.mrf.mxu0
        %v4124 = vadd.f32 %v3867, %v4123
        %4125 = vmatprep.mubr.f32.mxu0 %v2835
        %4126 = vmatmul.mubr.f32.gmra.mxu0 %v2834
        %v4127 = vpop.f32.mrf.mxu0
        %v4128 = vadd.f32 %v3871, %v4127
        %v4129 = vpop.f32.mrf.mxu0
        %v4130 = vadd.f32 %v3873, %v4129
        %4131 = vmatprep.mubr.f32.mxu0 %v2839
        %4132 = vmatmul.mubr.f32.gmra.mxu0 %v2838
        %v4133 = vpop.f32.mrf.mxu0
        %v4134 = vadd.f32 %v3877, %v4133
        %v4135 = vpop.f32.mrf.mxu0
        %v4136 = vadd.f32 %v3879, %v4135
        %4137 = vmatprep.mubr.f32.mxu0 %v2843
        %4138 = vmatmul.mubr.f32.gmra.mxu0 %v2842
        %v4139 = vpop.f32.mrf.mxu0
        %v4140 = vadd.f32 %v3883, %v4139
        %v4141 = vpop.f32.mrf.mxu0
        %v4142 = vadd.f32 %v3885, %v4141
        %4143 = vmatprep.mubr.f32.mxu0 %v2847
        %4144 = vmatmul.mubr.f32.gmra.mxu0 %v2846
        %v4145 = vpop.f32.mrf.mxu0
        %v4146 = vadd.f32 %v3889, %v4145
        %v4147 = vpop.f32.mrf.mxu0
        %v4148 = vadd.f32 %v3891, %v4147
        %4149 = vmatprep.mubr.f32.mxu0 %v2851
        %4150 = vmatmul.mubr.f32.gmra.mxu0 %v2850
        %v4151 = vpop.f32.mrf.mxu0
        %v4152 = vadd.f32 %v3895, %v4151
        %v4153 = vpop.f32.mrf.mxu0
        %v4154 = vadd.f32 %v3897, %v4153
        %4155 = vmatprep.mubr.f32.mxu0 %v2855
        %4156 = vmatmul.mubr.f32.gmra.mxu0 %v2854
        %v4157 = vpop.f32.mrf.mxu0
        %v4158 = vadd.f32 %v3901, %v4157
        %v4159 = vpop.f32.mrf.mxu0
        %v4160 = vadd.f32 %v3903, %v4159
        %4161 = vdwg.mxu0
        %v4162 = vmax.f32 %v3458, 0.0
        %v4163 = vmax.f32 %v3460, 0.0
        %v4164 = vmax.f32 %v3972, 0.0
        %v4165 = vmax.f32 %v3974, 0.0
        %v4166 = vmax.f32 %v3464, 0.0
        %v4167 = vmax.f32 %v3466, 0.0
        %v4168 = vmax.f32 %v3978, 0.0
        %v4169 = vmax.f32 %v3980, 0.0
        %v4170 = vmax.f32 %v3470, 0.0
        %v4171 = vmax.f32 %v3472, 0.0
        %v4172 = vmax.f32 %v3984, 0.0
        %v4173 = vmax.f32 %v3986, 0.0
        %v4174 = vmax.f32 %v3476, 0.0
        %v4175 = vmax.f32 %v3478, 0.0
        %v4176 = vmax.f32 %v3990, 0.0
        %v4177 = vmax.f32 %v3992, 0.0
        %v4178 = vmax.f32 %v3482, 0.0
        %v4179 = vmax.f32 %v3484, 0.0
        %v4180 = vmax.f32 %v3996, 0.0
        %v4181 = vmax.f32 %v3998, 0.0
        %v4182 = vmax.f32 %v3488, 0.0
        %v4183 = vmax.f32 %v3490, 0.0
        %v4184 = vmax.f32 %v4002, 0.0
        %v4185 = vmax.f32 %v4004, 0.0
        %v4186 = vmax.f32 %v3494, 0.0
        %v4187 = vmax.f32 %v3496, 0.0
        %v4188 = vmax.f32 %v4008, 0.0
        %v4189 = vmax.f32 %v4010, 0.0
        %v4190 = vmax.f32 %v3500, 0.0
        %v4191 = vmax.f32 %v3502, 0.0
        %v4192 = vmax.f32 %v4014, 0.0
        %v4193 = vmax.f32 %v4016, 0.0
        %v4194 = vmax.f32 %v3506, 0.0
        %v4195 = vmax.f32 %v3508, 0.0
        %v4196 = vmax.f32 %v4020, 0.0
        %v4197 = vmax.f32 %v4022, 0.0
        %v4198 = vmax.f32 %v3512, 0.0
        %v4199 = vmax.f32 %v3514, 0.0
        %v4200 = vmax.f32 %v4026, 0.0
        %v4201 = vmax.f32 %v4028, 0.0
        %v4202 = vmax.f32 %v3518, 0.0
        %v4203 = vmax.f32 %v3520, 0.0
        %v4204 = vmax.f32 %v4032, 0.0
        %v4205 = vmax.f32 %v4034, 0.0
        %v4206 = vmax.f32 %v3524, 0.0
        %v4207 = vmax.f32 %v3526, 0.0
        %v4208 = vmax.f32 %v4038, 0.0
        %v4209 = vmax.f32 %v4040, 0.0
        %v4210 = vmax.f32 %v3530, 0.0
        %v4211 = vmax.f32 %v3532, 0.0
        %v4212 = vmax.f32 %v4044, 0.0
        %v4213 = vmax.f32 %v4046, 0.0
        %v4214 = vmax.f32 %v3536, 0.0
        %v4215 = vmax.f32 %v3538, 0.0
        %v4216 = vmax.f32 %v4050, 0.0
        %v4217 = vmax.f32 %v4052, 0.0
        %v4218 = vmax.f32 %v3542, 0.0
        %v4219 = vmax.f32 %v3544, 0.0
        %v4220 = vmax.f32 %v4056, 0.0
        %v4221 = vmax.f32 %v4058, 0.0
        %v4222 = vmax.f32 %v3548, 0.0
        %v4223 = vmax.f32 %v3550, 0.0
        %v4224 = vmax.f32 %v4062, 0.0
        %v4225 = vmax.f32 %v4064, 0.0
        %v4226 = vmax.f32 %v3554, 0.0
        %v4227 = vmax.f32 %v3556, 0.0
        %v4228 = vmax.f32 %v4068, 0.0
        %v4229 = vmax.f32 %v4070, 0.0
        %v4230 = vmax.f32 %v3560, 0.0
        %v4231 = vmax.f32 %v3562, 0.0
        %v4232 = vmax.f32 %v4074, 0.0
        %v4233 = vmax.f32 %v4076, 0.0
        %v4234 = vmax.f32 %v3566, 0.0
        %v4235 = vmax.f32 %v3568, 0.0
        %v4236 = vmax.f32 %v4080, 0.0
        %v4237 = vmax.f32 %v4082, 0.0
        %v4238 = vmax.f32 %v3572, 0.0
        %v4239 = vmax.f32 %v3574, 0.0
        %v4240 = vmax.f32 %v4086, 0.0
        %v4241 = vmax.f32 %v4088, 0.0
        %v4242 = vmax.f32 %v3578, 0.0
        %v4243 = vmax.f32 %v3580, 0.0
        %v4244 = vmax.f32 %v4092, 0.0
        %v4245 = vmax.f32 %v4094, 0.0
        %v4246 = vmax.f32 %v3584, 0.0
        %v4247 = vmax.f32 %v3586, 0.0
        %v4248 = vmax.f32 %v4098, 0.0
        %v4249 = vmax.f32 %v4100, 0.0
        %v4250 = vmax.f32 %v3590, 0.0
        %v4251 = vmax.f32 %v3592, 0.0
        %v4252 = vmax.f32 %v4104, 0.0
        %v4253 = vmax.f32 %v4106, 0.0
        %v4254 = vmax.f32 %v3596, 0.0
        %v4255 = vmax.f32 %v3598, 0.0
        %v4256 = vmax.f32 %v4110, 0.0
        %v4257 = vmax.f32 %v4112, 0.0
        %v4258 = vmax.f32 %v3602, 0.0
        %v4259 = vmax.f32 %v3604, 0.0
        %v4260 = vmax.f32 %v4116, 0.0
        %v4261 = vmax.f32 %v4118, 0.0
        %v4262 = vmax.f32 %v3608, 0.0
        %v4263 = vmax.f32 %v3610, 0.0
        %v4264 = vmax.f32 %v4122, 0.0
        %v4265 = vmax.f32 %v4124, 0.0
        %v4266 = vmax.f32 %v3614, 0.0
        %v4267 = vmax.f32 %v3616, 0.0
        %v4268 = vmax.f32 %v4128, 0.0
        %v4269 = vmax.f32 %v4130, 0.0
        %v4270 = vmax.f32 %v3620, 0.0
        %v4271 = vmax.f32 %v3622, 0.0
        %v4272 = vmax.f32 %v4134, 0.0
        %v4273 = vmax.f32 %v4136, 0.0
        %v4274 = vmax.f32 %v3626, 0.0
        %v4275 = vmax.f32 %v3628, 0.0
        %v4276 = vmax.f32 %v4140, 0.0
        %v4277 = vmax.f32 %v4142, 0.0
        %v4278 = vmax.f32 %v3632, 0.0
        %v4279 = vmax.f32 %v3634, 0.0
        %v4280 = vmax.f32 %v4146, 0.0
        %v4281 = vmax.f32 %v4148, 0.0
        %v4282 = vmax.f32 %v3638, 0.0
        %v4283 = vmax.f32 %v3640, 0.0
        %v4284 = vmax.f32 %v4152, 0.0
        %v4285 = vmax.f32 %v4154, 0.0
        %v4286 = vmax.f32 %v3644, 0.0
        %v4287 = vmax.f32 %v3646, 0.0
        %v4288 = vmax.f32 %v4158, 0.0
        %v4289 = vmax.f32 %v4160, 0.0
        %v4290 = vld [vmem:[%s7] sm:$0xff]
        %v4291 = vld [vmem:[%s7 + $0x8] sm:$0xff]
        %v4292 = vld [vmem:[%s7 + $0x10] sm:$0xff]
        %v4293 = vld [vmem:[%s7 + $0x18] sm:$0xff]
        %v4294 = vld [vmem:[%s7 + $0x20] sm:$0xff]
        %v4295 = vld [vmem:[%s7 + $0x28] sm:$0xff]
        %v4296 = vld [vmem:[%s7 + $0x30] sm:$0xff]
        %v4297 = vld [vmem:[%s7 + $0x38] sm:$0xff]
        %v4298 = vld [vmem:[%s7 + $0x40] sm:$0xff]
        %v4299 = vld [vmem:[%s7 + $0x48] sm:$0xff]
        %v4300 = vld [vmem:[%s7 + $0x50] sm:$0xff]
        %v4301 = vld [vmem:[%s7 + $0x58] sm:$0xff]
        %v4302 = vld [vmem:[%s7 + $0x60] sm:$0xff]
        %v4303 = vld [vmem:[%s7 + $0x68] sm:$0xff]
        %v4304 = vld [vmem:[%s7 + $0x70] sm:$0xff]
        %v4305 = vld [vmem:[%s7 + $0x78] sm:$0xff]
        %v4306 = vld [vmem:[%s7 + $0x80] sm:$0xff]
        %v4307 = vld [vmem:[%s7 + $0x88] sm:$0xff]
        %v4308 = vld [vmem:[%s7 + $0x90] sm:$0xff]
        %v4309 = vld [vmem:[%s7 + $0x98] sm:$0xff]
        %v4310 = vld [vmem:[%s7 + $0xa0] sm:$0xff]
        %v4311 = vld [vmem:[%s7 + $0xa8] sm:$0xff]
        %v4312 = vld [vmem:[%s7 + $0xb0] sm:$0xff]
        %v4313 = vld [vmem:[%s7 + $0xb8] sm:$0xff]
        %v4314 = vld [vmem:[%s7 + $0xc0] sm:$0xff]
        %v4315 = vld [vmem:[%s7 + $0xc8] sm:$0xff]
        %v4316 = vld [vmem:[%s7 + $0xd0] sm:$0xff]
        %v4317 = vld [vmem:[%s7 + $0xd8] sm:$0xff]
        %v4318 = vld [vmem:[%s7 + $0xe0] sm:$0xff]
        %v4319 = vld [vmem:[%s7 + $0xe8] sm:$0xff]
        %v4320 = vld [vmem:[%s7 + $0xf0] sm:$0xff]
        %v4321 = vld [vmem:[%s7 + $0xf8] sm:$0xff]
        %v4322 = vld [vmem:[%s7 + $0x100] sm:$0xff]
        %v4323 = vld [vmem:[%s7 + $0x108] sm:$0xff]
        %v4324 = vld [vmem:[%s7 + $0x110] sm:$0xff]
        %v4325 = vld [vmem:[%s7 + $0x118] sm:$0xff]
        %v4326 = vld [vmem:[%s7 + $0x120] sm:$0xff]
        %v4327 = vld [vmem:[%s7 + $0x128] sm:$0xff]
        %v4328 = vld [vmem:[%s7 + $0x130] sm:$0xff]
        %v4329 = vld [vmem:[%s7 + $0x138] sm:$0xff]
        %v4330 = vld [vmem:[%s7 + $0x140] sm:$0xff]
        %v4331 = vld [vmem:[%s7 + $0x148] sm:$0xff]
        %v4332 = vld [vmem:[%s7 + $0x150] sm:$0xff]
        %v4333 = vld [vmem:[%s7 + $0x158] sm:$0xff]
        %v4334 = vld [vmem:[%s7 + $0x160] sm:$0xff]
        %v4335 = vld [vmem:[%s7 + $0x168] sm:$0xff]
        %v4336 = vld [vmem:[%s7 + $0x170] sm:$0xff]
        %v4337 = vld [vmem:[%s7 + $0x178] sm:$0xff]
        %v4338 = vld [vmem:[%s7 + $0x180] sm:$0xff]
        %v4339 = vld [vmem:[%s7 + $0x188] sm:$0xff]
        %v4340 = vld [vmem:[%s7 + $0x190] sm:$0xff]
        %v4341 = vld [vmem:[%s7 + $0x198] sm:$0xff]
        %v4342 = vld [vmem:[%s7 + $0x1a0] sm:$0xff]
        %v4343 = vld [vmem:[%s7 + $0x1a8] sm:$0xff]
        %v4344 = vld [vmem:[%s7 + $0x1b0] sm:$0xff]
        %v4345 = vld [vmem:[%s7 + $0x1b8] sm:$0xff]
        %v4346 = vld [vmem:[%s7 + $0x1c0] sm:$0xff]
        %v4347 = vld [vmem:[%s7 + $0x1c8] sm:$0xff]
        %v4348 = vld [vmem:[%s7 + $0x1d0] sm:$0xff]
        %v4349 = vld [vmem:[%s7 + $0x1d8] sm:$0xff]
        %v4350 = vld [vmem:[%s7 + $0x1e0] sm:$0xff]
        %v4351 = vld [vmem:[%s7 + $0x1e8] sm:$0xff]
        %v4352 = vld [vmem:[%s7 + $0x1f0] sm:$0xff]
        %v4353 = vld [vmem:[%s7 + $0x1f8] sm:$0xff]
        %v4354 = vld [vmem:[%s8] sm:$0x1]
        %v4356 = vlaneseq
        %v4357 = vshrl.u32 %v4356, 7
        %v4358 = vsub.s32 0, %v4357
        %v4359 = vrot.slane %v4354, %v4358
        %4361 = vmatprep.subr.mxu0 0.0
        %4362 = vmatpush1.msra.mxu0 %v4305
        %4363 = vmatprep.subr.mxu0 0.0
        %4364 = vmatpush1.msra.mxu0 %v4304
        %4365 = vmatprep.subr.mxu0 0.0
        %4366 = vmatpush1.msra.mxu0 %v4303
        %4367 = vmatprep.subr.mxu0 0.0
        %4368 = vmatpush1.msra.mxu0 %v4302
        %4369 = vmatprep.subr.mxu0 0.0
        %4370 = vmatpush1.msra.mxu0 %v4301
        %4371 = vmatprep.subr.mxu0 0.0
        %4372 = vmatpush1.msra.mxu0 %v4300
        %4373 = vmatprep.subr.mxu0 0.0
        %4374 = vmatpush1.msra.mxu0 %v4299
        %4375 = vmatprep.subr.mxu0 0.0
        %4376 = vmatpush1.msra.mxu0 %v4298
        %4377 = vmatprep.subr.mxu0 0.0
        %4378 = vmatpush1.msra.mxu0 %v4297
        %4379 = vmatprep.subr.mxu0 0.0
        %4380 = vmatpush1.msra.mxu0 %v4296
        %4381 = vmatprep.subr.mxu0 0.0
        %4382 = vmatpush1.msra.mxu0 %v4295
        %4383 = vmatprep.subr.mxu0 0.0
        %4384 = vmatpush1.msra.mxu0 %v4294
        %4385 = vmatprep.subr.mxu0 0.0
        %4386 = vmatpush1.msra.mxu0 %v4293
        %4387 = vmatprep.subr.mxu0 0.0
        %4388 = vmatpush1.msra.mxu0 %v4292
        %4389 = vmatprep.subr.mxu0 0.0
        %4390 = vmatpush1.msra.mxu0 %v4291
        %4391 = vmatprep.subr.mxu0 0.0
        %4392 = vmatpush1.msra.mxu0 %v4290
        %4393 = vmatprep.subr.mxu0 0.0
        %4394 = vmatpush2.msra.mxu0 %v4321
        %4395 = vmatprep.subr.mxu0 0.0
        %4396 = vmatpush2.msra.mxu0 %v4320
        %4397 = vmatprep.subr.mxu0 0.0
        %4398 = vmatpush2.msra.mxu0 %v4319
        %4399 = vmatprep.subr.mxu0 0.0
        %4400 = vmatpush2.msra.mxu0 %v4318
        %4401 = vmatprep.subr.mxu0 0.0
        %4402 = vmatpush2.msra.mxu0 %v4317
        %4403 = vmatprep.subr.mxu0 0.0
        %4404 = vmatpush2.msra.mxu0 %v4316
        %4405 = vmatprep.subr.mxu0 0.0
        %4406 = vmatpush2.msra.mxu0 %v4315
        %4407 = vmatprep.subr.mxu0 0.0
        %4408 = vmatpush2.msra.mxu0 %v4314
        %4409 = vmatprep.subr.mxu0 0.0
        %4410 = vmatpush2.msra.mxu0 %v4313
        %4411 = vmatprep.subr.mxu0 0.0
        %4412 = vmatpush2.msra.mxu0 %v4312
        %4413 = vmatprep.subr.mxu0 0.0
        %4414 = vmatpush2.msra.mxu0 %v4311
        %4415 = vmatprep.subr.mxu0 0.0
        %4416 = vmatpush2.msra.mxu0 %v4310
        %4417 = vmatprep.subr.mxu0 0.0
        %4418 = vmatpush2.msra.mxu0 %v4309
        %4419 = vmatprep.subr.mxu0 0.0
        %4420 = vmatpush2.msra.mxu0 %v4308
        %4421 = vmatprep.subr.mxu0 0.0
        %4422 = vmatpush2.msra.mxu0 %v4307
        %4423 = vmatprep.subr.mxu0 0.0
        %4424 = vmatpush2.msra.mxu0 %v4306
        %4425 = vmatprep.mubr.f32.mxu0 %v4163
        %4426 = vmatmul.mubr.f32.gmra.mxu0 %v4162
        %v4427 = vpop.f32.mrf.mxu0
        %v4428 = vadd.f32 %v4359, %v4427
        %v4429 = vpop.f32.mrf.mxu0
        %4430 = vmatprep.mubr.f32.mxu0 %v4167
        %4431 = vmatmul.mubr.f32.gmra.mxu0 %v4166
        %v4432 = vpop.f32.mrf.mxu0
        %v4433 = vadd.f32 %v4359, %v4432
        %v4434 = vpop.f32.mrf.mxu0
        %4435 = vmatprep.mubr.f32.mxu0 %v4171
        %4436 = vmatmul.mubr.f32.gmra.mxu0 %v4170
        %v4437 = vpop.f32.mrf.mxu0
        %v4438 = vadd.f32 %v4359, %v4437
        %v4439 = vpop.f32.mrf.mxu0
        %4440 = vmatprep.mubr.f32.mxu0 %v4175
        %4441 = vmatmul.mubr.f32.gmra.mxu0 %v4174
        %v4442 = vpop.f32.mrf.mxu0
        %v4443 = vadd.f32 %v4359, %v4442
        %v4444 = vpop.f32.mrf.mxu0
        %4445 = vmatprep.mubr.f32.mxu0 %v4179
        %4446 = vmatmul.mubr.f32.gmra.mxu0 %v4178
        %v4447 = vpop.f32.mrf.mxu0
        %v4448 = vadd.f32 %v4359, %v4447
        %v4449 = vpop.f32.mrf.mxu0
        %4450 = vmatprep.mubr.f32.mxu0 %v4183
        %4451 = vmatmul.mubr.f32.gmra.mxu0 %v4182
        %v4452 = vpop.f32.mrf.mxu0
        %v4453 = vadd.f32 %v4359, %v4452
        %v4454 = vpop.f32.mrf.mxu0
        %4455 = vmatprep.mubr.f32.mxu0 %v4187
        %4456 = vmatmul.mubr.f32.gmra.mxu0 %v4186
        %v4457 = vpop.f32.mrf.mxu0
        %v4458 = vadd.f32 %v4359, %v4457
        %v4459 = vpop.f32.mrf.mxu0
        %4460 = vmatprep.mubr.f32.mxu0 %v4191
        %4461 = vmatmul.mubr.f32.gmra.mxu0 %v4190
        %v4462 = vpop.f32.mrf.mxu0
        %v4463 = vadd.f32 %v4359, %v4462
        %v4464 = vpop.f32.mrf.mxu0
        %4465 = vmatprep.mubr.f32.mxu0 %v4195
        %4466 = vmatmul.mubr.f32.gmra.mxu0 %v4194
        %v4467 = vpop.f32.mrf.mxu0
        %v4468 = vadd.f32 %v4359, %v4467
        %v4469 = vpop.f32.mrf.mxu0
        %4470 = vmatprep.mubr.f32.mxu0 %v4199
        %4471 = vmatmul.mubr.f32.gmra.mxu0 %v4198
        %v4472 = vpop.f32.mrf.mxu0
        %v4473 = vadd.f32 %v4359, %v4472
        %v4474 = vpop.f32.mrf.mxu0
        %4475 = vmatprep.mubr.f32.mxu0 %v4203
        %4476 = vmatmul.mubr.f32.gmra.mxu0 %v4202
        %v4477 = vpop.f32.mrf.mxu0
        %v4478 = vadd.f32 %v4359, %v4477
        %v4479 = vpop.f32.mrf.mxu0
        %4480 = vmatprep.mubr.f32.mxu0 %v4207
        %4481 = vmatmul.mubr.f32.gmra.mxu0 %v4206
        %v4482 = vpop.f32.mrf.mxu0
        %v4483 = vadd.f32 %v4359, %v4482
        %v4484 = vpop.f32.mrf.mxu0
        %4485 = vmatprep.mubr.f32.mxu0 %v4211
        %4486 = vmatmul.mubr.f32.gmra.mxu0 %v4210
        %v4487 = vpop.f32.mrf.mxu0
        %v4488 = vadd.f32 %v4359, %v4487
        %v4489 = vpop.f32.mrf.mxu0
        %4490 = vmatprep.mubr.f32.mxu0 %v4215
        %4491 = vmatmul.mubr.f32.gmra.mxu0 %v4214
        %v4492 = vpop.f32.mrf.mxu0
        %v4493 = vadd.f32 %v4359, %v4492
        %v4494 = vpop.f32.mrf.mxu0
        %4495 = vmatprep.mubr.f32.mxu0 %v4219
        %4496 = vmatmul.mubr.f32.gmra.mxu0 %v4218
        %v4497 = vpop.f32.mrf.mxu0
        %v4498 = vadd.f32 %v4359, %v4497
        %v4499 = vpop.f32.mrf.mxu0
        %4500 = vmatprep.mubr.f32.mxu0 %v4223
        %4501 = vmatmul.mubr.f32.gmra.mxu0 %v4222
        %v4502 = vpop.f32.mrf.mxu0
        %v4503 = vadd.f32 %v4359, %v4502
        %v4504 = vpop.f32.mrf.mxu0
        %4505 = vmatprep.mubr.f32.mxu0 %v4227
        %4506 = vmatmul.mubr.f32.gmra.mxu0 %v4226
        %v4507 = vpop.f32.mrf.mxu0
        %v4508 = vadd.f32 %v4359, %v4507
        %v4509 = vpop.f32.mrf.mxu0
        %4510 = vmatprep.mubr.f32.mxu0 %v4231
        %4511 = vmatmul.mubr.f32.gmra.mxu0 %v4230
        %v4512 = vpop.f32.mrf.mxu0
        %v4513 = vadd.f32 %v4359, %v4512
        %v4514 = vpop.f32.mrf.mxu0
        %4515 = vmatprep.mubr.f32.mxu0 %v4235
        %4516 = vmatmul.mubr.f32.gmra.mxu0 %v4234
        %v4517 = vpop.f32.mrf.mxu0
        %v4518 = vadd.f32 %v4359, %v4517
        %v4519 = vpop.f32.mrf.mxu0
        %4520 = vmatprep.mubr.f32.mxu0 %v4239
        %4521 = vmatmul.mubr.f32.gmra.mxu0 %v4238
        %v4522 = vpop.f32.mrf.mxu0
        %v4523 = vadd.f32 %v4359, %v4522
        %v4524 = vpop.f32.mrf.mxu0
        %4525 = vmatprep.mubr.f32.mxu0 %v4243
        %4526 = vmatmul.mubr.f32.gmra.mxu0 %v4242
        %v4527 = vpop.f32.mrf.mxu0
        %v4528 = vadd.f32 %v4359, %v4527
        %v4529 = vpop.f32.mrf.mxu0
        %4530 = vmatprep.mubr.f32.mxu0 %v4247
        %4531 = vmatmul.mubr.f32.gmra.mxu0 %v4246
        %v4532 = vpop.f32.mrf.mxu0
        %v4533 = vadd.f32 %v4359, %v4532
        %v4534 = vpop.f32.mrf.mxu0
        %4535 = vmatprep.mubr.f32.mxu0 %v4251
        %4536 = vmatmul.mubr.f32.gmra.mxu0 %v4250
        %v4537 = vpop.f32.mrf.mxu0
        %v4538 = vadd.f32 %v4359, %v4537
        %v4539 = vpop.f32.mrf.mxu0
        %4540 = vmatprep.mubr.f32.mxu0 %v4255
        %4541 = vmatmul.mubr.f32.gmra.mxu0 %v4254
        %v4542 = vpop.f32.mrf.mxu0
        %v4543 = vadd.f32 %v4359, %v4542
        %v4544 = vpop.f32.mrf.mxu0
        %4545 = vmatprep.mubr.f32.mxu0 %v4259
        %4546 = vmatmul.mubr.f32.gmra.mxu0 %v4258
        %v4547 = vpop.f32.mrf.mxu0
        %v4548 = vadd.f32 %v4359, %v4547
        %v4549 = vpop.f32.mrf.mxu0
        %4550 = vmatprep.mubr.f32.mxu0 %v4263
        %4551 = vmatmul.mubr.f32.gmra.mxu0 %v4262
        %v4552 = vpop.f32.mrf.mxu0
        %v4553 = vadd.f32 %v4359, %v4552
        %v4554 = vpop.f32.mrf.mxu0
        %4555 = vmatprep.mubr.f32.mxu0 %v4267
        %4556 = vmatmul.mubr.f32.gmra.mxu0 %v4266
        %v4557 = vpop.f32.mrf.mxu0
        %v4558 = vadd.f32 %v4359, %v4557
        %v4559 = vpop.f32.mrf.mxu0
        %4560 = vmatprep.mubr.f32.mxu0 %v4271
        %4561 = vmatmul.mubr.f32.gmra.mxu0 %v4270
        %v4562 = vpop.f32.mrf.mxu0
        %v4563 = vadd.f32 %v4359, %v4562
        %v4564 = vpop.f32.mrf.mxu0
        %4565 = vmatprep.mubr.f32.mxu0 %v4275
        %4566 = vmatmul.mubr.f32.gmra.mxu0 %v4274
        %v4567 = vpop.f32.mrf.mxu0
        %v4568 = vadd.f32 %v4359, %v4567
        %v4569 = vpop.f32.mrf.mxu0
        %4570 = vmatprep.mubr.f32.mxu0 %v4279
        %4571 = vmatmul.mubr.f32.gmra.mxu0 %v4278
        %v4572 = vpop.f32.mrf.mxu0
        %v4573 = vadd.f32 %v4359, %v4572
        %v4574 = vpop.f32.mrf.mxu0
        %4575 = vmatprep.mubr.f32.mxu0 %v4283
        %4576 = vmatmul.mubr.f32.gmra.mxu0 %v4282
        %v4577 = vpop.f32.mrf.mxu0
        %v4578 = vadd.f32 %v4359, %v4577
        %v4579 = vpop.f32.mrf.mxu0
        %4580 = vmatprep.mubr.f32.mxu0 %v4287
        %4581 = vmatmul.mubr.f32.gmra.mxu0 %v4286
        %v4582 = vpop.f32.mrf.mxu0
        %v4583 = vadd.f32 %v4359, %v4582
        %v4584 = vpop.f32.mrf.mxu0
        %4585 = vdwg.mxu0
        %4586 = vmatprep.subr.mxu0 0.0
        %4587 = vmatpush1.msra.mxu0 %v4337
        %4588 = vmatprep.subr.mxu0 0.0
        %4589 = vmatpush1.msra.mxu0 %v4336
        %4590 = vmatprep.subr.mxu0 0.0
        %4591 = vmatpush1.msra.mxu0 %v4335
        %4592 = vmatprep.subr.mxu0 0.0
        %4593 = vmatpush1.msra.mxu0 %v4334
        %4594 = vmatprep.subr.mxu0 0.0
        %4595 = vmatpush1.msra.mxu0 %v4333
        %4596 = vmatprep.subr.mxu0 0.0
        %4597 = vmatpush1.msra.mxu0 %v4332
        %4598 = vmatprep.subr.mxu0 0.0
        %4599 = vmatpush1.msra.mxu0 %v4331
        %4600 = vmatprep.subr.mxu0 0.0
        %4601 = vmatpush1.msra.mxu0 %v4330
        %4602 = vmatprep.subr.mxu0 0.0
        %4603 = vmatpush1.msra.mxu0 %v4329
        %4604 = vmatprep.subr.mxu0 0.0
        %4605 = vmatpush1.msra.mxu0 %v4328
        %4606 = vmatprep.subr.mxu0 0.0
        %4607 = vmatpush1.msra.mxu0 %v4327
        %4608 = vmatprep.subr.mxu0 0.0
        %4609 = vmatpush1.msra.mxu0 %v4326
        %4610 = vmatprep.subr.mxu0 0.0
        %4611 = vmatpush1.msra.mxu0 %v4325
        %4612 = vmatprep.subr.mxu0 0.0
        %4613 = vmatpush1.msra.mxu0 %v4324
        %4614 = vmatprep.subr.mxu0 0.0
        %4615 = vmatpush1.msra.mxu0 %v4323
        %4616 = vmatprep.subr.mxu0 0.0
        %4617 = vmatpush1.msra.mxu0 %v4322
        %4618 = vmatprep.subr.mxu0 0.0
        %4619 = vmatpush2.msra.mxu0 %v4353
        %4620 = vmatprep.subr.mxu0 0.0
        %4621 = vmatpush2.msra.mxu0 %v4352
        %4622 = vmatprep.subr.mxu0 0.0
        %4623 = vmatpush2.msra.mxu0 %v4351
        %4624 = vmatprep.subr.mxu0 0.0
        %4625 = vmatpush2.msra.mxu0 %v4350
        %4626 = vmatprep.subr.mxu0 0.0
        %4627 = vmatpush2.msra.mxu0 %v4349
        %4628 = vmatprep.subr.mxu0 0.0
        %4629 = vmatpush2.msra.mxu0 %v4348
        %4630 = vmatprep.subr.mxu0 0.0
        %4631 = vmatpush2.msra.mxu0 %v4347
        %4632 = vmatprep.subr.mxu0 0.0
        %4633 = vmatpush2.msra.mxu0 %v4346
        %4634 = vmatprep.subr.mxu0 0.0
        %4635 = vmatpush2.msra.mxu0 %v4345
        %4636 = vmatprep.subr.mxu0 0.0
        %4637 = vmatpush2.msra.mxu0 %v4344
        %4638 = vmatprep.subr.mxu0 0.0
        %4639 = vmatpush2.msra.mxu0 %v4343
        %4640 = vmatprep.subr.mxu0 0.0
        %4641 = vmatpush2.msra.mxu0 %v4342
        %4642 = vmatprep.subr.mxu0 0.0
        %4643 = vmatpush2.msra.mxu0 %v4341
        %4644 = vmatprep.subr.mxu0 0.0
        %4645 = vmatpush2.msra.mxu0 %v4340
        %4646 = vmatprep.subr.mxu0 0.0
        %4647 = vmatpush2.msra.mxu0 %v4339
        %4648 = vmatprep.subr.mxu0 0.0
        %4649 = vmatpush2.msra.mxu0 %v4338
        %4650 = vmatprep.mubr.f32.mxu0 %v4165
        %4651 = vmatmul.mubr.f32.gmra.mxu0 %v4164
        %v4652 = vpop.f32.mrf.mxu0
        %v4653 = vadd.f32 %v4428, %v4652
        %v4654 = vpop.f32.mrf.mxu0
        %4655 = vmatprep.mubr.f32.mxu0 %v4169
        %4656 = vmatmul.mubr.f32.gmra.mxu0 %v4168
        %v4657 = vpop.f32.mrf.mxu0
        %v4658 = vadd.f32 %v4433, %v4657
        %v4659 = vpop.f32.mrf.mxu0
        %4660 = vmatprep.mubr.f32.mxu0 %v4173
        %4661 = vmatmul.mubr.f32.gmra.mxu0 %v4172
        %v4662 = vpop.f32.mrf.mxu0
        %v4663 = vadd.f32 %v4438, %v4662
        %v4664 = vpop.f32.mrf.mxu0
        %4665 = vmatprep.mubr.f32.mxu0 %v4177
        %4666 = vmatmul.mubr.f32.gmra.mxu0 %v4176
        %v4667 = vpop.f32.mrf.mxu0
        %v4668 = vadd.f32 %v4443, %v4667
        %v4669 = vpop.f32.mrf.mxu0
        %4670 = vmatprep.mubr.f32.mxu0 %v4181
        %4671 = vmatmul.mubr.f32.gmra.mxu0 %v4180
        %v4672 = vpop.f32.mrf.mxu0
        %v4673 = vadd.f32 %v4448, %v4672
        %v4674 = vpop.f32.mrf.mxu0
        %4675 = vmatprep.mubr.f32.mxu0 %v4185
        %4676 = vmatmul.mubr.f32.gmra.mxu0 %v4184
        %v4677 = vpop.f32.mrf.mxu0
        %v4678 = vadd.f32 %v4453, %v4677
        %v4679 = vpop.f32.mrf.mxu0
        %4680 = vmatprep.mubr.f32.mxu0 %v4189
        %4681 = vmatmul.mubr.f32.gmra.mxu0 %v4188
        %v4682 = vpop.f32.mrf.mxu0
        %v4683 = vadd.f32 %v4458, %v4682
        %v4684 = vpop.f32.mrf.mxu0
        %4685 = vmatprep.mubr.f32.mxu0 %v4193
        %4686 = vmatmul.mubr.f32.gmra.mxu0 %v4192
        %v4687 = vpop.f32.mrf.mxu0
        %v4688 = vadd.f32 %v4463, %v4687
        %v4689 = vpop.f32.mrf.mxu0
        %4690 = vmatprep.mubr.f32.mxu0 %v4197
        %4691 = vmatmul.mubr.f32.gmra.mxu0 %v4196
        %v4692 = vpop.f32.mrf.mxu0
        %v4693 = vadd.f32 %v4468, %v4692
        %v4694 = vpop.f32.mrf.mxu0
        %4695 = vmatprep.mubr.f32.mxu0 %v4201
        %4696 = vmatmul.mubr.f32.gmra.mxu0 %v4200
        %v4697 = vpop.f32.mrf.mxu0
        %v4698 = vadd.f32 %v4473, %v4697
        %v4699 = vpop.f32.mrf.mxu0
        %4700 = vmatprep.mubr.f32.mxu0 %v4205
        %4701 = vmatmul.mubr.f32.gmra.mxu0 %v4204
        %v4702 = vpop.f32.mrf.mxu0
        %v4703 = vadd.f32 %v4478, %v4702
        %v4704 = vpop.f32.mrf.mxu0
        %4705 = vmatprep.mubr.f32.mxu0 %v4209
        %4706 = vmatmul.mubr.f32.gmra.mxu0 %v4208
        %v4707 = vpop.f32.mrf.mxu0
        %v4708 = vadd.f32 %v4483, %v4707
        %v4709 = vpop.f32.mrf.mxu0
        %4710 = vmatprep.mubr.f32.mxu0 %v4213
        %4711 = vmatmul.mubr.f32.gmra.mxu0 %v4212
        %v4712 = vpop.f32.mrf.mxu0
        %v4713 = vadd.f32 %v4488, %v4712
        %v4714 = vpop.f32.mrf.mxu0
        %4715 = vmatprep.mubr.f32.mxu0 %v4217
        %4716 = vmatmul.mubr.f32.gmra.mxu0 %v4216
        %v4717 = vpop.f32.mrf.mxu0
        %v4718 = vadd.f32 %v4493, %v4717
        %v4719 = vpop.f32.mrf.mxu0
        %4720 = vmatprep.mubr.f32.mxu0 %v4221
        %4721 = vmatmul.mubr.f32.gmra.mxu0 %v4220
        %v4722 = vpop.f32.mrf.mxu0
        %v4723 = vadd.f32 %v4498, %v4722
        %v4724 = vpop.f32.mrf.mxu0
        %4725 = vmatprep.mubr.f32.mxu0 %v4225
        %4726 = vmatmul.mubr.f32.gmra.mxu0 %v4224
        %v4727 = vpop.f32.mrf.mxu0
        %v4728 = vadd.f32 %v4503, %v4727
        %v4729 = vpop.f32.mrf.mxu0
        %4730 = vmatprep.mubr.f32.mxu0 %v4229
        %4731 = vmatmul.mubr.f32.gmra.mxu0 %v4228
        %v4732 = vpop.f32.mrf.mxu0
        %v4733 = vadd.f32 %v4508, %v4732
        %v4734 = vpop.f32.mrf.mxu0
        %4735 = vmatprep.mubr.f32.mxu0 %v4233
        %4736 = vmatmul.mubr.f32.gmra.mxu0 %v4232
        %v4737 = vpop.f32.mrf.mxu0
        %v4738 = vadd.f32 %v4513, %v4737
        %v4739 = vpop.f32.mrf.mxu0
        %4740 = vmatprep.mubr.f32.mxu0 %v4237
        %4741 = vmatmul.mubr.f32.gmra.mxu0 %v4236
        %v4742 = vpop.f32.mrf.mxu0
        %v4743 = vadd.f32 %v4518, %v4742
        %v4744 = vpop.f32.mrf.mxu0
        %4745 = vmatprep.mubr.f32.mxu0 %v4241
        %4746 = vmatmul.mubr.f32.gmra.mxu0 %v4240
        %v4747 = vpop.f32.mrf.mxu0
        %v4748 = vadd.f32 %v4523, %v4747
        %v4749 = vpop.f32.mrf.mxu0
        %4750 = vmatprep.mubr.f32.mxu0 %v4245
        %4751 = vmatmul.mubr.f32.gmra.mxu0 %v4244
        %v4752 = vpop.f32.mrf.mxu0
        %v4753 = vadd.f32 %v4528, %v4752
        %v4754 = vpop.f32.mrf.mxu0
        %4755 = vmatprep.mubr.f32.mxu0 %v4249
        %4756 = vmatmul.mubr.f32.gmra.mxu0 %v4248
        %v4757 = vpop.f32.mrf.mxu0
        %v4758 = vadd.f32 %v4533, %v4757
        %v4759 = vpop.f32.mrf.mxu0
        %4760 = vmatprep.mubr.f32.mxu0 %v4253
        %4761 = vmatmul.mubr.f32.gmra.mxu0 %v4252
        %v4762 = vpop.f32.mrf.mxu0
        %v4763 = vadd.f32 %v4538, %v4762
        %v4764 = vpop.f32.mrf.mxu0
        %4765 = vmatprep.mubr.f32.mxu0 %v4257
        %4766 = vmatmul.mubr.f32.gmra.mxu0 %v4256
        %v4767 = vpop.f32.mrf.mxu0
        %v4768 = vadd.f32 %v4543, %v4767
        %v4769 = vpop.f32.mrf.mxu0
        %4770 = vmatprep.mubr.f32.mxu0 %v4261
        %4771 = vmatmul.mubr.f32.gmra.mxu0 %v4260
        %v4772 = vpop.f32.mrf.mxu0
        %v4773 = vadd.f32 %v4548, %v4772
        %v4774 = vpop.f32.mrf.mxu0
        %4775 = vmatprep.mubr.f32.mxu0 %v4265
        %4776 = vmatmul.mubr.f32.gmra.mxu0 %v4264
        %v4777 = vpop.f32.mrf.mxu0
        %v4778 = vadd.f32 %v4553, %v4777
        %v4779 = vpop.f32.mrf.mxu0
        %4780 = vmatprep.mubr.f32.mxu0 %v4269
        %4781 = vmatmul.mubr.f32.gmra.mxu0 %v4268
        %v4782 = vpop.f32.mrf.mxu0
        %v4783 = vadd.f32 %v4558, %v4782
        %v4784 = vpop.f32.mrf.mxu0
        %4785 = vmatprep.mubr.f32.mxu0 %v4273
        %4786 = vmatmul.mubr.f32.gmra.mxu0 %v4272
        %v4787 = vpop.f32.mrf.mxu0
        %v4788 = vadd.f32 %v4563, %v4787
        %v4789 = vpop.f32.mrf.mxu0
        %4790 = vmatprep.mubr.f32.mxu0 %v4277
        %4791 = vmatmul.mubr.f32.gmra.mxu0 %v4276
        %v4792 = vpop.f32.mrf.mxu0
        %v4793 = vadd.f32 %v4568, %v4792
        %v4794 = vpop.f32.mrf.mxu0
        %4795 = vmatprep.mubr.f32.mxu0 %v4281
        %4796 = vmatmul.mubr.f32.gmra.mxu0 %v4280
        %v4797 = vpop.f32.mrf.mxu0
        %v4798 = vadd.f32 %v4573, %v4797
        %v4799 = vpop.f32.mrf.mxu0
        %4800 = vmatprep.mubr.f32.mxu0 %v4285
        %4801 = vmatmul.mubr.f32.gmra.mxu0 %v4284
        %v4802 = vpop.f32.mrf.mxu0
        %v4803 = vadd.f32 %v4578, %v4802
        %v4804 = vpop.f32.mrf.mxu0
        %4805 = vmatprep.mubr.f32.mxu0 %v4289
        %4806 = vmatmul.mubr.f32.gmra.mxu0 %v4288
        %v4807 = vpop.f32.mrf.mxu0
        %v4808 = vadd.f32 %v4583, %v4807
        %v4809 = vpop.f32.mrf.mxu0
        %4810 = vdwg.mxu0
        %4811 = vst [vmem:[%s364] sm:$0xff] %v4653
        %4812 = vst [vmem:[%s364 + $0x8] sm:$0xff] %v4658
        %4813 = vst [vmem:[%s364 + $0x10] sm:$0xff] %v4663
        %4814 = vst [vmem:[%s364 + $0x18] sm:$0xff] %v4668
        %4815 = vst [vmem:[%s364 + $0x20] sm:$0xff] %v4673
        %4816 = vst [vmem:[%s364 + $0x28] sm:$0xff] %v4678
        %4817 = vst [vmem:[%s364 + $0x30] sm:$0xff] %v4683
        %4818 = vst [vmem:[%s364 + $0x38] sm:$0xff] %v4688
        %4819 = vst [vmem:[%s364 + $0x40] sm:$0xff] %v4693
        %4820 = vst [vmem:[%s364 + $0x48] sm:$0xff] %v4698
        %4821 = vst [vmem:[%s364 + $0x50] sm:$0xff] %v4703
        %4822 = vst [vmem:[%s364 + $0x58] sm:$0xff] %v4708
        %4823 = vst [vmem:[%s364 + $0x60] sm:$0xff] %v4713
        %4824 = vst [vmem:[%s364 + $0x68] sm:$0xff] %v4718
        %4825 = vst [vmem:[%s364 + $0x70] sm:$0xff] %v4723
        %4826 = vst [vmem:[%s364 + $0x78] sm:$0xff] %v4728
        %4827 = vst [vmem:[%s364 + $0x80] sm:$0xff] %v4733
        %4828 = vst [vmem:[%s364 + $0x88] sm:$0xff] %v4738
        %4829 = vst [vmem:[%s364 + $0x90] sm:$0xff] %v4743
        %4830 = vst [vmem:[%s364 + $0x98] sm:$0xff] %v4748
        %4831 = vst [vmem:[%s364 + $0xa0] sm:$0xff] %v4753
        %4832 = vst [vmem:[%s364 + $0xa8] sm:$0xff] %v4758
        %4833 = vst [vmem:[%s364 + $0xb0] sm:$0xff] %v4763
        %4834 = vst [vmem:[%s364 + $0xb8] sm:$0xff] %v4768
        %4835 = vst [vmem:[%s364 + $0xc0] sm:$0xff] %v4773
        %4836 = vst [vmem:[%s364 + $0xc8] sm:$0xff] %v4778
        %4837 = vst [vmem:[%s364 + $0xd0] sm:$0xff] %v4783
        %4838 = vst [vmem:[%s364 + $0xd8] sm:$0xff] %v4788
        %4839 = vst [vmem:[%s364 + $0xe0] sm:$0xff] %v4793
        %4840 = vst [vmem:[%s364 + $0xe8] sm:$0xff] %v4798
        %4841 = vst [vmem:[%s364 + $0xf0] sm:$0xff] %v4803
        %4842 = vst [vmem:[%s364 + $0xf8] sm:$0xff] %v4808
        %s4843 = smul.u32 32, %s22
        %p4844 = scmp.lt.s32.totalorder %s4843, 63
        %s4845 = scalar_select %p4844, %s4843, 63
        %s4846 = smul.addr %s4845, 8
        %s4847 = scalar_lea.vmem %s9, %s4846
        // Predicated region
        $region65: #{generator_forward.1} parent=55 // pred_check
          %p4848 = pneg %p234
        $region66: #{generator_forward.1} parent=55 // pred_check_branch
          %4850 = sbr.rel (%p4848) target = $region68
        $region67: #{generator_forward.1} parent=55 // pred_region
          %s4851 = smul.u32 32, %s22
        $region68: #{generator_forward.1} parent=55 // pred_fallthru
          _
      $region56: #{generator_forward.1} parent=5 // pred_fallthru
        _
      %p4852 = scmp.le.s32.totalorder 2, %s17
      // Predicated region
      $region69: #{generator_forward.1} parent=5 // pred_check
        %p4853 = pneg %p4852
      $region70: #{generator_forward.1} parent=5 // pred_check_branch
        %4855 = sbr.rel (%p4853) target = $region72
      $region71: #{generator_forward.1} parent=5 // pred_region
        %s4856 = ssub.s32 %s17, 2
        // Predicated region
        $region73: #{generator_forward.1} parent=71 // pred_check
          %p4857 = pneg %p240
        $region74: #{generator_forward.1} parent=71 // pred_check_branch
          %4859 = sbr.rel (%p4857) target = $region76
        $region75: #{generator_forward.1} parent=71 // pred_region
          %s4860 = smul.u32 32, %s23
          %p4861 = scmp.lt.s32.totalorder %s4860, 63
          %s4862 = scalar_select %p4861, %s4860, 63
          %s4863 = smul.addr %s4862, 8
          %s4864 = scalar_lea.vmem %s9, %s4863
        $region76: #{generator_forward.1} parent=71 // pred_fallthru
          _
      $region72: #{generator_forward.1} parent=5 // pred_fallthru
        _
    $region6: #{generator_forward.1} parent=1 // loop_footer
      %s21 = sadd.s32 1, %s17
    $region7: #{generator_forward.1} parent=1 // loop_footer_branch
      %16 = sbr.rel target = $region3
    $region8: #{generator_forward.1} parent=1 // loop_exit
      _
    %4865 = vsyncpa [#allocation3], 1
    %s4866 = scalar_lea.sflag [#allocation3], 1
    %4867 = vsyncpa %s4866, 1
    %4868 = vsyncpa [#allocation5], 1

</llo_original>
